<compile_context>
chip_gen: v5e
topology: v5e:2x2
jax: 0.10.0
libtpu: 0.0.40
codegen_flags: <defaults>
</compile_context>

<pallas_src>
import functools

import jax
import jax.numpy as jnp
import numpy as np
from jax import lax
from jax.experimental import pallas as pl
from jax.experimental.pallas import tpu as pltpu


# ----------------------------- trace-time helpers ----------------------------

def _interp_matrix_np(in_size, out_size):
    """Dense 1-D interpolation matrix (out_size, in_size) matching
    torch F.interpolate(mode='bilinear', align_corners=False)."""
    o = np.arange(out_size, dtype=np.float64)
    src = (o + 0.5) * (in_size / out_size) - 0.5
    src = np.maximum(src, 0.0)
    lo = np.minimum(np.floor(src).astype(np.int64), in_size - 1)
    hi = np.minimum(lo + 1, in_size - 1)
    frac = (src - lo).astype(np.float32)
    m = np.zeros((out_size, in_size), np.float32)
    m[np.arange(out_size), lo] += 1.0 - frac
    m[np.arange(out_size), hi] += frac
    return m


def _wh_strips_np(hin, hout, strip):
    """Per-strip H-interpolation matrices with a 2-row halo.

    Strip s covers output rows [s*strip, (s+1)*strip).  Row p of strip s is the
    interpolation row for output row s*strip - 2 + p, or all-zero when that row
    lies outside [0, hout) (the zero rows double as the conv zero padding)."""
    wh_full = _interp_matrix_np(hin, hout)
    ns = hout // strip
    out = np.zeros((ns, strip + 4, hin), np.float32)
    for s in range(ns):
        r0 = s * strip
        for p in range(strip + 4):
            r = r0 - 2 + p
            if 0 <= r < hout:
                out[s, p] = wh_full[r]
    return out


def _col_mask_np(strip, wout):
    """0/1 mask over the flat padded-row column layout of the first conv
    output: 1 on real pixel columns, 0 on the per-row W-padding columns."""
    wp = wout + 2
    m = np.zeros((1, (strip + 2) * wp), np.float32)
    for u in range(strip + 2):
        m[0, u * wp + 1: u * wp + 1 + wout] = 1.0
    return m


# ----------------------------------- kernel -----------------------------------

def fuse_kernel(strip, wout, cin,                     # static config (partial)
                x_ref, wh_ref, wwt_ref, w1_ref, b1_ref, w2_ref, b2_ref,
                mask_ref, out_ref, ypad_ref, hpad_ref):
    hin = wh_ref.shape[2]
    win = wwt_ref.shape[0]
    sp4 = strip + 4                 # interpolated rows per strip (2-row halo)
    wp = wout + 2                   # padded row width
    l1 = (strip + 2) * wp           # conv1 output columns (with per-row pads)
    l2 = strip * wp                 # conv2 output columns (with per-row pads)
    s = pl.program_id(1)
    ns = pl.num_programs(1)

    # ---- bilinear interpolation, separable, f32 ------------------------------
    # H direction: batched matmul over channels on the MXU.  Out-of-image rows
    # are all-zero rows of the per-strip Wh and thus come out exactly zero.
    x3 = x_ref[0].reshape(cin, hin, win)                        # f32
    whb = jnp.broadcast_to(wh_ref[0][None], (cin, sp4, hin))    # f32
    th = jnp.einsum('coh,chw->cow', whb, x3,
                    preferred_element_type=jnp.float32)         # (cin, sp4, win)

    # W direction: one matmul per interpolated row; each row is stored (with
    # its two zero W-pad columns) as one contiguous slab of the flat scratch.
    zcol = jnp.zeros((cin, 1), jnp.float32)
    for p in range(sp4):
        yp = jnp.dot(th[:, p, :], wwt_ref[...],
                     preferred_element_type=jnp.float32)        # (cin, wout)
        yp = jnp.concatenate([zcol, yp, zcol], axis=1)          # (cin, wp)
        ypad_ref[:, pl.ds(1 + p * wp, wp)] = yp.astype(ypad_ref.dtype)

    # ---- self.nn : Conv3x3(cin -> 64) + ReLU, flat im2col --------------------
    # Every tap is a contiguous 2-D window of the flat padded scratch, so no
    # value reshapes are needed.  Columns landing on the per-row padding are
    # junk and are forced to zero (they are conv2's zero padding).
    taps = [ypad_ref[:, pl.ds(di * wp + dj, l1)]
            for di in range(3) for dj in range(3)]
    patches = jnp.concatenate(taps, axis=0)                     # (9*cin, l1) bf16
    h = jnp.dot(w1_ref[...], patches,
                preferred_element_type=jnp.float32)             # (64, l1) f32
    h = jnp.maximum(h + b1_ref[...], 0.0)
    h = jnp.where(mask_ref[...] > 0.0, h, 0.0)
    hpad_ref[:, pl.ds(1, l1)] = h.astype(hpad_ref.dtype)

    # Rows of the conv1 output that lie outside the image are conv2's zero
    # padding: overwrite them at the image top / bottom strips only.
    @pl.when(s == 0)
    def _():
        hpad_ref[:, pl.ds(1, wp)] = jnp.zeros((64, wp), hpad_ref.dtype)

    @pl.when(s == ns - 1)
    def _():
        hpad_ref[:, pl.ds(1 + (strip + 1) * wp, wp)] = jnp.zeros(
            (64, wp), hpad_ref.dtype)

    # ---- self.conv : Conv3x3(64 -> 1), transposed (lane-dense) form ----------
    taps2 = [hpad_ref[:, pl.ds(di * wp + dj, l2)]
             for di in range(3) for dj in range(3)]
    patches2 = jnp.concatenate(taps2, axis=0)                   # (576, l2) bf16
    o = jnp.dot(w2_ref[...], patches2,
                preferred_element_type=jnp.float32) + b2_ref[...]   # (1, l2) f32

    # Drop the per-row pad columns while storing the strip's output rows.
    for v in range(strip):
        out_ref[0, pl.ds(v, 1), :] = o[:, v * wp + 1: v * wp + 1 + wout]


# ----------------------------------- wrapper ----------------------------------

@functools.partial(jax.jit, static_argnames=("size",))
def fuse_forward(down_nchw, up_nchw, size, w1, b1, w2, b2):
    """down_nchw: (N, Cd, H, W), up_nchw: (N, Cu, H, W)   (PyTorch NCHW)
    w1: (3,3,Cd+Cu,64) HWIO, b1: (64,), w2: (3,3,64,1) HWIO, b2: (1,)
    Returns (N, 1, size[0], size[1]) in NCHW."""
    hout, wout = size

    # Channel concat + channels-first flattening in XLA (layout glue only).
    x = jnp.concatenate([down_nchw, up_nchw], axis=1)          # (N, C, Hin, Win)
    n, c, hin, win = x.shape
    x = x.reshape(n, c * hin, win).astype(jnp.float32)

    # Row-strip tiling of the output.
    strip = 8 if (hout >= 8 and hout % 8 == 0) else hout
    num_strips = hout // strip
    wp = wout + 2

    wh_strips = jnp.asarray(_wh_strips_np(hin, hout, strip))   # (ns, strip+4, hin)
    wwt = jnp.asarray(_interp_matrix_np(win, wout).T)          # (win, wout) f32
    mask = jnp.asarray(_col_mask_np(strip, wout))              # (1, (strip+2)*wp)

    # Conv weights in transposed (channels-first) im2col layout, bf16 operands.
    w1cf = jnp.transpose(w1.reshape(9 * c, 64)).astype(jnp.bfloat16)   # (64, 9C)
    w2cf = jnp.transpose(w2.reshape(9 * 64, 1)).astype(jnp.bfloat16)   # (1, 576)
    b1cf = b1.reshape(64, 1).astype(jnp.float32)
    b2cf = b2.reshape(1, 1).astype(jnp.float32)

    kernel = functools.partial(fuse_kernel, strip, wout, c)

    out = pl.pallas_call(
        kernel,
        out_shape=jax.ShapeDtypeStruct((n, hout, wout), jnp.float32),
        grid_spec=pltpu.PrefetchScalarGridSpec(
            num_scalar_prefetch=0,
            grid=(n, num_strips),
            in_specs=[
                pl.BlockSpec((1, c * hin, win), lambda i, s: (i, 0, 0)),    # x
                pl.BlockSpec((1, strip + 4, hin), lambda i, s: (s, 0, 0)),  # Wh strip
                pl.BlockSpec((win, wout), lambda i, s: (0, 0)),             # Ww^T
                pl.BlockSpec((64, 9 * c), lambda i, s: (0, 0)),             # w1
                pl.BlockSpec((64, 1), lambda i, s: (0, 0)),                 # b1
                pl.BlockSpec((1, 9 * 64), lambda i, s: (0, 0)),             # w2
                pl.BlockSpec((1, 1), lambda i, s: (0, 0)),                  # b2
                pl.BlockSpec((1, (strip + 2) * wp), lambda i, s: (0, 0)),   # mask
            ],
            out_specs=pl.BlockSpec((1, strip, wout), lambda i, s: (i, s, 0)),
            scratch_shapes=[
                pltpu.VMEM((c, (strip + 4) * wp + 2), jnp.bfloat16),   # padded Y
                pltpu.VMEM((64, (strip + 2) * wp + 2), jnp.bfloat16),  # padded H1
            ],
        ),
        compiler_params=pltpu.CompilerParams(
            dimension_semantics=("parallel", "parallel")),
    )(x, wh_strips, wwt, w1cf, b1cf, w2cf, b2cf, mask)

    return out[:, None, :, :]                                  # (N, 1, Hout, Wout)


# Pure-JAX f32 reference (forward semantics of the PyTorch module).
def fuse_reference(down_nchw, up_nchw, size, w1, b1, w2, b2):
    hout, wout = size
    down = jnp.transpose(down_nchw, (0, 2, 3, 1))
    up = jnp.transpose(up_nchw, (0, 2, 3, 1))
    x = jnp.concatenate([down, up], axis=-1)
    wh = jnp.asarray(_interp_matrix_np(x.shape[1], hout))
    ww = jnp.asarray(_interp_matrix_np(x.shape[2], wout))
    y = jnp.einsum('oh,nhwc->nowc', wh, x)
    y = jnp.einsum('pw,nowc->nopc', ww, y)

    def conv(z, w, b):
        return lax.conv_general_dilated(
            z, w, (1, 1), 'SAME',
            dimension_numbers=('NHWC', 'HWIO', 'NHWC')) + b

    h = jax.nn.relu(conv(y, w1, b1))
    o = conv(h, w2, b2)
    return jnp.transpose(o, (0, 3, 1, 2))


if __name__ == "__main__":
    key = jax.random.PRNGKey(0)
    N, Cd, Cu, Hin, Win = 2, 32, 32, 8, 8
    size = (16, 16)
    C = Cd + Cu

    k_down, k_up, k_w1, k_b1, k_w2, k_b2 = jax.random.split(key, 6)
    down = jax.random.normal(k_down, (N, Cd, Hin, Win), jnp.float32)
    up = jax.random.normal(k_up, (N, Cu, Hin, Win), jnp.float32)

    # Deterministic parameter init (PyTorch Conv2d-style uniform bounds), HWIO.
    bound1 = 1.0 / np.sqrt(C * 9)
    w1 = jax.random.uniform(k_w1, (3, 3, C, 64), jnp.float32, -bound1, bound1)
    b1 = jax.random.uniform(k_b1, (64,), jnp.float32, -bound1, bound1)
    bound2 = 1.0 / np.sqrt(64 * 9)
    w2 = jax.random.uniform(k_w2, (3, 3, 64, 1), jnp.float32, -bound2, bound2)
    b2 = jax.random.uniform(k_b2, (1,), jnp.float32, -bound2, bound2)

    out = jax.block_until_ready(fuse_forward(down, up, size, w1, b1, w2, b2))
    assert out.shape == (N, 1, size[0], size[1]), out.shape

    ref = jax.block_until_ready(fuse_reference(down, up, size, w1, b1, w2, b2))
    # Interpolation is f32-exact; only the conv MXU operands are bf16.
    np.testing.assert_allclose(np.asarray(out), np.asarray(ref),
                               rtol=3e-2, atol=3e-2)
    print("KERNEL_OK")
</pallas_src>

<mosaic_0001>
module attributes {stable_mosaic.version = 11 : i64} {
  func.func @fuse_kernel(%arg0: i32, %arg1: i32, %arg2: memref<1x512x8xf32, #tpu.memory_space<vmem>>, %arg3: memref<1x12x8xf32, #tpu.memory_space<vmem>>, %arg4: memref<8x16xf32, #tpu.memory_space<vmem>>, %arg5: memref<64x576xbf16, #tpu.memory_space<vmem>>, %arg6: memref<64x1xf32, #tpu.memory_space<vmem>>, %arg7: memref<1x576xbf16, #tpu.memory_space<vmem>>, %arg8: memref<1x1xf32, #tpu.memory_space<vmem>>, %arg9: memref<1x180xf32, #tpu.memory_space<vmem>>, %arg10: memref<1x8x16xf32, #tpu.memory_space<vmem>>, %arg11: memref<64x218xbf16, #tpu.memory_space<vmem>>, %arg12: memref<64x182xbf16, #tpu.memory_space<vmem>>) attributes {dimension_semantics = [#tpu.dimension_semantics<parallel>, #tpu.dimension_semantics<parallel>], iteration_bounds = array<i64: 2, 2>, scalar_prefetch = 0 : i64, scratch_operands = 2 : i64, tpu.core_type = #tpu.core_type<tc>, window_params = [{transform_indices = @transform_0, window_bounds = array<i64: 1, 512, 8>}, {transform_indices = @transform_1, window_bounds = array<i64: 1, 12, 8>}, {pipeline_mode = #tpu.pipeline_mode<synchronous>, transform_indices = @transform_2, window_bounds = array<i64: 8, 16>}, {pipeline_mode = #tpu.pipeline_mode<synchronous>, transform_indices = @transform_3, window_bounds = array<i64: 64, 576>}, {pipeline_mode = #tpu.pipeline_mode<synchronous>, transform_indices = @transform_4, window_bounds = array<i64: 64, 1>}, {pipeline_mode = #tpu.pipeline_mode<synchronous>, transform_indices = @transform_5, window_bounds = array<i64: 1, 576>}, {pipeline_mode = #tpu.pipeline_mode<synchronous>, transform_indices = @transform_6, window_bounds = array<i64: 1, 1>}, {pipeline_mode = #tpu.pipeline_mode<synchronous>, transform_indices = @transform_7, window_bounds = array<i64: 1, 180>}, {transform_indices = @transform_8, window_bounds = array<i64: 1, 8, 16>}]} {
    %c0 = arith.constant 0 : index
    %c0_0 = arith.constant 0 : index
    %c0_1 = arith.constant 0 : index
    %0 = vector.load %arg2[%c0, %c0_0, %c0_1] : memref<1x512x8xf32, #tpu.memory_space<vmem>>, vector<1x512x8xf32>
    %1 = vector.shape_cast %0 : vector<1x512x8xf32> to vector<512x8xf32>
    %2 = vector.shape_cast %1 : vector<512x8xf32> to vector<64x8x8xf32>
    %c0_2 = arith.constant 0 : index
    %c0_3 = arith.constant 0 : index
    %c0_4 = arith.constant 0 : index
    %3 = vector.load %arg3[%c0_2, %c0_3, %c0_4] : memref<1x12x8xf32, #tpu.memory_space<vmem>>, vector<1x12x8xf32>
    %4 = vector.shape_cast %3 : vector<1x12x8xf32> to vector<12x8xf32>
    %5 = vector.shape_cast %4 : vector<12x8xf32> to vector<1x12x8xf32>
    %6 = vector.shape_cast %5 : vector<1x12x8xf32> to vector<1x12x8xf32>
    %7 = vector.broadcast %6 : vector<1x12x8xf32> to vector<64x12x8xf32>
    "tpu.trace_start"() <{level = 10 : i32, message = "coh,chw->cow"}> : () -> ()
    %cst = arith.constant dense<0.000000e+00> : vector<64x12x8xf32>
    %8 = tpu.matmul %7, %2, %cst {dimension_numbers = #tpu.dot_dimension_numbers<[2], [1], [1], [2], [0, 0, 0, 1, 1, 2], [0], [0]>} : vector<64x12x8xf32>, vector<64x8x8xf32>, vector<64x12x8xf32> -> vector<64x12x8xf32>
    %cst_5 = arith.constant 0.000000e+00 : f32
    "tpu.trace_stop"() : () -> ()
    %9 = vector.broadcast %cst_5 : f32 to vector<64x1xf32>
    %10 = vector.extract_strided_slice %8 {offsets = [0, 0, 0], sizes = [64, 1, 8], strides = [1, 1, 1]} : vector<64x12x8xf32> to vector<64x1x8xf32>
    %11 = vector.shape_cast %10 : vector<64x1x8xf32> to vector<64x8xf32>
    %c0_6 = arith.constant 0 : index
    %c0_7 = arith.constant 0 : index
    %12 = vector.load %arg4[%c0_6, %c0_7] : memref<8x16xf32, #tpu.memory_space<vmem>>, vector<8x16xf32>
    %cst_8 = arith.constant dense<0.000000e+00> : vector<64x16xf32>
    %13 = tpu.matmul %11, %12, %cst_8 {dimension_numbers = #tpu.dot_dimension_numbers<[1], [0], [0], [1], [0, 0, 1, 1], [], []>} : vector<64x8xf32>, vector<8x16xf32>, vector<64x16xf32> -> vector<64x16xf32>
    %14 = tpu.concatenate %9, %13, %9 in 1 : vector<64x1xf32>, vector<64x16xf32>, vector<64x1xf32> -> vector<64x18xf32>
    %15 = arith.truncf %14 : vector<64x18xf32> to vector<64x18xbf16>
    %c0_9 = arith.constant 0 : index
    %c1 = arith.constant 1 : index
    %16 = vector.load %arg11[%c0_9, %c1] : memref<64x218xbf16, #tpu.memory_space<vmem>>, vector<64x18xbf16>
    tpu.vector_store %arg11[%c0_9, %c1], %15 {strides = array<i32>} : memref<64x218xbf16, #tpu.memory_space<vmem>>, vector<64x18xbf16>,
    %17 = vector.extract_strided_slice %8 {offsets = [0, 1, 0], sizes = [64, 1, 8], strides = [1, 1, 1]} : vector<64x12x8xf32> to vector<64x1x8xf32>
    %18 = vector.shape_cast %17 : vector<64x1x8xf32> to vector<64x8xf32>
    %c0_10 = arith.constant 0 : index
    %c0_11 = arith.constant 0 : index
    %19 = vector.load %arg4[%c0_10, %c0_11] : memref<8x16xf32, #tpu.memory_space<vmem>>, vector<8x16xf32>
    %cst_12 = arith.constant dense<0.000000e+00> : vector<64x16xf32>
    %20 = tpu.matmul %18, %19, %cst_12 {dimension_numbers = #tpu.dot_dimension_numbers<[1], [0], [0], [1], [0, 0, 1, 1], [], []>} : vector<64x8xf32>, vector<8x16xf32>, vector<64x16xf32> -> vector<64x16xf32>
    %21 = tpu.concatenate %9, %20, %9 in 1 : vector<64x1xf32>, vector<64x16xf32>, vector<64x1xf32> -> vector<64x18xf32>
    %22 = arith.truncf %21 : vector<64x18xf32> to vector<64x18xbf16>
    %c0_13 = arith.constant 0 : index
    %c19 = arith.constant 19 : index
    %23 = vector.load %arg11[%c0_13, %c19] : memref<64x218xbf16, #tpu.memory_space<vmem>>, vector<64x18xbf16>
    tpu.vector_store %arg11[%c0_13, %c19], %22 {strides = array<i32>} : memref<64x218xbf16, #tpu.memory_space<vmem>>, vector<64x18xbf16>,
    %24 = vector.extract_strided_slice %8 {offsets = [0, 2, 0], sizes = [64, 1, 8], strides = [1, 1, 1]} : vector<64x12x8xf32> to vector<64x1x8xf32>
    %25 = vector.shape_cast %24 : vector<64x1x8xf32> to vector<64x8xf32>
    %c0_14 = arith.constant 0 : index
    %c0_15 = arith.constant 0 : index
    %26 = vector.load %arg4[%c0_14, %c0_15] : memref<8x16xf32, #tpu.memory_space<vmem>>, vector<8x16xf32>
    %cst_16 = arith.constant dense<0.000000e+00> : vector<64x16xf32>
    %27 = tpu.matmul %25, %26, %cst_16 {dimension_numbers = #tpu.dot_dimension_numbers<[1], [0], [0], [1], [0, 0, 1, 1], [], []>} : vector<64x8xf32>, vector<8x16xf32>, vector<64x16xf32> -> vector<64x16xf32>
    %28 = tpu.concatenate %9, %27, %9 in 1 : vector<64x1xf32>, vector<64x16xf32>, vector<64x1xf32> -> vector<64x18xf32>
    %29 = arith.truncf %28 : vector<64x18xf32> to vector<64x18xbf16>
    %c0_17 = arith.constant 0 : index
    %c37 = arith.constant 37 : index
    %30 = vector.load %arg11[%c0_17, %c37] : memref<64x218xbf16, #tpu.memory_space<vmem>>, vector<64x18xbf16>
    tpu.vector_store %arg11[%c0_17, %c37], %29 {strides = array<i32>} : memref<64x218xbf16, #tpu.memory_space<vmem>>, vector<64x18xbf16>,
    %31 = vector.extract_strided_slice %8 {offsets = [0, 3, 0], sizes = [64, 1, 8], strides = [1, 1, 1]} : vector<64x12x8xf32> to vector<64x1x8xf32>
    %32 = vector.shape_cast %31 : vector<64x1x8xf32> to vector<64x8xf32>
    %c0_18 = arith.constant 0 : index
    %c0_19 = arith.constant 0 : index
    %33 = vector.load %arg4[%c0_18, %c0_19] : memref<8x16xf32, #tpu.memory_space<vmem>>, vector<8x16xf32>
    %cst_20 = arith.constant dense<0.000000e+00> : vector<64x16xf32>
    %34 = tpu.matmul %32, %33, %cst_20 {dimension_numbers = #tpu.dot_dimension_numbers<[1], [0], [0], [1], [0, 0, 1, 1], [], []>} : vector<64x8xf32>, vector<8x16xf32>, vector<64x16xf32> -> vector<64x16xf32>
    %35 = tpu.concatenate %9, %34, %9 in 1 : vector<64x1xf32>, vector<64x16xf32>, vector<64x1xf32> -> vector<64x18xf32>
    %36 = arith.truncf %35 : vector<64x18xf32> to vector<64x18xbf16>
    %c0_21 = arith.constant 0 : index
    %c55 = arith.constant 55 : index
    %37 = vector.load %arg11[%c0_21, %c55] : memref<64x218xbf16, #tpu.memory_space<vmem>>, vector<64x18xbf16>
    tpu.vector_store %arg11[%c0_21, %c55], %36 {strides = array<i32>} : memref<64x218xbf16, #tpu.memory_space<vmem>>, vector<64x18xbf16>,
    %38 = vector.extract_strided_slice %8 {offsets = [0, 4, 0], sizes = [64, 1, 8], strides = [1, 1, 1]} : vector<64x12x8xf32> to vector<64x1x8xf32>
    %39 = vector.shape_cast %38 : vector<64x1x8xf32> to vector<64x8xf32>
    %c0_22 = arith.constant 0 : index
    %c0_23 = arith.constant 0 : index
    %40 = vector.load %arg4[%c0_22, %c0_23] : memref<8x16xf32, #tpu.memory_space<vmem>>, vector<8x16xf32>
    %cst_24 = arith.constant dense<0.000000e+00> : vector<64x16xf32>
    %41 = tpu.matmul %39, %40, %cst_24 {dimension_numbers = #tpu.dot_dimension_numbers<[1], [0], [0], [1], [0, 0, 1, 1], [], []>} : vector<64x8xf32>, vector<8x16xf32>, vector<64x16xf32> -> vector<64x16xf32>
    %42 = tpu.concatenate %9, %41, %9 in 1 : vector<64x1xf32>, vector<64x16xf32>, vector<64x1xf32> -> vector<64x18xf32>
    %43 = arith.truncf %42 : vector<64x18xf32> to vector<64x18xbf16>
    %c0_25 = arith.constant 0 : index
    %c73 = arith.constant 73 : index
    %44 = vector.load %arg11[%c0_25, %c73] : memref<64x218xbf16, #tpu.memory_space<vmem>>, vector<64x18xbf16>
    tpu.vector_store %arg11[%c0_25, %c73], %43 {strides = array<i32>} : memref<64x218xbf16, #tpu.memory_space<vmem>>, vector<64x18xbf16>,
    %45 = vector.extract_strided_slice %8 {offsets = [0, 5, 0], sizes = [64, 1, 8], strides = [1, 1, 1]} : vector<64x12x8xf32> to vector<64x1x8xf32>
    %46 = vector.shape_cast %45 : vector<64x1x8xf32> to vector<64x8xf32>
    %c0_26 = arith.constant 0 : index
    %c0_27 = arith.constant 0 : index
    %47 = vector.load %arg4[%c0_26, %c0_27] : memref<8x16xf32, #tpu.memory_space<vmem>>, vector<8x16xf32>
    %cst_28 = arith.constant dense<0.000000e+00> : vector<64x16xf32>
    %48 = tpu.matmul %46, %47, %cst_28 {dimension_numbers = #tpu.dot_dimension_numbers<[1], [0], [0], [1], [0, 0, 1, 1], [], []>} : vector<64x8xf32>, vector<8x16xf32>, vector<64x16xf32> -> vector<64x16xf32>
    %49 = tpu.concatenate %9, %48, %9 in 1 : vector<64x1xf32>, vector<64x16xf32>, vector<64x1xf32> -> vector<64x18xf32>
    %50 = arith.truncf %49 : vector<64x18xf32> to vector<64x18xbf16>
    %c0_29 = arith.constant 0 : index
    %c91 = arith.constant 91 : index
    %51 = vector.load %arg11[%c0_29, %c91] : memref<64x218xbf16, #tpu.memory_space<vmem>>, vector<64x18xbf16>
    tpu.vector_store %arg11[%c0_29, %c91], %50 {strides = array<i32>} : memref<64x218xbf16, #tpu.memory_space<vmem>>, vector<64x18xbf16>,
    %52 = vector.extract_strided_slice %8 {offsets = [0, 6, 0], sizes = [64, 1, 8], strides = [1, 1, 1]} : vector<64x12x8xf32> to vector<64x1x8xf32>
    %53 = vector.shape_cast %52 : vector<64x1x8xf32> to vector<64x8xf32>
    %c0_30 = arith.constant 0 : index
    %c0_31 = arith.constant 0 : index
    %54 = vector.load %arg4[%c0_30, %c0_31] : memref<8x16xf32, #tpu.memory_space<vmem>>, vector<8x16xf32>
    %cst_32 = arith.constant dense<0.000000e+00> : vector<64x16xf32>
    %55 = tpu.matmul %53, %54, %cst_32 {dimension_numbers = #tpu.dot_dimension_numbers<[1], [0], [0], [1], [0, 0, 1, 1], [], []>} : vector<64x8xf32>, vector<8x16xf32>, vector<64x16xf32> -> vector<64x16xf32>
    %56 = tpu.concatenate %9, %55, %9 in 1 : vector<64x1xf32>, vector<64x16xf32>, vector<64x1xf32> -> vector<64x18xf32>
    %57 = arith.truncf %56 : vector<64x18xf32> to vector<64x18xbf16>
    %c0_33 = arith.constant 0 : index
    %c109 = arith.constant 109 : index
    %58 = vector.load %arg11[%c0_33, %c109] : memref<64x218xbf16, #tpu.memory_space<vmem>>, vector<64x18xbf16>
    tpu.vector_store %arg11[%c0_33, %c109], %57 {strides = array<i32>} : memref<64x218xbf16, #tpu.memory_space<vmem>>, vector<64x18xbf16>,
    %59 = vector.extract_strided_slice %8 {offsets = [0, 7, 0], sizes = [64, 1, 8], strides = [1, 1, 1]} : vector<64x12x8xf32> to vector<64x1x8xf32>
    %60 = vector.shape_cast %59 : vector<64x1x8xf32> to vector<64x8xf32>
    %c0_34 = arith.constant 0 : index
    %c0_35 = arith.constant 0 : index
    %61 = vector.load %arg4[%c0_34, %c0_35] : memref<8x16xf32, #tpu.memory_space<vmem>>, vector<8x16xf32>
    %cst_36 = arith.constant dense<0.000000e+00> : vector<64x16xf32>
    %62 = tpu.matmul %60, %61, %cst_36 {dimension_numbers = #tpu.dot_dimension_numbers<[1], [0], [0], [1], [0, 0, 1, 1], [], []>} : vector<64x8xf32>, vector<8x16xf32>, vector<64x16xf32> -> vector<64x16xf32>
    %63 = tpu.concatenate %9, %62, %9 in 1 : vector<64x1xf32>, vector<64x16xf32>, vector<64x1xf32> -> vector<64x18xf32>
    %64 = arith.truncf %63 : vector<64x18xf32> to vector<64x18xbf16>
    %c0_37 = arith.constant 0 : index
    %c127 = arith.constant 127 : index
    %65 = vector.load %arg11[%c0_37, %c127] : memref<64x218xbf16, #tpu.memory_space<vmem>>, vector<64x18xbf16>
    tpu.vector_store %arg11[%c0_37, %c127], %64 {strides = array<i32>} : memref<64x218xbf16, #tpu.memory_space<vmem>>, vector<64x18xbf16>,
    %66 = vector.extract_strided_slice %8 {offsets = [0, 8, 0], sizes = [64, 1, 8], strides = [1, 1, 1]} : vector<64x12x8xf32> to vector<64x1x8xf32>
    %67 = vector.shape_cast %66 : vector<64x1x8xf32> to vector<64x8xf32>
    %c0_38 = arith.constant 0 : index
    %c0_39 = arith.constant 0 : index
    %68 = vector.load %arg4[%c0_38, %c0_39] : memref<8x16xf32, #tpu.memory_space<vmem>>, vector<8x16xf32>
    %cst_40 = arith.constant dense<0.000000e+00> : vector<64x16xf32>
    %69 = tpu.matmul %67, %68, %cst_40 {dimension_numbers = #tpu.dot_dimension_numbers<[1], [0], [0], [1], [0, 0, 1, 1], [], []>} : vector<64x8xf32>, vector<8x16xf32>, vector<64x16xf32> -> vector<64x16xf32>
    %70 = tpu.concatenate %9, %69, %9 in 1 : vector<64x1xf32>, vector<64x16xf32>, vector<64x1xf32> -> vector<64x18xf32>
    %71 = arith.truncf %70 : vector<64x18xf32> to vector<64x18xbf16>
    %c0_41 = arith.constant 0 : index
    %c145 = arith.constant 145 : index
    %72 = vector.load %arg11[%c0_41, %c145] : memref<64x218xbf16, #tpu.memory_space<vmem>>, vector<64x18xbf16>
    tpu.vector_store %arg11[%c0_41, %c145], %71 {strides = array<i32>} : memref<64x218xbf16, #tpu.memory_space<vmem>>, vector<64x18xbf16>,
    %73 = vector.extract_strided_slice %8 {offsets = [0, 9, 0], sizes = [64, 1, 8], strides = [1, 1, 1]} : vector<64x12x8xf32> to vector<64x1x8xf32>
    %74 = vector.shape_cast %73 : vector<64x1x8xf32> to vector<64x8xf32>
    %c0_42 = arith.constant 0 : index
    %c0_43 = arith.constant 0 : index
    %75 = vector.load %arg4[%c0_42, %c0_43] : memref<8x16xf32, #tpu.memory_space<vmem>>, vector<8x16xf32>
    %cst_44 = arith.constant dense<0.000000e+00> : vector<64x16xf32>
    %76 = tpu.matmul %74, %75, %cst_44 {dimension_numbers = #tpu.dot_dimension_numbers<[1], [0], [0], [1], [0, 0, 1, 1], [], []>} : vector<64x8xf32>, vector<8x16xf32>, vector<64x16xf32> -> vector<64x16xf32>
    %77 = tpu.concatenate %9, %76, %9 in 1 : vector<64x1xf32>, vector<64x16xf32>, vector<64x1xf32> -> vector<64x18xf32>
    %78 = arith.truncf %77 : vector<64x18xf32> to vector<64x18xbf16>
    %c0_45 = arith.constant 0 : index
    %c163 = arith.constant 163 : index
    %79 = vector.load %arg11[%c0_45, %c163] : memref<64x218xbf16, #tpu.memory_space<vmem>>, vector<64x18xbf16>
    tpu.vector_store %arg11[%c0_45, %c163], %78 {strides = array<i32>} : memref<64x218xbf16, #tpu.memory_space<vmem>>, vector<64x18xbf16>,
    %80 = vector.extract_strided_slice %8 {offsets = [0, 10, 0], sizes = [64, 1, 8], strides = [1, 1, 1]} : vector<64x12x8xf32> to vector<64x1x8xf32>
    %81 = vector.shape_cast %80 : vector<64x1x8xf32> to vector<64x8xf32>
    %c0_46 = arith.constant 0 : index
    %c0_47 = arith.constant 0 : index
    %82 = vector.load %arg4[%c0_46, %c0_47] : memref<8x16xf32, #tpu.memory_space<vmem>>, vector<8x16xf32>
    %cst_48 = arith.constant dense<0.000000e+00> : vector<64x16xf32>
    %83 = tpu.matmul %81, %82, %cst_48 {dimension_numbers = #tpu.dot_dimension_numbers<[1], [0], [0], [1], [0, 0, 1, 1], [], []>} : vector<64x8xf32>, vector<8x16xf32>, vector<64x16xf32> -> vector<64x16xf32>
    %84 = tpu.concatenate %9, %83, %9 in 1 : vector<64x1xf32>, vector<64x16xf32>, vector<64x1xf32> -> vector<64x18xf32>
    %85 = arith.truncf %84 : vector<64x18xf32> to vector<64x18xbf16>
    %c0_49 = arith.constant 0 : index
    %c181 = arith.constant 181 : index
    %86 = vector.load %arg11[%c0_49, %c181] : memref<64x218xbf16, #tpu.memory_space<vmem>>, vector<64x18xbf16>
    tpu.vector_store %arg11[%c0_49, %c181], %85 {strides = array<i32>} : memref<64x218xbf16, #tpu.memory_space<vmem>>, vector<64x18xbf16>,
    %87 = vector.extract_strided_slice %8 {offsets = [0, 11, 0], sizes = [64, 1, 8], strides = [1, 1, 1]} : vector<64x12x8xf32> to vector<64x1x8xf32>
    %88 = vector.shape_cast %87 : vector<64x1x8xf32> to vector<64x8xf32>
    %c0_50 = arith.constant 0 : index
    %c0_51 = arith.constant 0 : index
    %89 = vector.load %arg4[%c0_50, %c0_51] : memref<8x16xf32, #tpu.memory_space<vmem>>, vector<8x16xf32>
    %cst_52 = arith.constant dense<0.000000e+00> : vector<64x16xf32>
    %90 = tpu.matmul %88, %89, %cst_52 {dimension_numbers = #tpu.dot_dimension_numbers<[1], [0], [0], [1], [0, 0, 1, 1], [], []>} : vector<64x8xf32>, vector<8x16xf32>, vector<64x16xf32> -> vector<64x16xf32>
    %91 = tpu.concatenate %9, %90, %9 in 1 : vector<64x1xf32>, vector<64x16xf32>, vector<64x1xf32> -> vector<64x18xf32>
    %92 = arith.truncf %91 : vector<64x18xf32> to vector<64x18xbf16>
    %c0_53 = arith.constant 0 : index
    %c199 = arith.constant 199 : index
    %93 = vector.load %arg11[%c0_53, %c199] : memref<64x218xbf16, #tpu.memory_space<vmem>>, vector<64x18xbf16>
    tpu.vector_store %arg11[%c0_53, %c199], %92 {strides = array<i32>} : memref<64x218xbf16, #tpu.memory_space<vmem>>, vector<64x18xbf16>,
    %c0_54 = arith.constant 0 : index
    %c0_55 = arith.constant 0 : index
    %94 = vector.load %arg11[%c0_54, %c0_55] : memref<64x218xbf16, #tpu.memory_space<vmem>>, vector<64x180xbf16>
    %c0_56 = arith.constant 0 : index
    %c1_57 = arith.constant 1 : index
    %95 = vector.load %arg11[%c0_56, %c1_57] : memref<64x218xbf16, #tpu.memory_space<vmem>>, vector<64x180xbf16>
    %c0_58 = arith.constant 0 : index
    %c2 = arith.constant 2 : index
    %96 = vector.load %arg11[%c0_58, %c2] : memref<64x218xbf16, #tpu.memory_space<vmem>>, vector<64x180xbf16>
    %c0_59 = arith.constant 0 : index
    %c18 = arith.constant 18 : index
    %97 = vector.load %arg11[%c0_59, %c18] : memref<64x218xbf16, #tpu.memory_space<vmem>>, vector<64x180xbf16>
    %c0_60 = arith.constant 0 : index
    %c19_61 = arith.constant 19 : index
    %98 = vector.load %arg11[%c0_60, %c19_61] : memref<64x218xbf16, #tpu.memory_space<vmem>>, vector<64x180xbf16>
    %c0_62 = arith.constant 0 : index
    %c20 = arith.constant 20 : index
    %99 = vector.load %arg11[%c0_62, %c20] : memref<64x218xbf16, #tpu.memory_space<vmem>>, vector<64x180xbf16>
    %c0_63 = arith.constant 0 : index
    %c36 = arith.constant 36 : index
    %100 = vector.load %arg11[%c0_63, %c36] : memref<64x218xbf16, #tpu.memory_space<vmem>>, vector<64x180xbf16>
    %c0_64 = arith.constant 0 : index
    %c37_65 = arith.constant 37 : index
    %101 = vector.load %arg11[%c0_64, %c37_65] : memref<64x218xbf16, #tpu.memory_space<vmem>>, vector<64x180xbf16>
    %c0_66 = arith.constant 0 : index
    %c38 = arith.constant 38 : index
    %102 = vector.load %arg11[%c0_66, %c38] : memref<64x218xbf16, #tpu.memory_space<vmem>>, vector<64x180xbf16>
    %103 = tpu.concatenate %94, %95, %96, %97, %98, %99, %100, %101, %102 in 0 : vector<64x180xbf16>, vector<64x180xbf16>, vector<64x180xbf16>, vector<64x180xbf16>, vector<64x180xbf16>, vector<64x180xbf16>, vector<64x180xbf16>, vector<64x180xbf16>, vector<64x180xbf16> -> vector<576x180xbf16>
    %c0_67 = arith.constant 0 : index
    %c0_68 = arith.constant 0 : index
    %104 = vector.load %arg5[%c0_67, %c0_68] : memref<64x576xbf16, #tpu.memory_space<vmem>>, vector<64x576xbf16>
    %cst_69 = arith.constant dense<0.000000e+00> : vector<64x180xf32>
    %105 = tpu.matmul %104, %103, %cst_69 {dimension_numbers = #tpu.dot_dimension_numbers<[1], [0], [0], [1], [0, 0, 1, 1], [], []>} : vector<64x576xbf16>, vector<576x180xbf16>, vector<64x180xf32> -> vector<64x180xf32>
    %c0_70 = arith.constant 0 : index
    %c0_71 = arith.constant 0 : index
    %106 = vector.load %arg6[%c0_70, %c0_71] : memref<64x1xf32, #tpu.memory_space<vmem>>, vector<64x1xf32>
    %107 = vector.broadcast %106 : vector<64x1xf32> to vector<64x180xf32>
    %108 = arith.addf %105, %107 : vector<64x180xf32>
    %cst_72 = arith.constant 0.000000e+00 : f32
    %109 = vector.broadcast %cst_72 : f32 to vector<64x180xf32>
    %110 = arith.maximumf %108, %109 : vector<64x180xf32>
    %c0_73 = arith.constant 0 : index
    %c0_74 = arith.constant 0 : index
    %111 = vector.load %arg9[%c0_73, %c0_74] : memref<1x180xf32, #tpu.memory_space<vmem>>, vector<1x180xf32>
    %cst_75 = arith.constant 0.000000e+00 : f32
    %112 = vector.broadcast %cst_75 : f32 to vector<1x180xf32>
    %113 = arith.cmpf ogt, %111, %112 : vector<1x180xf32>
    %cst_76 = arith.constant 0.000000e+00 : f32
    %114 = vector.shape_cast %113 : vector<1x180xi1> to vector<1x180xi1>
    %115 = vector.broadcast %114 : vector<1x180xi1> to vector<64x180xi1>
    %116 = vector.broadcast %cst_76 : f32 to vector<64x180xf32>
    %117 = arith.select %115, %110, %116 : vector<64x180xi1>, vector<64x180xf32>
    %118 = arith.truncf %117 : vector<64x180xf32> to vector<64x180xbf16>
    %c0_77 = arith.constant 0 : index
    %c1_78 = arith.constant 1 : index
    %119 = vector.load %arg12[%c0_77, %c1_78] : memref<64x182xbf16, #tpu.memory_space<vmem>>, vector<64x180xbf16>
    tpu.vector_store %arg12[%c0_77, %c1_78], %118 {strides = array<i32>} : memref<64x182xbf16, #tpu.memory_space<vmem>>, vector<64x180xbf16>,
    %c0_i32 = arith.constant 0 : i32
    %120 = arith.cmpi eq, %arg1, %c0_i32 : i32
    %121 = arith.extui %120 : i1 to i32
    %c0_i32_79 = arith.constant 0 : i32
    %122 = arith.cmpi ne, %121, %c0_i32_79 : i32
    scf.if %122 {
      %cst_123 = arith.constant 0.000000e+00 : bf16
      %173 = vector.broadcast %cst_123 : bf16 to vector<64x18xbf16>
      %c0_124 = arith.constant 0 : index
      %c1_125 = arith.constant 1 : index
      %174 = vector.load %arg12[%c0_124, %c1_125] : memref<64x182xbf16, #tpu.memory_space<vmem>>, vector<64x18xbf16>
      tpu.vector_store %arg12[%c0_124, %c1_125], %173 {strides = array<i32>} : memref<64x182xbf16, #tpu.memory_space<vmem>>, vector<64x18xbf16>,
    } else {
    }
    %c1_i32 = arith.constant 1 : i32
    %123 = arith.cmpi eq, %arg1, %c1_i32 : i32
    %124 = arith.extui %123 : i1 to i32
    %c0_i32_80 = arith.constant 0 : i32
    %125 = arith.cmpi ne, %124, %c0_i32_80 : i32
    scf.if %125 {
      %cst_123 = arith.constant 0.000000e+00 : bf16
      %173 = vector.broadcast %cst_123 : bf16 to vector<64x18xbf16>
      %c0_124 = arith.constant 0 : index
      %c163_125 = arith.constant 163 : index
      %174 = vector.load %arg12[%c0_124, %c163_125] : memref<64x182xbf16, #tpu.memory_space<vmem>>, vector<64x18xbf16>
      tpu.vector_store %arg12[%c0_124, %c163_125], %173 {strides = array<i32>} : memref<64x182xbf16, #tpu.memory_space<vmem>>, vector<64x18xbf16>,
    } else {
    }
    %c0_81 = arith.constant 0 : index
    %c0_82 = arith.constant 0 : index
    %126 = vector.load %arg12[%c0_81, %c0_82] : memref<64x182xbf16, #tpu.memory_space<vmem>>, vector<64x144xbf16>
    %c0_83 = arith.constant 0 : index
    %c1_84 = arith.constant 1 : index
    %127 = vector.load %arg12[%c0_83, %c1_84] : memref<64x182xbf16, #tpu.memory_space<vmem>>, vector<64x144xbf16>
    %c0_85 = arith.constant 0 : index
    %c2_86 = arith.constant 2 : index
    %128 = vector.load %arg12[%c0_85, %c2_86] : memref<64x182xbf16, #tpu.memory_space<vmem>>, vector<64x144xbf16>
    %c0_87 = arith.constant 0 : index
    %c18_88 = arith.constant 18 : index
    %129 = vector.load %arg12[%c0_87, %c18_88] : memref<64x182xbf16, #tpu.memory_space<vmem>>, vector<64x144xbf16>
    %c0_89 = arith.constant 0 : index
    %c19_90 = arith.constant 19 : index
    %130 = vector.load %arg12[%c0_89, %c19_90] : memref<64x182xbf16, #tpu.memory_space<vmem>>, vector<64x144xbf16>
    %c0_91 = arith.constant 0 : index
    %c20_92 = arith.constant 20 : index
    %131 = vector.load %arg12[%c0_91, %c20_92] : memref<64x182xbf16, #tpu.memory_space<vmem>>, vector<64x144xbf16>
    %c0_93 = arith.constant 0 : index
    %c36_94 = arith.constant 36 : index
    %132 = vector.load %arg12[%c0_93, %c36_94] : memref<64x182xbf16, #tpu.memory_space<vmem>>, vector<64x144xbf16>
    %c0_95 = arith.constant 0 : index
    %c37_96 = arith.constant 37 : index
    %133 = vector.load %arg12[%c0_95, %c37_96] : memref<64x182xbf16, #tpu.memory_space<vmem>>, vector<64x144xbf16>
    %c0_97 = arith.constant 0 : index
    %c38_98 = arith.constant 38 : index
    %134 = vector.load %arg12[%c0_97, %c38_98] : memref<64x182xbf16, #tpu.memory_space<vmem>>, vector<64x144xbf16>
    %135 = tpu.concatenate %126, %127, %128, %129, %130, %131, %132, %133, %134 in 0 : vector<64x144xbf16>, vector<64x144xbf16>, vector<64x144xbf16>, vector<64x144xbf16>, vector<64x144xbf16>, vector<64x144xbf16>, vector<64x144xbf16>, vector<64x144xbf16>, vector<64x144xbf16> -> vector<576x144xbf16>
    %c0_99 = arith.constant 0 : index
    %c0_100 = arith.constant 0 : index
    %136 = vector.load %arg7[%c0_99, %c0_100] : memref<1x576xbf16, #tpu.memory_space<vmem>>, vector<1x576xbf16>
    %cst_101 = arith.constant dense<0.000000e+00> : vector<1x144xf32>
    %137 = tpu.matmul %136, %135, %cst_101 {dimension_numbers = #tpu.dot_dimension_numbers<[1], [0], [0], [1], [0, 0, 1, 1], [], []>} : vector<1x576xbf16>, vector<576x144xbf16>, vector<1x144xf32> -> vector<1x144xf32>
    %c0_102 = arith.constant 0 : index
    %c0_103 = arith.constant 0 : index
    %138 = vector.load %arg8[%c0_102, %c0_103] : memref<1x1xf32, #tpu.memory_space<vmem>>, vector<1x1xf32>
    %139 = vector.broadcast %138 : vector<1x1xf32> to vector<1x144xf32>
    %140 = arith.addf %137, %139 : vector<1x144xf32>
    %141 = vector.extract_strided_slice %140 {offsets = [0, 1], sizes = [1, 16], strides = [1, 1]} : vector<1x144xf32> to vector<1x16xf32>
    %c0_104 = arith.constant 0 : index
    %c0_105 = arith.constant 0 : index
    %c0_106 = arith.constant 0 : index
    %142 = vector.load %arg10[%c0_104, %c0_105, %c0_106] : memref<1x8x16xf32, #tpu.memory_space<vmem>>, vector<1x1x16xf32>
    %143 = vector.shape_cast %142 : vector<1x1x16xf32> to vector<1x16xf32>
    %144 = vector.shape_cast %141 : vector<1x16xf32> to vector<1x1x16xf32>
    tpu.vector_store %arg10[%c0_104, %c0_105, %c0_106], %144 {strides = array<i32>} : memref<1x8x16xf32, #tpu.memory_space<vmem>>, vector<1x1x16xf32>,
    %145 = vector.extract_strided_slice %140 {offsets = [0, 19], sizes = [1, 16], strides = [1, 1]} : vector<1x144xf32> to vector<1x16xf32>
    %c0_107 = arith.constant 0 : index
    %c1_108 = arith.constant 1 : index
    %c0_109 = arith.constant 0 : index
    %146 = vector.load %arg10[%c0_107, %c1_108, %c0_109] : memref<1x8x16xf32, #tpu.memory_space<vmem>>, vector<1x1x16xf32>
    %147 = vector.shape_cast %146 : vector<1x1x16xf32> to vector<1x16xf32>
    %148 = vector.shape_cast %145 : vector<1x16xf32> to vector<1x1x16xf32>
    tpu.vector_store %arg10[%c0_107, %c1_108, %c0_109], %148 {strides = array<i32>} : memref<1x8x16xf32, #tpu.memory_space<vmem>>, vector<1x1x16xf32>,
    %149 = vector.extract_strided_slice %140 {offsets = [0, 37], sizes = [1, 16], strides = [1, 1]} : vector<1x144xf32> to vector<1x16xf32>
    %c0_110 = arith.constant 0 : index
    %c2_111 = arith.constant 2 : index
    %c0_112 = arith.constant 0 : index
    %150 = vector.load %arg10[%c0_110, %c2_111, %c0_112] : memref<1x8x16xf32, #tpu.memory_space<vmem>>, vector<1x1x16xf32>
    %151 = vector.shape_cast %150 : vector<1x1x16xf32> to vector<1x16xf32>
    %152 = vector.shape_cast %149 : vector<1x16xf32> to vector<1x1x16xf32>
    tpu.vector_store %arg10[%c0_110, %c2_111, %c0_112], %152 {strides = array<i32>} : memref<1x8x16xf32, #tpu.memory_space<vmem>>, vector<1x1x16xf32>,
    %153 = vector.extract_strided_slice %140 {offsets = [0, 55], sizes = [1, 16], strides = [1, 1]} : vector<1x144xf32> to vector<1x16xf32>
    %c0_113 = arith.constant 0 : index
    %c3 = arith.constant 3 : index
    %c0_114 = arith.constant 0 : index
    %154 = vector.load %arg10[%c0_113, %c3, %c0_114] : memref<1x8x16xf32, #tpu.memory_space<vmem>>, vector<1x1x16xf32>
    %155 = vector.shape_cast %154 : vector<1x1x16xf32> to vector<1x16xf32>
    %156 = vector.shape_cast %153 : vector<1x16xf32> to vector<1x1x16xf32>
    tpu.vector_store %arg10[%c0_113, %c3, %c0_114], %156 {strides = array<i32>} : memref<1x8x16xf32, #tpu.memory_space<vmem>>, vector<1x1x16xf32>,
    %157 = vector.extract_strided_slice %140 {offsets = [0, 73], sizes = [1, 16], strides = [1, 1]} : vector<1x144xf32> to vector<1x16xf32>
    %c0_115 = arith.constant 0 : index
    %c4 = arith.constant 4 : index
    %c0_116 = arith.constant 0 : index
    %158 = vector.load %arg10[%c0_115, %c4, %c0_116] : memref<1x8x16xf32, #tpu.memory_space<vmem>>, vector<1x1x16xf32>
    %159 = vector.shape_cast %158 : vector<1x1x16xf32> to vector<1x16xf32>
    %160 = vector.shape_cast %157 : vector<1x16xf32> to vector<1x1x16xf32>
    tpu.vector_store %arg10[%c0_115, %c4, %c0_116], %160 {strides = array<i32>} : memref<1x8x16xf32, #tpu.memory_space<vmem>>, vector<1x1x16xf32>,
    %161 = vector.extract_strided_slice %140 {offsets = [0, 91], sizes = [1, 16], strides = [1, 1]} : vector<1x144xf32> to vector<1x16xf32>
    %c0_117 = arith.constant 0 : index
    %c5 = arith.constant 5 : index
    %c0_118 = arith.constant 0 : index
    %162 = vector.load %arg10[%c0_117, %c5, %c0_118] : memref<1x8x16xf32, #tpu.memory_space<vmem>>, vector<1x1x16xf32>
    %163 = vector.shape_cast %162 : vector<1x1x16xf32> to vector<1x16xf32>
    %164 = vector.shape_cast %161 : vector<1x16xf32> to vector<1x1x16xf32>
    tpu.vector_store %arg10[%c0_117, %c5, %c0_118], %164 {strides = array<i32>} : memref<1x8x16xf32, #tpu.memory_space<vmem>>, vector<1x1x16xf32>,
    %165 = vector.extract_strided_slice %140 {offsets = [0, 109], sizes = [1, 16], strides = [1, 1]} : vector<1x144xf32> to vector<1x16xf32>
    %c0_119 = arith.constant 0 : index
    %c6 = arith.constant 6 : index
    %c0_120 = arith.constant 0 : index
    %166 = vector.load %arg10[%c0_119, %c6, %c0_120] : memref<1x8x16xf32, #tpu.memory_space<vmem>>, vector<1x1x16xf32>
    %167 = vector.shape_cast %166 : vector<1x1x16xf32> to vector<1x16xf32>
    %168 = vector.shape_cast %165 : vector<1x16xf32> to vector<1x1x16xf32>
    tpu.vector_store %arg10[%c0_119, %c6, %c0_120], %168 {strides = array<i32>} : memref<1x8x16xf32, #tpu.memory_space<vmem>>, vector<1x1x16xf32>,
    %169 = vector.extract_strided_slice %140 {offsets = [0, 127], sizes = [1, 16], strides = [1, 1]} : vector<1x144xf32> to vector<1x16xf32>
    %c0_121 = arith.constant 0 : index
    %c7 = arith.constant 7 : index
    %c0_122 = arith.constant 0 : index
    %170 = vector.load %arg10[%c0_121, %c7, %c0_122] : memref<1x8x16xf32, #tpu.memory_space<vmem>>, vector<1x1x16xf32>
    %171 = vector.shape_cast %170 : vector<1x1x16xf32> to vector<1x16xf32>
    %172 = vector.shape_cast %169 : vector<1x16xf32> to vector<1x1x16xf32>
    tpu.vector_store %arg10[%c0_121, %c7, %c0_122], %172 {strides = array<i32>} : memref<1x8x16xf32, #tpu.memory_space<vmem>>, vector<1x1x16xf32>,
    return
  }
  func.func @transform_0(%arg0: i32, %arg1: i32) -> (i32, i32, i32) {
    %c0_i32 = arith.constant 0 : i32
    %c0_i32_0 = arith.constant 0 : i32
    %c0_i32_1 = arith.constant 0 : i32
    return %arg0, %c0_i32, %c0_i32_0 : i32, i32, i32
  }
  func.func @transform_1(%arg0: i32, %arg1: i32) -> (i32, i32, i32) {
    %c0_i32 = arith.constant 0 : i32
    %c0_i32_0 = arith.constant 0 : i32
    %c0_i32_1 = arith.constant 0 : i32
    return %arg1, %c0_i32, %c0_i32_0 : i32, i32, i32
  }
  func.func @transform_2(%arg0: i32, %arg1: i32) -> (i32, i32) {
    %c0_i32 = arith.constant 0 : i32
    %c0_i32_0 = arith.constant 0 : i32
    %c0_i32_1 = arith.constant 0 : i32
    return %c0_i32, %c0_i32_0 : i32, i32
  }
  func.func @transform_3(%arg0: i32, %arg1: i32) -> (i32, i32) {
    %c0_i32 = arith.constant 0 : i32
    %c0_i32_0 = arith.constant 0 : i32
    %c0_i32_1 = arith.constant 0 : i32
    return %c0_i32, %c0_i32_0 : i32, i32
  }
  func.func @transform_4(%arg0: i32, %arg1: i32) -> (i32, i32) {
    %c0_i32 = arith.constant 0 : i32
    %c0_i32_0 = arith.constant 0 : i32
    %c0_i32_1 = arith.constant 0 : i32
    return %c0_i32, %c0_i32_0 : i32, i32
  }
  func.func @transform_5(%arg0: i32, %arg1: i32) -> (i32, i32) {
    %c0_i32 = arith.constant 0 : i32
    %c0_i32_0 = arith.constant 0 : i32
    %c0_i32_1 = arith.constant 0 : i32
    return %c0_i32, %c0_i32_0 : i32, i32
  }
  func.func @transform_6(%arg0: i32, %arg1: i32) -> (i32, i32) {
    %c0_i32 = arith.constant 0 : i32
    %c0_i32_0 = arith.constant 0 : i32
    %c0_i32_1 = arith.constant 0 : i32
    return %c0_i32, %c0_i32_0 : i32, i32
  }
  func.func @transform_7(%arg0: i32, %arg1: i32) -> (i32, i32) {
    %c0_i32 = arith.constant 0 : i32
    %c0_i32_0 = arith.constant 0 : i32
    %c0_i32_1 = arith.constant 0 : i32
    return %c0_i32, %c0_i32_0 : i32, i32
  }
  func.func @transform_8(%arg0: i32, %arg1: i32) -> (i32, i32, i32) {
    %c0_i32 = arith.constant 0 : i32
    %c0_i32_0 = arith.constant 0 : i32
    return %arg0, %arg1, %c0_i32 : i32, i32, i32
  }
}

</mosaic_0001>

<llo_original>
// kernel: fuse_forward.1
$region0: #{fuse_forward.1}
  #allocation0 [shape = 'u32[]', space=smem, size = 0x4, offset = 0x4, fixed_abs, tag = 'smem constant byte address 0x4 - core index']
  #allocation1 [shape = 'u32[72,128]{1,0:T(1,128)}', space=vmem, size = 0x9000, scoped, tag = 'internal scratch']
  #allocation2 [shape = 'bf16[64,218]{1,0:T(8,128)(2,1)}', space=vmem, size = 0x8000, scoped, tag = 'scratch operand']
  #allocation3 [shape = 'bf16[64,182]{1,0:T(8,128)(2,1)}', space=vmem, size = 0x8000, scoped, tag = 'scratch operand']
  #allocation4 [shape = 'f32[1,1]{1,0:T(1,128)S(1)}', space=vmem, size = 0x200, scoped, tag = 'scoped memory for fuse_forward.1']
  %s0 = inlined_call_operand.vmem [shape: f32[2,512,8], index: 0, kind: input, shape index: {}]
  %s1 = inlined_call_operand.vmem [shape: f32[2,12,8], index: 1, kind: input, shape index: {}]
  %s2 = inlined_call_operand.vmem [shape: f32[8,16], index: 2, kind: input, shape index: {}]
  %s3 = inlined_call_operand.vmem [shape: bf16[64,576], index: 3, kind: input, shape index: {}]
  %s4 = inlined_call_operand.vmem [shape: f32[64,1], index: 4, kind: input, shape index: {}]
  %s5 = inlined_call_operand.vmem [shape: bf16[1,576], index: 5, kind: input, shape index: {}]
  %s6 = inlined_call_operand.<no memory space> [shape: f32[1,1], index: 6, kind: input, shape index: {}]
  %s7 = inlined_call_operand.vmem [shape: f32[1,180], index: 7, kind: input, shape index: {}]
  %s8 = inlined_call_operand.hbm [shape: f32[2,16,16], index: 8, kind: output, shape index: {}]
  %s9 = sld [smem:[#allocation0]]
  $region73: #{fuse_forward.1} parent=0
    _
  %s11 = ssub.s32 1, %s9
  %s12 = scalar_select 0, %s11, %s9
  %v13 = vstv %s6
  %14 = vst [vmem:[#allocation4] sm:$0x1] %v13
  $region1: #{fuse_forward.1} parent=0
    #allocation5 [shape = 'u8[8192]{0}', space=vmem, size = 0x2000, scoped, tag = 'output window, operand 0']
    #allocation6 [shape = 's32[2]{0}', space=sflag, size = 0x8, scoped, tag = 'scoped memory for fuse_forward.1']
    %15 = vsyncpa [#allocation6], 0
    %s16 = scalar_lea.sflag [#allocation6], 1
    %17 = vsyncpa %s16, 0
    loop: start=0, step=1, limit=6
    $region2: #{fuse_forward.1} parent=1 // loop_pre_header
      _
    $region3: #{fuse_forward.1} parent=1 // loop_header
      %s19 = sphi 0, %s23
      %p20 = scmp.ge.s32.totalorder %s19, 6
      %s26 = sphi 0, %s38
      %s27 = sphi 0, %s34
      %s28 = sphi 0, %s26
      %s29 = sphi 0, %s27
      %s30 = sphi 0, %s28
      %s31 = sphi 0, %s29
      %s41 = sphi 0, %s43
      %s44 = sphi 0, %s41
      %s45 = sphi 0, %s44
      %s61 = sphi 0, %s45
      %s67 = sphi 0, %s69
      %s70 = sphi 0, %s67
      %s71 = sphi 0, %s70
      %s87 = sphi 0, %s71
      %s91 = sphi 0, %s91
      %s93 = sphi 0, %s91
      %s94 = sphi 0, %s93
      %s108 = sphi 0, %s94
      %s112 = sphi 0, %s112
      %s114 = sphi 0, %s112
      %s115 = sphi 0, %s114
      %s129 = sphi 0, %s115
      %s133 = sphi 0, %s133
      %s135 = sphi 0, %s133
      %s136 = sphi 0, %s135
      %s150 = sphi 0, %s136
      %s154 = sphi 0, %s154
      %s156 = sphi 0, %s154
      %s157 = sphi 0, %s156
      %s171 = sphi 0, %s157
      %s175 = sphi 0, %s175
      %s177 = sphi 0, %s175
      %s178 = sphi 0, %s177
      %s192 = sphi 0, %s178
      %s196 = sphi 0, %s196
      %s198 = sphi 0, %s196
      %s199 = sphi 0, %s198
      %s213 = sphi 0, %s199
      %s221 = sphi 0, %s223
      %s224 = sphi 0, %s221
      %s225 = sphi 0, %s224
      %s241 = sphi 0, %s225
    $region4: #{fuse_forward.1} parent=1 // loop_header_branch
      %22 = sbr.rel (%p20) target = $region8
    $region5: #{fuse_forward.1} parent=1 // loop_body
      %s24 = ssub.s32 %s19, 1
      %s25 = ssub.s32 %s19, 2
      %s32 = sadd.s32 1, %s27
      %p33 = scmp.ge.s32.totalorder %s32, 2
      %s34 = scalar_select %p33, 0, %s32
      %s35 = sadd.s32 1, %s26
      %s36 = scalar_select %p33, %s35, %s26
      %p37 = scmp.ge.s32.totalorder %s36, 2
      %s38 = scalar_select %p37, 0, %s36
      %s39 = ssub.s32 %s26, %s38
      %p40 = scmp.eq.s32.totalorder %s39, 0
      %s42 = sadd.s32 %s41, 1
      %s43 = scalar_select %p40, %s41, %s42
      %p46 = pneg %p40
      %p47 = scmp.eq.s32.totalorder %s19, 3
      %p48 = por %p46, %p47
      %p49 = scmp.ne.s32.totalorder %s41, %s44
      %p50 = scmp.eq.s32.totalorder %s19, 0
      %p51 = por %p49, %p50
      %p52 = scmp.ne.s32.totalorder %s41, %s44
      %p53 = scmp.eq.s32.totalorder %s24, 3
      %p54 = por %p52, %p53
      %p55 = scmp.ne.s32.totalorder %s44, %s45
      %p56 = scmp.eq.s32.totalorder %s24, 0
      %p57 = por %p55, %p56
      %p58 = scmp.ne.s32.totalorder %s44, %s45
      %p59 = scmp.eq.s32.totalorder %s25, 3
      %p60 = por %p58, %p59
      %p62 = scmp.ne.s32.totalorder %s45, %s61
      %p63 = scmp.eq.s32.totalorder %s25, 0
      %p64 = por %p62, %p63
      %s65 = ssub.s32 %s27, %s34
      %p66 = scmp.eq.s32.totalorder %s65, 0
      %s68 = sadd.s32 %s67, 1
      %s69 = scalar_select %p66, %s67, %s68
      %p72 = pneg %p66
      %p73 = scmp.eq.s32.totalorder %s19, 3
      %p74 = por %p72, %p73
      %p75 = scmp.ne.s32.totalorder %s67, %s70
      %p76 = scmp.eq.s32.totalorder %s19, 0
      %p77 = por %p75, %p76
      %p78 = scmp.ne.s32.totalorder %s67, %s70
      %p79 = scmp.eq.s32.totalorder %s24, 3
      %p80 = por %p78, %p79
      %p81 = scmp.ne.s32.totalorder %s70, %s71
      %p82 = scmp.eq.s32.totalorder %s24, 0
      %p83 = por %p81, %p82
      %p84 = scmp.ne.s32.totalorder %s70, %s71
      %p85 = scmp.eq.s32.totalorder %s25, 3
      %p86 = por %p84, %p85
      %p88 = scmp.ne.s32.totalorder %s71, %s87
      %p89 = scmp.eq.s32.totalorder %s25, 0
      %p90 = por %p88, %p89
      %s92 = sadd.s32 %s91, 1
      %p95 = scmp.eq.s32.totalorder %s19, 3
      %p96 = scmp.ne.s32.totalorder %s91, %s93
      %p97 = scmp.eq.s32.totalorder %s19, 0
      %p98 = por %p96, %p97
      %p99 = scmp.ne.s32.totalorder %s91, %s93
      %p100 = scmp.eq.s32.totalorder %s24, 3
      %p101 = por %p99, %p100
      %p102 = scmp.ne.s32.totalorder %s93, %s94
      %p103 = scmp.eq.s32.totalorder %s24, 0
      %p104 = por %p102, %p103
      %p105 = scmp.ne.s32.totalorder %s93, %s94
      %p106 = scmp.eq.s32.totalorder %s25, 3
      %p107 = por %p105, %p106
      %p109 = scmp.ne.s32.totalorder %s94, %s108
      %p110 = scmp.eq.s32.totalorder %s25, 0
      %p111 = por %p109, %p110
      %s113 = sadd.s32 %s112, 1
      %p116 = scmp.eq.s32.totalorder %s19, 3
      %p117 = scmp.ne.s32.totalorder %s112, %s114
      %p118 = scmp.eq.s32.totalorder %s19, 0
      %p119 = por %p117, %p118
      %p120 = scmp.ne.s32.totalorder %s112, %s114
      %p121 = scmp.eq.s32.totalorder %s24, 3
      %p122 = por %p120, %p121
      %p123 = scmp.ne.s32.totalorder %s114, %s115
      %p124 = scmp.eq.s32.totalorder %s24, 0
      %p125 = por %p123, %p124
      %p126 = scmp.ne.s32.totalorder %s114, %s115
      %p127 = scmp.eq.s32.totalorder %s25, 3
      %p128 = por %p126, %p127
      %p130 = scmp.ne.s32.totalorder %s115, %s129
      %p131 = scmp.eq.s32.totalorder %s25, 0
      %p132 = por %p130, %p131
      %s134 = sadd.s32 %s133, 1
      %p137 = scmp.eq.s32.totalorder %s19, 3
      %p138 = scmp.ne.s32.totalorder %s133, %s135
      %p139 = scmp.eq.s32.totalorder %s19, 0
      %p140 = por %p138, %p139
      %p141 = scmp.ne.s32.totalorder %s133, %s135
      %p142 = scmp.eq.s32.totalorder %s24, 3
      %p143 = por %p141, %p142
      %p144 = scmp.ne.s32.totalorder %s135, %s136
      %p145 = scmp.eq.s32.totalorder %s24, 0
      %p146 = por %p144, %p145
      %p147 = scmp.ne.s32.totalorder %s135, %s136
      %p148 = scmp.eq.s32.totalorder %s25, 3
      %p149 = por %p147, %p148
      %p151 = scmp.ne.s32.totalorder %s136, %s150
      %p152 = scmp.eq.s32.totalorder %s25, 0
      %p153 = por %p151, %p152
      %s155 = sadd.s32 %s154, 1
      %p158 = scmp.eq.s32.totalorder %s19, 3
      %p159 = scmp.ne.s32.totalorder %s154, %s156
      %p160 = scmp.eq.s32.totalorder %s19, 0
      %p161 = por %p159, %p160
      %p162 = scmp.ne.s32.totalorder %s154, %s156
      %p163 = scmp.eq.s32.totalorder %s24, 3
      %p164 = por %p162, %p163
      %p165 = scmp.ne.s32.totalorder %s156, %s157
      %p166 = scmp.eq.s32.totalorder %s24, 0
      %p167 = por %p165, %p166
      %p168 = scmp.ne.s32.totalorder %s156, %s157
      %p169 = scmp.eq.s32.totalorder %s25, 3
      %p170 = por %p168, %p169
      %p172 = scmp.ne.s32.totalorder %s157, %s171
      %p173 = scmp.eq.s32.totalorder %s25, 0
      %p174 = por %p172, %p173
      %s176 = sadd.s32 %s175, 1
      %p179 = scmp.eq.s32.totalorder %s19, 3
      %p180 = scmp.ne.s32.totalorder %s175, %s177
      %p181 = scmp.eq.s32.totalorder %s19, 0
      %p182 = por %p180, %p181
      %p183 = scmp.ne.s32.totalorder %s175, %s177
      %p184 = scmp.eq.s32.totalorder %s24, 3
      %p185 = por %p183, %p184
      %p186 = scmp.ne.s32.totalorder %s177, %s178
      %p187 = scmp.eq.s32.totalorder %s24, 0
      %p188 = por %p186, %p187
      %p189 = scmp.ne.s32.totalorder %s177, %s178
      %p190 = scmp.eq.s32.totalorder %s25, 3
      %p191 = por %p189, %p190
      %p193 = scmp.ne.s32.totalorder %s178, %s192
      %p194 = scmp.eq.s32.totalorder %s25, 0
      %p195 = por %p193, %p194
      %s197 = sadd.s32 %s196, 1
      %p200 = scmp.eq.s32.totalorder %s19, 3
      %p201 = scmp.ne.s32.totalorder %s196, %s198
      %p202 = scmp.eq.s32.totalorder %s19, 0
      %p203 = por %p201, %p202
      %p204 = scmp.ne.s32.totalorder %s196, %s198
      %p205 = scmp.eq.s32.totalorder %s24, 3
      %p206 = por %p204, %p205
      %p207 = scmp.ne.s32.totalorder %s198, %s199
      %p208 = scmp.eq.s32.totalorder %s24, 0
      %p209 = por %p207, %p208
      %p210 = scmp.ne.s32.totalorder %s198, %s199
      %p211 = scmp.eq.s32.totalorder %s25, 3
      %p212 = por %p210, %p211
      %p214 = scmp.ne.s32.totalorder %s199, %s213
      %p215 = scmp.eq.s32.totalorder %s25, 0
      %p216 = por %p214, %p215
      %s217 = ssub.s32 %s26, %s38
      %s218 = ssub.s32 %s27, %s34
      %s219 = sor.u32 %s217, %s218
      %p220 = scmp.eq.s32.totalorder %s219, 0
      %s222 = sadd.s32 %s221, 1
      %s223 = scalar_select %p220, %s221, %s222
      %p226 = pneg %p220
      %p227 = scmp.eq.s32.totalorder %s19, 3
      %p228 = por %p226, %p227
      %p229 = scmp.ne.s32.totalorder %s221, %s224
      %p230 = scmp.eq.s32.totalorder %s19, 0
      %p231 = por %p229, %p230
      %p232 = scmp.ne.s32.totalorder %s221, %s224
      %p233 = scmp.eq.s32.totalorder %s24, 3
      %p234 = por %p232, %p233
      %p235 = scmp.ne.s32.totalorder %s224, %s225
      %p236 = scmp.eq.s32.totalorder %s24, 0
      %p237 = por %p235, %p236
      %p238 = scmp.ne.s32.totalorder %s224, %s225
      %p239 = scmp.eq.s32.totalorder %s25, 3
      %p240 = por %p238, %p239
      %p242 = scmp.ne.s32.totalorder %s225, %s241
      %p243 = scmp.eq.s32.totalorder %s25, 0
      %p244 = por %p242, %p243
      %p245 = scmp.le.s32.totalorder 1, %s19
      %p246 = scmp.lt.s32.totalorder %s19, 5
      %p247 = pnand %p245, %p246
      %p248 = pneg %p247
      // Predicated region
      $region9: #{fuse_forward.1} parent=5 // pred_check
        _
      $region10: #{fuse_forward.1} parent=5 // pred_check_branch
        %250 = sbr.rel (%p247) target = $region12
      $region11: #{fuse_forward.1} parent=5 // pred_region
        %s251 = ssub.s32 %s19, 1
        // Predicated region
        $region13: #{fuse_forward.1} parent=11 // pred_check
          %p252 = pneg %p104
        $region14: #{fuse_forward.1} parent=11 // pred_check_branch
          %254 = sbr.rel (%p252) target = $region16
        $region15: #{fuse_forward.1} parent=11 // pred_region
          _
        $region16: #{fuse_forward.1} parent=11 // pred_fallthru
          _
        // Predicated region
        $region17: #{fuse_forward.1} parent=11 // pred_check
          %p255 = pneg %p125
        $region18: #{fuse_forward.1} parent=11 // pred_check_branch
          %257 = sbr.rel (%p255) target = $region20
        $region19: #{fuse_forward.1} parent=11 // pred_region
          _
        $region20: #{fuse_forward.1} parent=11 // pred_fallthru
          _
        // Predicated region
        $region21: #{fuse_forward.1} parent=11 // pred_check
          %p258 = pneg %p146
        $region22: #{fuse_forward.1} parent=11 // pred_check_branch
          %260 = sbr.rel (%p258) target = $region24
        $region23: #{fuse_forward.1} parent=11 // pred_region
          _
        $region24: #{fuse_forward.1} parent=11 // pred_fallthru
          _
        // Predicated region
        $region25: #{fuse_forward.1} parent=11 // pred_check
          %p261 = pneg %p167
        $region26: #{fuse_forward.1} parent=11 // pred_check_branch
          %263 = sbr.rel (%p261) target = $region28
        $region27: #{fuse_forward.1} parent=11 // pred_region
          _
        $region28: #{fuse_forward.1} parent=11 // pred_fallthru
          _
        // Predicated region
        $region29: #{fuse_forward.1} parent=11 // pred_check
          %p264 = pneg %p188
        $region30: #{fuse_forward.1} parent=11 // pred_check_branch
          %266 = sbr.rel (%p264) target = $region32
        $region31: #{fuse_forward.1} parent=11 // pred_region
          _
        $region32: #{fuse_forward.1} parent=11 // pred_fallthru
          _
        // Predicated region
        $region33: #{fuse_forward.1} parent=11 // pred_check
          %p267 = pneg %p209
        $region34: #{fuse_forward.1} parent=11 // pred_check_branch
          %269 = sbr.rel (%p267) target = $region36
        $region35: #{fuse_forward.1} parent=11 // pred_region
          _
        $region36: #{fuse_forward.1} parent=11 // pred_fallthru
          _
      $region12: #{fuse_forward.1} parent=5 // pred_fallthru
        _
      %p270 = scmp.lt.s32.totalorder %s19, 4
      // Predicated region
      $region37: #{fuse_forward.1} parent=5 // pred_check
        %p271 = pneg %p270
      $region38: #{fuse_forward.1} parent=5 // pred_check_branch
        %273 = sbr.rel (%p271) target = $region40
      $region39: #{fuse_forward.1} parent=5 // pred_region
        // Predicated region
        $region41: #{fuse_forward.1} parent=39 // pred_check
          %p274 = pneg %p51
        $region42: #{fuse_forward.1} parent=39 // pred_check_branch
          %276 = sbr.rel (%p274) target = $region44
        $region43: #{fuse_forward.1} parent=39 // pred_region
          %p277 = scmp.lt.s32.totalorder %s26, 1
          %s278 = scalar_select %p277, %s26, 1
          %s279 = smul.addr %s278, 64
          %s280 = smul.addr %s279, 8
          %s281 = scalar_lea.vmem %s0, %s280
        $region44: #{fuse_forward.1} parent=39 // pred_fallthru
          _
        // Predicated region
        $region45: #{fuse_forward.1} parent=39 // pred_check
          %p282 = pneg %p77
        $region46: #{fuse_forward.1} parent=39 // pred_check_branch
          %284 = sbr.rel (%p282) target = $region48
        $region47: #{fuse_forward.1} parent=39 // pred_region
          %p285 = scmp.lt.s32.totalorder %s27, 1
          %s286 = scalar_select %p285, %s27, 1
          %s287 = smul.addr %s286, 2
          %s288 = smul.addr %s287, 8
          %s289 = scalar_lea.vmem %s1, %s288
        $region48: #{fuse_forward.1} parent=39 // pred_fallthru
          _
      $region40: #{fuse_forward.1} parent=5 // pred_fallthru
        _
      %p290 = scmp.le.s32.totalorder 1, %s19
      %p291 = scmp.lt.s32.totalorder %s19, 5
      %p292 = pnand %p290, %p291
      %p293 = pneg %p292
      // Predicated region
      $region49: #{fuse_forward.1} parent=5 // pred_check
        _
      $region50: #{fuse_forward.1} parent=5 // pred_check_branch
        %295 = sbr.rel (%p292) target = $region52
      $region51: #{fuse_forward.1} parent=5 // pred_region
        %s296 = ssub.s32 %s19, 1
        %p297 = scmp.lt.s32.totalorder %s28, 1
        %s298 = scalar_select %p297, %s28, 1
        %s299 = smul.addr %s298, 64
        %s300 = smul.addr %s299, 8
        %s301 = scalar_lea.vmem %s0, %s300
        %p302 = pneg %p57
        %p303 = pneg %p54
        %p304 = scmp.lt.s32.totalorder %s29, 1
        %s305 = scalar_select %p304, %s29, 1
        %s306 = smul.addr %s305, 2
        %s307 = smul.addr %s306, 8
        %s308 = scalar_lea.vmem %s1, %s307
        %p309 = pneg %p83
        %p310 = pneg %p80
        %p311 = pneg %p104
        %p312 = pneg %p101
        %p313 = pneg %p125
        %p314 = pneg %p122
        %p315 = pneg %p146
        %p316 = pneg %p143
        %p317 = pneg %p167
        %p318 = pneg %p164
        %p319 = pneg %p188
        %p320 = pneg %p185
        %p321 = pneg %p209
        %p322 = pneg %p206
        %p323 = pneg %p237
        %p324 = pneg %p234
        %s325 = sand.u32 %s224, 1
        %s326 = scalar_lea.sflag [#allocation6], %s325
        %s327 = sand.u32 %s224, 1
        %s328 = smul.addr %s327, 8
        %s329 = scalar_lea.vmem [#allocation5], %s328
        %p330 = scmp.lt.s32.totalorder %s28, 1
        %s331 = scalar_select %p330, %s28, 1
        %s332 = smul.addr %s331, 64
        %s333 = smul.addr %s332, 8
        %s334 = scalar_lea.vmem %s0, %s333
        %p335 = scmp.lt.s32.totalorder %s29, 1
        %s336 = scalar_select %p335, %s29, 1
        %s337 = smul.addr %s336, 2
        %s338 = smul.addr %s337, 8
        %s339 = scalar_lea.vmem %s1, %s338
        %v341 = vld [vmem:[%s334] sm:$0xff]
        %v342 = vld [vmem:[%s334 + $0x8] sm:$0xff]
        %v343 = vld [vmem:[%s334 + $0x10] sm:$0xff]
        %v344 = vld [vmem:[%s334 + $0x18] sm:$0xff]
        %v345 = vld [vmem:[%s334 + $0x20] sm:$0xff]
        %v346 = vld [vmem:[%s334 + $0x28] sm:$0xff]
        %v347 = vld [vmem:[%s334 + $0x30] sm:$0xff]
        %v348 = vld [vmem:[%s334 + $0x38] sm:$0xff]
        %v349 = vld [vmem:[%s334 + $0x40] sm:$0xff]
        %v350 = vld [vmem:[%s334 + $0x48] sm:$0xff]
        %v351 = vld [vmem:[%s334 + $0x50] sm:$0xff]
        %v352 = vld [vmem:[%s334 + $0x58] sm:$0xff]
        %v353 = vld [vmem:[%s334 + $0x60] sm:$0xff]
        %v354 = vld [vmem:[%s334 + $0x68] sm:$0xff]
        %v355 = vld [vmem:[%s334 + $0x70] sm:$0xff]
        %v356 = vld [vmem:[%s334 + $0x78] sm:$0xff]
        %v357 = vld [vmem:[%s334 + $0x80] sm:$0xff]
        %v358 = vld [vmem:[%s334 + $0x88] sm:$0xff]
        %v359 = vld [vmem:[%s334 + $0x90] sm:$0xff]
        %v360 = vld [vmem:[%s334 + $0x98] sm:$0xff]
        %v361 = vld [vmem:[%s334 + $0xa0] sm:$0xff]
        %v362 = vld [vmem:[%s334 + $0xa8] sm:$0xff]
        %v363 = vld [vmem:[%s334 + $0xb0] sm:$0xff]
        %v364 = vld [vmem:[%s334 + $0xb8] sm:$0xff]
        %v365 = vld [vmem:[%s334 + $0xc0] sm:$0xff]
        %v366 = vld [vmem:[%s334 + $0xc8] sm:$0xff]
        %v367 = vld [vmem:[%s334 + $0xd0] sm:$0xff]
        %v368 = vld [vmem:[%s334 + $0xd8] sm:$0xff]
        %v369 = vld [vmem:[%s334 + $0xe0] sm:$0xff]
        %v370 = vld [vmem:[%s334 + $0xe8] sm:$0xff]
        %v371 = vld [vmem:[%s334 + $0xf0] sm:$0xff]
        %v372 = vld [vmem:[%s334 + $0xf8] sm:$0xff]
        %v373 = vld [vmem:[%s334 + $0x100] sm:$0xff]
        %v374 = vld [vmem:[%s334 + $0x108] sm:$0xff]
        %v375 = vld [vmem:[%s334 + $0x110] sm:$0xff]
        %v376 = vld [vmem:[%s334 + $0x118] sm:$0xff]
        %v377 = vld [vmem:[%s334 + $0x120] sm:$0xff]
        %v378 = vld [vmem:[%s334 + $0x128] sm:$0xff]
        %v379 = vld [vmem:[%s334 + $0x130] sm:$0xff]
        %v380 = vld [vmem:[%s334 + $0x138] sm:$0xff]
        %v381 = vld [vmem:[%s334 + $0x140] sm:$0xff]
        %v382 = vld [vmem:[%s334 + $0x148] sm:$0xff]
        %v383 = vld [vmem:[%s334 + $0x150] sm:$0xff]
        %v384 = vld [vmem:[%s334 + $0x158] sm:$0xff]
        %v385 = vld [vmem:[%s334 + $0x160] sm:$0xff]
        %v386 = vld [vmem:[%s334 + $0x168] sm:$0xff]
        %v387 = vld [vmem:[%s334 + $0x170] sm:$0xff]
        %v388 = vld [vmem:[%s334 + $0x178] sm:$0xff]
        %v389 = vld [vmem:[%s334 + $0x180] sm:$0xff]
        %v390 = vld [vmem:[%s334 + $0x188] sm:$0xff]
        %v391 = vld [vmem:[%s334 + $0x190] sm:$0xff]
        %v392 = vld [vmem:[%s334 + $0x198] sm:$0xff]
        %v393 = vld [vmem:[%s334 + $0x1a0] sm:$0xff]
        %v394 = vld [vmem:[%s334 + $0x1a8] sm:$0xff]
        %v395 = vld [vmem:[%s334 + $0x1b0] sm:$0xff]
        %v396 = vld [vmem:[%s334 + $0x1b8] sm:$0xff]
        %v397 = vld [vmem:[%s334 + $0x1c0] sm:$0xff]
        %v398 = vld [vmem:[%s334 + $0x1c8] sm:$0xff]
        %v399 = vld [vmem:[%s334 + $0x1d0] sm:$0xff]
        %v400 = vld [vmem:[%s334 + $0x1d8] sm:$0xff]
        %v401 = vld [vmem:[%s334 + $0x1e0] sm:$0xff]
        %v402 = vld [vmem:[%s334 + $0x1e8] sm:$0xff]
        %v403 = vld [vmem:[%s334 + $0x1f0] sm:$0xff]
        %v404 = vld [vmem:[%s334 + $0x1f8] sm:$0xff]
        %v405 = vld [vmem:[%s339] sm:$0xff]
        %v406 = vld [vmem:[%s339 + $0x8] sm:$0xf]
        %vm407 = vcmask 64512
        %v409 = vsel %vm407, %v405, 0
        %v412 = vsel %vm407, %v406, 0
        %414 = vmatpush.msra.mxu0 0.0
        %415 = vmatpush.msra.mxu0 0.0
        %416 = vmatpush.msra.mxu0 0.0
        %417 = vmatpush.msra.mxu0 0.0
        %418 = vmatpush.msra.mxu0 0.0
        %419 = vmatpush.msra.mxu0 0.0
        %420 = vmatpush.msra.mxu0 0.0
        %421 = vmatpush.msra.mxu0 0.0
        %422 = vmatpush.msra.mxu0 0.0
        %423 = vmatpush.msra.mxu0 0.0
        %424 = vmatpush.msra.mxu0 0.0
        %425 = vmatpush.msra.mxu0 0.0
        %426 = vmatpush.msra.mxu0 0.0
        %427 = vmatpush.msra.mxu0 0.0
        %428 = vmatpush.msra.mxu0 0.0
        %429 = vmatpush.msra.mxu0 %v341
        %430 = vmatmul.f32.gmra.mxu0 %v409
        %v431 = vpop.f32.mrf.mxu0
        %v432 = vadd.f32 0.0, %v431
        %433 = vmatmul.f32.gmra.mxu0 %v412
        %v434 = vpop.f32.mrf.mxu0
        %v435 = vadd.f32 0.0, %v434
        %436 = vdwg.mxu0
        %437 = vmatpush.msra.mxu0 0.0
        %438 = vmatpush.msra.mxu0 0.0
        %439 = vmatpush.msra.mxu0 0.0
        %440 = vmatpush.msra.mxu0 0.0
        %441 = vmatpush.msra.mxu0 0.0
        %442 = vmatpush.msra.mxu0 0.0
        %443 = vmatpush.msra.mxu0 0.0
        %444 = vmatpush.msra.mxu0 0.0
        %445 = vmatpush.msra.mxu0 0.0
        %446 = vmatpush.msra.mxu0 0.0
        %447 = vmatpush.msra.mxu0 0.0
        %448 = vmatpush.msra.mxu0 0.0
        %449 = vmatpush.msra.mxu0 0.0
        %450 = vmatpush.msra.mxu0 0.0
        %451 = vmatpush.msra.mxu0 0.0
        %452 = vmatpush.msra.mxu0 %v342
        %453 = vmatmul.f32.gmra.mxu0 %v409
        %v454 = vpop.f32.mrf.mxu0
        %v455 = vadd.f32 0.0, %v454
        %456 = vmatmul.f32.gmra.mxu0 %v412
        %v457 = vpop.f32.mrf.mxu0
        %v458 = vadd.f32 0.0, %v457
        %459 = vdwg.mxu0
        %460 = vmatpush.msra.mxu0 0.0
        %461 = vmatpush.msra.mxu0 0.0
        %462 = vmatpush.msra.mxu0 0.0
        %463 = vmatpush.msra.mxu0 0.0
        %464 = vmatpush.msra.mxu0 0.0
        %465 = vmatpush.msra.mxu0 0.0
        %466 = vmatpush.msra.mxu0 0.0
        %467 = vmatpush.msra.mxu0 0.0
        %468 = vmatpush.msra.mxu0 0.0
        %469 = vmatpush.msra.mxu0 0.0
        %470 = vmatpush.msra.mxu0 0.0
        %471 = vmatpush.msra.mxu0 0.0
        %472 = vmatpush.msra.mxu0 0.0
        %473 = vmatpush.msra.mxu0 0.0
        %474 = vmatpush.msra.mxu0 0.0
        %475 = vmatpush.msra.mxu0 %v343
        %476 = vmatmul.f32.gmra.mxu0 %v409
        %v477 = vpop.f32.mrf.mxu0
        %v478 = vadd.f32 0.0, %v477
        %479 = vmatmul.f32.gmra.mxu0 %v412
        %v480 = vpop.f32.mrf.mxu0
        %v481 = vadd.f32 0.0, %v480
        %482 = vdwg.mxu0
        %483 = vmatpush.msra.mxu0 0.0
        %484 = vmatpush.msra.mxu0 0.0
        %485 = vmatpush.msra.mxu0 0.0
        %486 = vmatpush.msra.mxu0 0.0
        %487 = vmatpush.msra.mxu0 0.0
        %488 = vmatpush.msra.mxu0 0.0
        %489 = vmatpush.msra.mxu0 0.0
        %490 = vmatpush.msra.mxu0 0.0
        %491 = vmatpush.msra.mxu0 0.0
        %492 = vmatpush.msra.mxu0 0.0
        %493 = vmatpush.msra.mxu0 0.0
        %494 = vmatpush.msra.mxu0 0.0
        %495 = vmatpush.msra.mxu0 0.0
        %496 = vmatpush.msra.mxu0 0.0
        %497 = vmatpush.msra.mxu0 0.0
        %498 = vmatpush.msra.mxu0 %v344
        %499 = vmatmul.f32.gmra.mxu0 %v409
        %v500 = vpop.f32.mrf.mxu0
        %v501 = vadd.f32 0.0, %v500
        %502 = vmatmul.f32.gmra.mxu0 %v412
        %v503 = vpop.f32.mrf.mxu0
        %v504 = vadd.f32 0.0, %v503
        %505 = vdwg.mxu0
        %506 = vmatpush.msra.mxu0 0.0
        %507 = vmatpush.msra.mxu0 0.0
        %508 = vmatpush.msra.mxu0 0.0
        %509 = vmatpush.msra.mxu0 0.0
        %510 = vmatpush.msra.mxu0 0.0
        %511 = vmatpush.msra.mxu0 0.0
        %512 = vmatpush.msra.mxu0 0.0
        %513 = vmatpush.msra.mxu0 0.0
        %514 = vmatpush.msra.mxu0 0.0
        %515 = vmatpush.msra.mxu0 0.0
        %516 = vmatpush.msra.mxu0 0.0
        %517 = vmatpush.msra.mxu0 0.0
        %518 = vmatpush.msra.mxu0 0.0
        %519 = vmatpush.msra.mxu0 0.0
        %520 = vmatpush.msra.mxu0 0.0
        %521 = vmatpush.msra.mxu0 %v345
        %522 = vmatmul.f32.gmra.mxu0 %v409
        %v523 = vpop.f32.mrf.mxu0
        %v524 = vadd.f32 0.0, %v523
        %525 = vmatmul.f32.gmra.mxu0 %v412
        %v526 = vpop.f32.mrf.mxu0
        %v527 = vadd.f32 0.0, %v526
        %528 = vdwg.mxu0
        %529 = vmatpush.msra.mxu0 0.0
        %530 = vmatpush.msra.mxu0 0.0
        %531 = vmatpush.msra.mxu0 0.0
        %532 = vmatpush.msra.mxu0 0.0
        %533 = vmatpush.msra.mxu0 0.0
        %534 = vmatpush.msra.mxu0 0.0
        %535 = vmatpush.msra.mxu0 0.0
        %536 = vmatpush.msra.mxu0 0.0
        %537 = vmatpush.msra.mxu0 0.0
        %538 = vmatpush.msra.mxu0 0.0
        %539 = vmatpush.msra.mxu0 0.0
        %540 = vmatpush.msra.mxu0 0.0
        %541 = vmatpush.msra.mxu0 0.0
        %542 = vmatpush.msra.mxu0 0.0
        %543 = vmatpush.msra.mxu0 0.0
        %544 = vmatpush.msra.mxu0 %v346
        %545 = vmatmul.f32.gmra.mxu0 %v409
        %v546 = vpop.f32.mrf.mxu0
        %v547 = vadd.f32 0.0, %v546
        %548 = vmatmul.f32.gmra.mxu0 %v412
        %v549 = vpop.f32.mrf.mxu0
        %v550 = vadd.f32 0.0, %v549
        %551 = vdwg.mxu0
        %552 = vmatpush.msra.mxu0 0.0
        %553 = vmatpush.msra.mxu0 0.0
        %554 = vmatpush.msra.mxu0 0.0
        %555 = vmatpush.msra.mxu0 0.0
        %556 = vmatpush.msra.mxu0 0.0
        %557 = vmatpush.msra.mxu0 0.0
        %558 = vmatpush.msra.mxu0 0.0
        %559 = vmatpush.msra.mxu0 0.0
        %560 = vmatpush.msra.mxu0 0.0
        %561 = vmatpush.msra.mxu0 0.0
        %562 = vmatpush.msra.mxu0 0.0
        %563 = vmatpush.msra.mxu0 0.0
        %564 = vmatpush.msra.mxu0 0.0
        %565 = vmatpush.msra.mxu0 0.0
        %566 = vmatpush.msra.mxu0 0.0
        %567 = vmatpush.msra.mxu0 %v347
        %568 = vmatmul.f32.gmra.mxu0 %v409
        %v569 = vpop.f32.mrf.mxu0
        %v570 = vadd.f32 0.0, %v569
        %571 = vmatmul.f32.gmra.mxu0 %v412
        %v572 = vpop.f32.mrf.mxu0
        %v573 = vadd.f32 0.0, %v572
        %574 = vdwg.mxu0
        %575 = vmatpush.msra.mxu0 0.0
        %576 = vmatpush.msra.mxu0 0.0
        %577 = vmatpush.msra.mxu0 0.0
        %578 = vmatpush.msra.mxu0 0.0
        %579 = vmatpush.msra.mxu0 0.0
        %580 = vmatpush.msra.mxu0 0.0
        %581 = vmatpush.msra.mxu0 0.0
        %582 = vmatpush.msra.mxu0 0.0
        %583 = vmatpush.msra.mxu0 0.0
        %584 = vmatpush.msra.mxu0 0.0
        %585 = vmatpush.msra.mxu0 0.0
        %586 = vmatpush.msra.mxu0 0.0
        %587 = vmatpush.msra.mxu0 0.0
        %588 = vmatpush.msra.mxu0 0.0
        %589 = vmatpush.msra.mxu0 0.0
        %590 = vmatpush.msra.mxu0 %v348
        %591 = vmatmul.f32.gmra.mxu0 %v409
        %v592 = vpop.f32.mrf.mxu0
        %v593 = vadd.f32 0.0, %v592
        %594 = vmatmul.f32.gmra.mxu0 %v412
        %v595 = vpop.f32.mrf.mxu0
        %v596 = vadd.f32 0.0, %v595
        %597 = vdwg.mxu0
        %598 = vmatpush.msra.mxu0 0.0
        %599 = vmatpush.msra.mxu0 0.0
        %600 = vmatpush.msra.mxu0 0.0
        %601 = vmatpush.msra.mxu0 0.0
        %602 = vmatpush.msra.mxu0 0.0
        %603 = vmatpush.msra.mxu0 0.0
        %604 = vmatpush.msra.mxu0 0.0
        %605 = vmatpush.msra.mxu0 0.0
        %606 = vmatpush.msra.mxu0 0.0
        %607 = vmatpush.msra.mxu0 0.0
        %608 = vmatpush.msra.mxu0 0.0
        %609 = vmatpush.msra.mxu0 0.0
        %610 = vmatpush.msra.mxu0 0.0
        %611 = vmatpush.msra.mxu0 0.0
        %612 = vmatpush.msra.mxu0 0.0
        %613 = vmatpush.msra.mxu0 %v349
        %614 = vmatmul.f32.gmra.mxu0 %v409
        %v615 = vpop.f32.mrf.mxu0
        %v616 = vadd.f32 0.0, %v615
        %617 = vmatmul.f32.gmra.mxu0 %v412
        %v618 = vpop.f32.mrf.mxu0
        %v619 = vadd.f32 0.0, %v618
        %620 = vdwg.mxu0
        %621 = vmatpush.msra.mxu0 0.0
        %622 = vmatpush.msra.mxu0 0.0
        %623 = vmatpush.msra.mxu0 0.0
        %624 = vmatpush.msra.mxu0 0.0
        %625 = vmatpush.msra.mxu0 0.0
        %626 = vmatpush.msra.mxu0 0.0
        %627 = vmatpush.msra.mxu0 0.0
        %628 = vmatpush.msra.mxu0 0.0
        %629 = vmatpush.msra.mxu0 0.0
        %630 = vmatpush.msra.mxu0 0.0
        %631 = vmatpush.msra.mxu0 0.0
        %632 = vmatpush.msra.mxu0 0.0
        %633 = vmatpush.msra.mxu0 0.0
        %634 = vmatpush.msra.mxu0 0.0
        %635 = vmatpush.msra.mxu0 0.0
        %636 = vmatpush.msra.mxu0 %v350
        %637 = vmatmul.f32.gmra.mxu0 %v409
        %v638 = vpop.f32.mrf.mxu0
        %v639 = vadd.f32 0.0, %v638
        %640 = vmatmul.f32.gmra.mxu0 %v412
        %v641 = vpop.f32.mrf.mxu0
        %v642 = vadd.f32 0.0, %v641
        %643 = vdwg.mxu0
        %644 = vmatpush.msra.mxu0 0.0
        %645 = vmatpush.msra.mxu0 0.0
        %646 = vmatpush.msra.mxu0 0.0
        %647 = vmatpush.msra.mxu0 0.0
        %648 = vmatpush.msra.mxu0 0.0
        %649 = vmatpush.msra.mxu0 0.0
        %650 = vmatpush.msra.mxu0 0.0
        %651 = vmatpush.msra.mxu0 0.0
        %652 = vmatpush.msra.mxu0 0.0
        %653 = vmatpush.msra.mxu0 0.0
        %654 = vmatpush.msra.mxu0 0.0
        %655 = vmatpush.msra.mxu0 0.0
        %656 = vmatpush.msra.mxu0 0.0
        %657 = vmatpush.msra.mxu0 0.0
        %658 = vmatpush.msra.mxu0 0.0
        %659 = vmatpush.msra.mxu0 %v351
        %660 = vmatmul.f32.gmra.mxu0 %v409
        %v661 = vpop.f32.mrf.mxu0
        %v662 = vadd.f32 0.0, %v661
        %663 = vmatmul.f32.gmra.mxu0 %v412
        %v664 = vpop.f32.mrf.mxu0
        %v665 = vadd.f32 0.0, %v664
        %666 = vdwg.mxu0
        %667 = vmatpush.msra.mxu0 0.0
        %668 = vmatpush.msra.mxu0 0.0
        %669 = vmatpush.msra.mxu0 0.0
        %670 = vmatpush.msra.mxu0 0.0
        %671 = vmatpush.msra.mxu0 0.0
        %672 = vmatpush.msra.mxu0 0.0
        %673 = vmatpush.msra.mxu0 0.0
        %674 = vmatpush.msra.mxu0 0.0
        %675 = vmatpush.msra.mxu0 0.0
        %676 = vmatpush.msra.mxu0 0.0
        %677 = vmatpush.msra.mxu0 0.0
        %678 = vmatpush.msra.mxu0 0.0
        %679 = vmatpush.msra.mxu0 0.0
        %680 = vmatpush.msra.mxu0 0.0
        %681 = vmatpush.msra.mxu0 0.0
        %682 = vmatpush.msra.mxu0 %v352
        %683 = vmatmul.f32.gmra.mxu0 %v409
        %v684 = vpop.f32.mrf.mxu0
        %v685 = vadd.f32 0.0, %v684
        %686 = vmatmul.f32.gmra.mxu0 %v412
        %v687 = vpop.f32.mrf.mxu0
        %v688 = vadd.f32 0.0, %v687
        %689 = vdwg.mxu0
        %690 = vmatpush.msra.mxu0 0.0
        %691 = vmatpush.msra.mxu0 0.0
        %692 = vmatpush.msra.mxu0 0.0
        %693 = vmatpush.msra.mxu0 0.0
        %694 = vmatpush.msra.mxu0 0.0
        %695 = vmatpush.msra.mxu0 0.0
        %696 = vmatpush.msra.mxu0 0.0
        %697 = vmatpush.msra.mxu0 0.0
        %698 = vmatpush.msra.mxu0 0.0
        %699 = vmatpush.msra.mxu0 0.0
        %700 = vmatpush.msra.mxu0 0.0
        %701 = vmatpush.msra.mxu0 0.0
        %702 = vmatpush.msra.mxu0 0.0
        %703 = vmatpush.msra.mxu0 0.0
        %704 = vmatpush.msra.mxu0 0.0
        %705 = vmatpush.msra.mxu0 %v353
        %706 = vmatmul.f32.gmra.mxu0 %v409
        %v707 = vpop.f32.mrf.mxu0
        %v708 = vadd.f32 0.0, %v707
        %709 = vmatmul.f32.gmra.mxu0 %v412
        %v710 = vpop.f32.mrf.mxu0
        %v711 = vadd.f32 0.0, %v710
        %712 = vdwg.mxu0
        %713 = vmatpush.msra.mxu0 0.0
        %714 = vmatpush.msra.mxu0 0.0
        %715 = vmatpush.msra.mxu0 0.0
        %716 = vmatpush.msra.mxu0 0.0
        %717 = vmatpush.msra.mxu0 0.0
        %718 = vmatpush.msra.mxu0 0.0
        %719 = vmatpush.msra.mxu0 0.0
        %720 = vmatpush.msra.mxu0 0.0
        %721 = vmatpush.msra.mxu0 0.0
        %722 = vmatpush.msra.mxu0 0.0
        %723 = vmatpush.msra.mxu0 0.0
        %724 = vmatpush.msra.mxu0 0.0
        %725 = vmatpush.msra.mxu0 0.0
        %726 = vmatpush.msra.mxu0 0.0
        %727 = vmatpush.msra.mxu0 0.0
        %728 = vmatpush.msra.mxu0 %v354
        %729 = vmatmul.f32.gmra.mxu0 %v409
        %v730 = vpop.f32.mrf.mxu0
        %v731 = vadd.f32 0.0, %v730
        %732 = vmatmul.f32.gmra.mxu0 %v412
        %v733 = vpop.f32.mrf.mxu0
        %v734 = vadd.f32 0.0, %v733
        %735 = vdwg.mxu0
        %736 = vmatpush.msra.mxu0 0.0
        %737 = vmatpush.msra.mxu0 0.0
        %738 = vmatpush.msra.mxu0 0.0
        %739 = vmatpush.msra.mxu0 0.0
        %740 = vmatpush.msra.mxu0 0.0
        %741 = vmatpush.msra.mxu0 0.0
        %742 = vmatpush.msra.mxu0 0.0
        %743 = vmatpush.msra.mxu0 0.0
        %744 = vmatpush.msra.mxu0 0.0
        %745 = vmatpush.msra.mxu0 0.0
        %746 = vmatpush.msra.mxu0 0.0
        %747 = vmatpush.msra.mxu0 0.0
        %748 = vmatpush.msra.mxu0 0.0
        %749 = vmatpush.msra.mxu0 0.0
        %750 = vmatpush.msra.mxu0 0.0
        %751 = vmatpush.msra.mxu0 %v355
        %752 = vmatmul.f32.gmra.mxu0 %v409
        %v753 = vpop.f32.mrf.mxu0
        %v754 = vadd.f32 0.0, %v753
        %755 = vmatmul.f32.gmra.mxu0 %v412
        %v756 = vpop.f32.mrf.mxu0
        %v757 = vadd.f32 0.0, %v756
        %758 = vdwg.mxu0
        %759 = vmatpush.msra.mxu0 0.0
        %760 = vmatpush.msra.mxu0 0.0
        %761 = vmatpush.msra.mxu0 0.0
        %762 = vmatpush.msra.mxu0 0.0
        %763 = vmatpush.msra.mxu0 0.0
        %764 = vmatpush.msra.mxu0 0.0
        %765 = vmatpush.msra.mxu0 0.0
        %766 = vmatpush.msra.mxu0 0.0
        %767 = vmatpush.msra.mxu0 0.0
        %768 = vmatpush.msra.mxu0 0.0
        %769 = vmatpush.msra.mxu0 0.0
        %770 = vmatpush.msra.mxu0 0.0
        %771 = vmatpush.msra.mxu0 0.0
        %772 = vmatpush.msra.mxu0 0.0
        %773 = vmatpush.msra.mxu0 0.0
        %774 = vmatpush.msra.mxu0 %v356
        %775 = vmatmul.f32.gmra.mxu0 %v409
        %v776 = vpop.f32.mrf.mxu0
        %v777 = vadd.f32 0.0, %v776
        %778 = vmatmul.f32.gmra.mxu0 %v412
        %v779 = vpop.f32.mrf.mxu0
        %v780 = vadd.f32 0.0, %v779
        %781 = vdwg.mxu0
        %782 = vmatpush.msra.mxu0 0.0
        %783 = vmatpush.msra.mxu0 0.0
        %784 = vmatpush.msra.mxu0 0.0
        %785 = vmatpush.msra.mxu0 0.0
        %786 = vmatpush.msra.mxu0 0.0
        %787 = vmatpush.msra.mxu0 0.0
        %788 = vmatpush.msra.mxu0 0.0
        %789 = vmatpush.msra.mxu0 0.0
        %790 = vmatpush.msra.mxu0 0.0
        %791 = vmatpush.msra.mxu0 0.0
        %792 = vmatpush.msra.mxu0 0.0
        %793 = vmatpush.msra.mxu0 0.0
        %794 = vmatpush.msra.mxu0 0.0
        %795 = vmatpush.msra.mxu0 0.0
        %796 = vmatpush.msra.mxu0 0.0
        %797 = vmatpush.msra.mxu0 %v357
        %798 = vmatmul.f32.gmra.mxu0 %v409
        %v799 = vpop.f32.mrf.mxu0
        %v800 = vadd.f32 0.0, %v799
        %801 = vmatmul.f32.gmra.mxu0 %v412
        %v802 = vpop.f32.mrf.mxu0
        %v803 = vadd.f32 0.0, %v802
        %804 = vdwg.mxu0
        %805 = vmatpush.msra.mxu0 0.0
        %806 = vmatpush.msra.mxu0 0.0
        %807 = vmatpush.msra.mxu0 0.0
        %808 = vmatpush.msra.mxu0 0.0
        %809 = vmatpush.msra.mxu0 0.0
        %810 = vmatpush.msra.mxu0 0.0
        %811 = vmatpush.msra.mxu0 0.0
        %812 = vmatpush.msra.mxu0 0.0
        %813 = vmatpush.msra.mxu0 0.0
        %814 = vmatpush.msra.mxu0 0.0
        %815 = vmatpush.msra.mxu0 0.0
        %816 = vmatpush.msra.mxu0 0.0
        %817 = vmatpush.msra.mxu0 0.0
        %818 = vmatpush.msra.mxu0 0.0
        %819 = vmatpush.msra.mxu0 0.0
        %820 = vmatpush.msra.mxu0 %v358
        %821 = vmatmul.f32.gmra.mxu0 %v409
        %v822 = vpop.f32.mrf.mxu0
        %v823 = vadd.f32 0.0, %v822
        %824 = vmatmul.f32.gmra.mxu0 %v412
        %v825 = vpop.f32.mrf.mxu0
        %v826 = vadd.f32 0.0, %v825
        %827 = vdwg.mxu0
        %828 = vmatpush.msra.mxu0 0.0
        %829 = vmatpush.msra.mxu0 0.0
        %830 = vmatpush.msra.mxu0 0.0
        %831 = vmatpush.msra.mxu0 0.0
        %832 = vmatpush.msra.mxu0 0.0
        %833 = vmatpush.msra.mxu0 0.0
        %834 = vmatpush.msra.mxu0 0.0
        %835 = vmatpush.msra.mxu0 0.0
        %836 = vmatpush.msra.mxu0 0.0
        %837 = vmatpush.msra.mxu0 0.0
        %838 = vmatpush.msra.mxu0 0.0
        %839 = vmatpush.msra.mxu0 0.0
        %840 = vmatpush.msra.mxu0 0.0
        %841 = vmatpush.msra.mxu0 0.0
        %842 = vmatpush.msra.mxu0 0.0
        %843 = vmatpush.msra.mxu0 %v359
        %844 = vmatmul.f32.gmra.mxu0 %v409
        %v845 = vpop.f32.mrf.mxu0
        %v846 = vadd.f32 0.0, %v845
        %847 = vmatmul.f32.gmra.mxu0 %v412
        %v848 = vpop.f32.mrf.mxu0
        %v849 = vadd.f32 0.0, %v848
        %850 = vdwg.mxu0
        %851 = vmatpush.msra.mxu0 0.0
        %852 = vmatpush.msra.mxu0 0.0
        %853 = vmatpush.msra.mxu0 0.0
        %854 = vmatpush.msra.mxu0 0.0
        %855 = vmatpush.msra.mxu0 0.0
        %856 = vmatpush.msra.mxu0 0.0
        %857 = vmatpush.msra.mxu0 0.0
        %858 = vmatpush.msra.mxu0 0.0
        %859 = vmatpush.msra.mxu0 0.0
        %860 = vmatpush.msra.mxu0 0.0
        %861 = vmatpush.msra.mxu0 0.0
        %862 = vmatpush.msra.mxu0 0.0
        %863 = vmatpush.msra.mxu0 0.0
        %864 = vmatpush.msra.mxu0 0.0
        %865 = vmatpush.msra.mxu0 0.0
        %866 = vmatpush.msra.mxu0 %v360
        %867 = vmatmul.f32.gmra.mxu0 %v409
        %v868 = vpop.f32.mrf.mxu0
        %v869 = vadd.f32 0.0, %v868
        %870 = vmatmul.f32.gmra.mxu0 %v412
        %v871 = vpop.f32.mrf.mxu0
        %v872 = vadd.f32 0.0, %v871
        %873 = vdwg.mxu0
        %874 = vmatpush.msra.mxu0 0.0
        %875 = vmatpush.msra.mxu0 0.0
        %876 = vmatpush.msra.mxu0 0.0
        %877 = vmatpush.msra.mxu0 0.0
        %878 = vmatpush.msra.mxu0 0.0
        %879 = vmatpush.msra.mxu0 0.0
        %880 = vmatpush.msra.mxu0 0.0
        %881 = vmatpush.msra.mxu0 0.0
        %882 = vmatpush.msra.mxu0 0.0
        %883 = vmatpush.msra.mxu0 0.0
        %884 = vmatpush.msra.mxu0 0.0
        %885 = vmatpush.msra.mxu0 0.0
        %886 = vmatpush.msra.mxu0 0.0
        %887 = vmatpush.msra.mxu0 0.0
        %888 = vmatpush.msra.mxu0 0.0
        %889 = vmatpush.msra.mxu0 %v361
        %890 = vmatmul.f32.gmra.mxu0 %v409
        %v891 = vpop.f32.mrf.mxu0
        %v892 = vadd.f32 0.0, %v891
        %893 = vmatmul.f32.gmra.mxu0 %v412
        %v894 = vpop.f32.mrf.mxu0
        %v895 = vadd.f32 0.0, %v894
        %896 = vdwg.mxu0
        %897 = vmatpush.msra.mxu0 0.0
        %898 = vmatpush.msra.mxu0 0.0
        %899 = vmatpush.msra.mxu0 0.0
        %900 = vmatpush.msra.mxu0 0.0
        %901 = vmatpush.msra.mxu0 0.0
        %902 = vmatpush.msra.mxu0 0.0
        %903 = vmatpush.msra.mxu0 0.0
        %904 = vmatpush.msra.mxu0 0.0
        %905 = vmatpush.msra.mxu0 0.0
        %906 = vmatpush.msra.mxu0 0.0
        %907 = vmatpush.msra.mxu0 0.0
        %908 = vmatpush.msra.mxu0 0.0
        %909 = vmatpush.msra.mxu0 0.0
        %910 = vmatpush.msra.mxu0 0.0
        %911 = vmatpush.msra.mxu0 0.0
        %912 = vmatpush.msra.mxu0 %v362
        %913 = vmatmul.f32.gmra.mxu0 %v409
        %v914 = vpop.f32.mrf.mxu0
        %v915 = vadd.f32 0.0, %v914
        %916 = vmatmul.f32.gmra.mxu0 %v412
        %v917 = vpop.f32.mrf.mxu0
        %v918 = vadd.f32 0.0, %v917
        %919 = vdwg.mxu0
        %920 = vmatpush.msra.mxu0 0.0
        %921 = vmatpush.msra.mxu0 0.0
        %922 = vmatpush.msra.mxu0 0.0
        %923 = vmatpush.msra.mxu0 0.0
        %924 = vmatpush.msra.mxu0 0.0
        %925 = vmatpush.msra.mxu0 0.0
        %926 = vmatpush.msra.mxu0 0.0
        %927 = vmatpush.msra.mxu0 0.0
        %928 = vmatpush.msra.mxu0 0.0
        %929 = vmatpush.msra.mxu0 0.0
        %930 = vmatpush.msra.mxu0 0.0
        %931 = vmatpush.msra.mxu0 0.0
        %932 = vmatpush.msra.mxu0 0.0
        %933 = vmatpush.msra.mxu0 0.0
        %934 = vmatpush.msra.mxu0 0.0
        %935 = vmatpush.msra.mxu0 %v363
        %936 = vmatmul.f32.gmra.mxu0 %v409
        %v937 = vpop.f32.mrf.mxu0
        %v938 = vadd.f32 0.0, %v937
        %939 = vmatmul.f32.gmra.mxu0 %v412
        %v940 = vpop.f32.mrf.mxu0
        %v941 = vadd.f32 0.0, %v940
        %942 = vdwg.mxu0
        %943 = vmatpush.msra.mxu0 0.0
        %944 = vmatpush.msra.mxu0 0.0
        %945 = vmatpush.msra.mxu0 0.0
        %946 = vmatpush.msra.mxu0 0.0
        %947 = vmatpush.msra.mxu0 0.0
        %948 = vmatpush.msra.mxu0 0.0
        %949 = vmatpush.msra.mxu0 0.0
        %950 = vmatpush.msra.mxu0 0.0
        %951 = vmatpush.msra.mxu0 0.0
        %952 = vmatpush.msra.mxu0 0.0
        %953 = vmatpush.msra.mxu0 0.0
        %954 = vmatpush.msra.mxu0 0.0
        %955 = vmatpush.msra.mxu0 0.0
        %956 = vmatpush.msra.mxu0 0.0
        %957 = vmatpush.msra.mxu0 0.0
        %958 = vmatpush.msra.mxu0 %v364
        %959 = vmatmul.f32.gmra.mxu0 %v409
        %v960 = vpop.f32.mrf.mxu0
        %v961 = vadd.f32 0.0, %v960
        %962 = vmatmul.f32.gmra.mxu0 %v412
        %v963 = vpop.f32.mrf.mxu0
        %v964 = vadd.f32 0.0, %v963
        %965 = vdwg.mxu0
        %966 = vmatpush.msra.mxu0 0.0
        %967 = vmatpush.msra.mxu0 0.0
        %968 = vmatpush.msra.mxu0 0.0
        %969 = vmatpush.msra.mxu0 0.0
        %970 = vmatpush.msra.mxu0 0.0
        %971 = vmatpush.msra.mxu0 0.0
        %972 = vmatpush.msra.mxu0 0.0
        %973 = vmatpush.msra.mxu0 0.0
        %974 = vmatpush.msra.mxu0 0.0
        %975 = vmatpush.msra.mxu0 0.0
        %976 = vmatpush.msra.mxu0 0.0
        %977 = vmatpush.msra.mxu0 0.0
        %978 = vmatpush.msra.mxu0 0.0
        %979 = vmatpush.msra.mxu0 0.0
        %980 = vmatpush.msra.mxu0 0.0
        %981 = vmatpush.msra.mxu0 %v365
        %982 = vmatmul.f32.gmra.mxu0 %v409
        %v983 = vpop.f32.mrf.mxu0
        %v984 = vadd.f32 0.0, %v983
        %985 = vmatmul.f32.gmra.mxu0 %v412
        %v986 = vpop.f32.mrf.mxu0
        %v987 = vadd.f32 0.0, %v986
        %988 = vdwg.mxu0
        %989 = vmatpush.msra.mxu0 0.0
        %990 = vmatpush.msra.mxu0 0.0
        %991 = vmatpush.msra.mxu0 0.0
        %992 = vmatpush.msra.mxu0 0.0
        %993 = vmatpush.msra.mxu0 0.0
        %994 = vmatpush.msra.mxu0 0.0
        %995 = vmatpush.msra.mxu0 0.0
        %996 = vmatpush.msra.mxu0 0.0
        %997 = vmatpush.msra.mxu0 0.0
        %998 = vmatpush.msra.mxu0 0.0
        %999 = vmatpush.msra.mxu0 0.0
        %1000 = vmatpush.msra.mxu0 0.0
        %1001 = vmatpush.msra.mxu0 0.0
        %1002 = vmatpush.msra.mxu0 0.0
        %1003 = vmatpush.msra.mxu0 0.0
        %1004 = vmatpush.msra.mxu0 %v366
        %1005 = vmatmul.f32.gmra.mxu0 %v409
        %v1006 = vpop.f32.mrf.mxu0
        %v1007 = vadd.f32 0.0, %v1006
        %1008 = vmatmul.f32.gmra.mxu0 %v412
        %v1009 = vpop.f32.mrf.mxu0
        %v1010 = vadd.f32 0.0, %v1009
        %1011 = vdwg.mxu0
        %1012 = vmatpush.msra.mxu0 0.0
        %1013 = vmatpush.msra.mxu0 0.0
        %1014 = vmatpush.msra.mxu0 0.0
        %1015 = vmatpush.msra.mxu0 0.0
        %1016 = vmatpush.msra.mxu0 0.0
        %1017 = vmatpush.msra.mxu0 0.0
        %1018 = vmatpush.msra.mxu0 0.0
        %1019 = vmatpush.msra.mxu0 0.0
        %1020 = vmatpush.msra.mxu0 0.0
        %1021 = vmatpush.msra.mxu0 0.0
        %1022 = vmatpush.msra.mxu0 0.0
        %1023 = vmatpush.msra.mxu0 0.0
        %1024 = vmatpush.msra.mxu0 0.0
        %1025 = vmatpush.msra.mxu0 0.0
        %1026 = vmatpush.msra.mxu0 0.0
        %1027 = vmatpush.msra.mxu0 %v367
        %1028 = vmatmul.f32.gmra.mxu0 %v409
        %v1029 = vpop.f32.mrf.mxu0
        %v1030 = vadd.f32 0.0, %v1029
        %1031 = vmatmul.f32.gmra.mxu0 %v412
        %v1032 = vpop.f32.mrf.mxu0
        %v1033 = vadd.f32 0.0, %v1032
        %1034 = vdwg.mxu0
        %1035 = vmatpush.msra.mxu0 0.0
        %1036 = vmatpush.msra.mxu0 0.0
        %1037 = vmatpush.msra.mxu0 0.0
        %1038 = vmatpush.msra.mxu0 0.0
        %1039 = vmatpush.msra.mxu0 0.0
        %1040 = vmatpush.msra.mxu0 0.0
        %1041 = vmatpush.msra.mxu0 0.0
        %1042 = vmatpush.msra.mxu0 0.0
        %1043 = vmatpush.msra.mxu0 0.0
        %1044 = vmatpush.msra.mxu0 0.0
        %1045 = vmatpush.msra.mxu0 0.0
        %1046 = vmatpush.msra.mxu0 0.0
        %1047 = vmatpush.msra.mxu0 0.0
        %1048 = vmatpush.msra.mxu0 0.0
        %1049 = vmatpush.msra.mxu0 0.0
        %1050 = vmatpush.msra.mxu0 %v368
        %1051 = vmatmul.f32.gmra.mxu0 %v409
        %v1052 = vpop.f32.mrf.mxu0
        %v1053 = vadd.f32 0.0, %v1052
        %1054 = vmatmul.f32.gmra.mxu0 %v412
        %v1055 = vpop.f32.mrf.mxu0
        %v1056 = vadd.f32 0.0, %v1055
        %1057 = vdwg.mxu0
        %1058 = vmatpush.msra.mxu0 0.0
        %1059 = vmatpush.msra.mxu0 0.0
        %1060 = vmatpush.msra.mxu0 0.0
        %1061 = vmatpush.msra.mxu0 0.0
        %1062 = vmatpush.msra.mxu0 0.0
        %1063 = vmatpush.msra.mxu0 0.0
        %1064 = vmatpush.msra.mxu0 0.0
        %1065 = vmatpush.msra.mxu0 0.0
        %1066 = vmatpush.msra.mxu0 0.0
        %1067 = vmatpush.msra.mxu0 0.0
        %1068 = vmatpush.msra.mxu0 0.0
        %1069 = vmatpush.msra.mxu0 0.0
        %1070 = vmatpush.msra.mxu0 0.0
        %1071 = vmatpush.msra.mxu0 0.0
        %1072 = vmatpush.msra.mxu0 0.0
        %1073 = vmatpush.msra.mxu0 %v369
        %1074 = vmatmul.f32.gmra.mxu0 %v409
        %v1075 = vpop.f32.mrf.mxu0
        %v1076 = vadd.f32 0.0, %v1075
        %1077 = vmatmul.f32.gmra.mxu0 %v412
        %v1078 = vpop.f32.mrf.mxu0
        %v1079 = vadd.f32 0.0, %v1078
        %1080 = vdwg.mxu0
        %1081 = vmatpush.msra.mxu0 0.0
        %1082 = vmatpush.msra.mxu0 0.0
        %1083 = vmatpush.msra.mxu0 0.0
        %1084 = vmatpush.msra.mxu0 0.0
        %1085 = vmatpush.msra.mxu0 0.0
        %1086 = vmatpush.msra.mxu0 0.0
        %1087 = vmatpush.msra.mxu0 0.0
        %1088 = vmatpush.msra.mxu0 0.0
        %1089 = vmatpush.msra.mxu0 0.0
        %1090 = vmatpush.msra.mxu0 0.0
        %1091 = vmatpush.msra.mxu0 0.0
        %1092 = vmatpush.msra.mxu0 0.0
        %1093 = vmatpush.msra.mxu0 0.0
        %1094 = vmatpush.msra.mxu0 0.0
        %1095 = vmatpush.msra.mxu0 0.0
        %1096 = vmatpush.msra.mxu0 %v370
        %1097 = vmatmul.f32.gmra.mxu0 %v409
        %v1098 = vpop.f32.mrf.mxu0
        %v1099 = vadd.f32 0.0, %v1098
        %1100 = vmatmul.f32.gmra.mxu0 %v412
        %v1101 = vpop.f32.mrf.mxu0
        %v1102 = vadd.f32 0.0, %v1101
        %1103 = vdwg.mxu0
        %1104 = vmatpush.msra.mxu0 0.0
        %1105 = vmatpush.msra.mxu0 0.0
        %1106 = vmatpush.msra.mxu0 0.0
        %1107 = vmatpush.msra.mxu0 0.0
        %1108 = vmatpush.msra.mxu0 0.0
        %1109 = vmatpush.msra.mxu0 0.0
        %1110 = vmatpush.msra.mxu0 0.0
        %1111 = vmatpush.msra.mxu0 0.0
        %1112 = vmatpush.msra.mxu0 0.0
        %1113 = vmatpush.msra.mxu0 0.0
        %1114 = vmatpush.msra.mxu0 0.0
        %1115 = vmatpush.msra.mxu0 0.0
        %1116 = vmatpush.msra.mxu0 0.0
        %1117 = vmatpush.msra.mxu0 0.0
        %1118 = vmatpush.msra.mxu0 0.0
        %1119 = vmatpush.msra.mxu0 %v371
        %1120 = vmatmul.f32.gmra.mxu0 %v409
        %v1121 = vpop.f32.mrf.mxu0
        %v1122 = vadd.f32 0.0, %v1121
        %1123 = vmatmul.f32.gmra.mxu0 %v412
        %v1124 = vpop.f32.mrf.mxu0
        %v1125 = vadd.f32 0.0, %v1124
        %1126 = vdwg.mxu0
        %1127 = vmatpush.msra.mxu0 0.0
        %1128 = vmatpush.msra.mxu0 0.0
        %1129 = vmatpush.msra.mxu0 0.0
        %1130 = vmatpush.msra.mxu0 0.0
        %1131 = vmatpush.msra.mxu0 0.0
        %1132 = vmatpush.msra.mxu0 0.0
        %1133 = vmatpush.msra.mxu0 0.0
        %1134 = vmatpush.msra.mxu0 0.0
        %1135 = vmatpush.msra.mxu0 0.0
        %1136 = vmatpush.msra.mxu0 0.0
        %1137 = vmatpush.msra.mxu0 0.0
        %1138 = vmatpush.msra.mxu0 0.0
        %1139 = vmatpush.msra.mxu0 0.0
        %1140 = vmatpush.msra.mxu0 0.0
        %1141 = vmatpush.msra.mxu0 0.0
        %1142 = vmatpush.msra.mxu0 %v372
        %1143 = vmatmul.f32.gmra.mxu0 %v409
        %v1144 = vpop.f32.mrf.mxu0
        %v1145 = vadd.f32 0.0, %v1144
        %1146 = vmatmul.f32.gmra.mxu0 %v412
        %v1147 = vpop.f32.mrf.mxu0
        %v1148 = vadd.f32 0.0, %v1147
        %1149 = vdwg.mxu0
        %1150 = vmatpush.msra.mxu0 0.0
        %1151 = vmatpush.msra.mxu0 0.0
        %1152 = vmatpush.msra.mxu0 0.0
        %1153 = vmatpush.msra.mxu0 0.0
        %1154 = vmatpush.msra.mxu0 0.0
        %1155 = vmatpush.msra.mxu0 0.0
        %1156 = vmatpush.msra.mxu0 0.0
        %1157 = vmatpush.msra.mxu0 0.0
        %1158 = vmatpush.msra.mxu0 0.0
        %1159 = vmatpush.msra.mxu0 0.0
        %1160 = vmatpush.msra.mxu0 0.0
        %1161 = vmatpush.msra.mxu0 0.0
        %1162 = vmatpush.msra.mxu0 0.0
        %1163 = vmatpush.msra.mxu0 0.0
        %1164 = vmatpush.msra.mxu0 0.0
        %1165 = vmatpush.msra.mxu0 %v373
        %1166 = vmatmul.f32.gmra.mxu0 %v409
        %v1167 = vpop.f32.mrf.mxu0
        %v1168 = vadd.f32 0.0, %v1167
        %1169 = vmatmul.f32.gmra.mxu0 %v412
        %v1170 = vpop.f32.mrf.mxu0
        %v1171 = vadd.f32 0.0, %v1170
        %1172 = vdwg.mxu0
        %1173 = vmatpush.msra.mxu0 0.0
        %1174 = vmatpush.msra.mxu0 0.0
        %1175 = vmatpush.msra.mxu0 0.0
        %1176 = vmatpush.msra.mxu0 0.0
        %1177 = vmatpush.msra.mxu0 0.0
        %1178 = vmatpush.msra.mxu0 0.0
        %1179 = vmatpush.msra.mxu0 0.0
        %1180 = vmatpush.msra.mxu0 0.0
        %1181 = vmatpush.msra.mxu0 0.0
        %1182 = vmatpush.msra.mxu0 0.0
        %1183 = vmatpush.msra.mxu0 0.0
        %1184 = vmatpush.msra.mxu0 0.0
        %1185 = vmatpush.msra.mxu0 0.0
        %1186 = vmatpush.msra.mxu0 0.0
        %1187 = vmatpush.msra.mxu0 0.0
        %1188 = vmatpush.msra.mxu0 %v374
        %1189 = vmatmul.f32.gmra.mxu0 %v409
        %v1190 = vpop.f32.mrf.mxu0
        %v1191 = vadd.f32 0.0, %v1190
        %1192 = vmatmul.f32.gmra.mxu0 %v412
        %v1193 = vpop.f32.mrf.mxu0
        %v1194 = vadd.f32 0.0, %v1193
        %1195 = vdwg.mxu0
        %1196 = vmatpush.msra.mxu0 0.0
        %1197 = vmatpush.msra.mxu0 0.0
        %1198 = vmatpush.msra.mxu0 0.0
        %1199 = vmatpush.msra.mxu0 0.0
        %1200 = vmatpush.msra.mxu0 0.0
        %1201 = vmatpush.msra.mxu0 0.0
        %1202 = vmatpush.msra.mxu0 0.0
        %1203 = vmatpush.msra.mxu0 0.0
        %1204 = vmatpush.msra.mxu0 0.0
        %1205 = vmatpush.msra.mxu0 0.0
        %1206 = vmatpush.msra.mxu0 0.0
        %1207 = vmatpush.msra.mxu0 0.0
        %1208 = vmatpush.msra.mxu0 0.0
        %1209 = vmatpush.msra.mxu0 0.0
        %1210 = vmatpush.msra.mxu0 0.0
        %1211 = vmatpush.msra.mxu0 %v375
        %1212 = vmatmul.f32.gmra.mxu0 %v409
        %v1213 = vpop.f32.mrf.mxu0
        %v1214 = vadd.f32 0.0, %v1213
        %1215 = vmatmul.f32.gmra.mxu0 %v412
        %v1216 = vpop.f32.mrf.mxu0
        %v1217 = vadd.f32 0.0, %v1216
        %1218 = vdwg.mxu0
        %1219 = vmatpush.msra.mxu0 0.0
        %1220 = vmatpush.msra.mxu0 0.0
        %1221 = vmatpush.msra.mxu0 0.0
        %1222 = vmatpush.msra.mxu0 0.0
        %1223 = vmatpush.msra.mxu0 0.0
        %1224 = vmatpush.msra.mxu0 0.0
        %1225 = vmatpush.msra.mxu0 0.0
        %1226 = vmatpush.msra.mxu0 0.0
        %1227 = vmatpush.msra.mxu0 0.0
        %1228 = vmatpush.msra.mxu0 0.0
        %1229 = vmatpush.msra.mxu0 0.0
        %1230 = vmatpush.msra.mxu0 0.0
        %1231 = vmatpush.msra.mxu0 0.0
        %1232 = vmatpush.msra.mxu0 0.0
        %1233 = vmatpush.msra.mxu0 0.0
        %1234 = vmatpush.msra.mxu0 %v376
        %1235 = vmatmul.f32.gmra.mxu0 %v409
        %v1236 = vpop.f32.mrf.mxu0
        %v1237 = vadd.f32 0.0, %v1236
        %1238 = vmatmul.f32.gmra.mxu0 %v412
        %v1239 = vpop.f32.mrf.mxu0
        %v1240 = vadd.f32 0.0, %v1239
        %1241 = vdwg.mxu0
        %1242 = vmatpush.msra.mxu0 0.0
        %1243 = vmatpush.msra.mxu0 0.0
        %1244 = vmatpush.msra.mxu0 0.0
        %1245 = vmatpush.msra.mxu0 0.0
        %1246 = vmatpush.msra.mxu0 0.0
        %1247 = vmatpush.msra.mxu0 0.0
        %1248 = vmatpush.msra.mxu0 0.0
        %1249 = vmatpush.msra.mxu0 0.0
        %1250 = vmatpush.msra.mxu0 0.0
        %1251 = vmatpush.msra.mxu0 0.0
        %1252 = vmatpush.msra.mxu0 0.0
        %1253 = vmatpush.msra.mxu0 0.0
        %1254 = vmatpush.msra.mxu0 0.0
        %1255 = vmatpush.msra.mxu0 0.0
        %1256 = vmatpush.msra.mxu0 0.0
        %1257 = vmatpush.msra.mxu0 %v377
        %1258 = vmatmul.f32.gmra.mxu0 %v409
        %v1259 = vpop.f32.mrf.mxu0
        %v1260 = vadd.f32 0.0, %v1259
        %1261 = vmatmul.f32.gmra.mxu0 %v412
        %v1262 = vpop.f32.mrf.mxu0
        %v1263 = vadd.f32 0.0, %v1262
        %1264 = vdwg.mxu0
        %1265 = vmatpush.msra.mxu0 0.0
        %1266 = vmatpush.msra.mxu0 0.0
        %1267 = vmatpush.msra.mxu0 0.0
        %1268 = vmatpush.msra.mxu0 0.0
        %1269 = vmatpush.msra.mxu0 0.0
        %1270 = vmatpush.msra.mxu0 0.0
        %1271 = vmatpush.msra.mxu0 0.0
        %1272 = vmatpush.msra.mxu0 0.0
        %1273 = vmatpush.msra.mxu0 0.0
        %1274 = vmatpush.msra.mxu0 0.0
        %1275 = vmatpush.msra.mxu0 0.0
        %1276 = vmatpush.msra.mxu0 0.0
        %1277 = vmatpush.msra.mxu0 0.0
        %1278 = vmatpush.msra.mxu0 0.0
        %1279 = vmatpush.msra.mxu0 0.0
        %1280 = vmatpush.msra.mxu0 %v378
        %1281 = vmatmul.f32.gmra.mxu0 %v409
        %v1282 = vpop.f32.mrf.mxu0
        %v1283 = vadd.f32 0.0, %v1282
        %1284 = vmatmul.f32.gmra.mxu0 %v412
        %v1285 = vpop.f32.mrf.mxu0
        %v1286 = vadd.f32 0.0, %v1285
        %1287 = vdwg.mxu0
        %1288 = vmatpush.msra.mxu0 0.0
        %1289 = vmatpush.msra.mxu0 0.0
        %1290 = vmatpush.msra.mxu0 0.0
        %1291 = vmatpush.msra.mxu0 0.0
        %1292 = vmatpush.msra.mxu0 0.0
        %1293 = vmatpush.msra.mxu0 0.0
        %1294 = vmatpush.msra.mxu0 0.0
        %1295 = vmatpush.msra.mxu0 0.0
        %1296 = vmatpush.msra.mxu0 0.0
        %1297 = vmatpush.msra.mxu0 0.0
        %1298 = vmatpush.msra.mxu0 0.0
        %1299 = vmatpush.msra.mxu0 0.0
        %1300 = vmatpush.msra.mxu0 0.0
        %1301 = vmatpush.msra.mxu0 0.0
        %1302 = vmatpush.msra.mxu0 0.0
        %1303 = vmatpush.msra.mxu0 %v379
        %1304 = vmatmul.f32.gmra.mxu0 %v409
        %v1305 = vpop.f32.mrf.mxu0
        %v1306 = vadd.f32 0.0, %v1305
        %1307 = vmatmul.f32.gmra.mxu0 %v412
        %v1308 = vpop.f32.mrf.mxu0
        %v1309 = vadd.f32 0.0, %v1308
        %1310 = vdwg.mxu0
        %1311 = vmatpush.msra.mxu0 0.0
        %1312 = vmatpush.msra.mxu0 0.0
        %1313 = vmatpush.msra.mxu0 0.0
        %1314 = vmatpush.msra.mxu0 0.0
        %1315 = vmatpush.msra.mxu0 0.0
        %1316 = vmatpush.msra.mxu0 0.0
        %1317 = vmatpush.msra.mxu0 0.0
        %1318 = vmatpush.msra.mxu0 0.0
        %1319 = vmatpush.msra.mxu0 0.0
        %1320 = vmatpush.msra.mxu0 0.0
        %1321 = vmatpush.msra.mxu0 0.0
        %1322 = vmatpush.msra.mxu0 0.0
        %1323 = vmatpush.msra.mxu0 0.0
        %1324 = vmatpush.msra.mxu0 0.0
        %1325 = vmatpush.msra.mxu0 0.0
        %1326 = vmatpush.msra.mxu0 %v380
        %1327 = vmatmul.f32.gmra.mxu0 %v409
        %v1328 = vpop.f32.mrf.mxu0
        %v1329 = vadd.f32 0.0, %v1328
        %1330 = vmatmul.f32.gmra.mxu0 %v412
        %v1331 = vpop.f32.mrf.mxu0
        %v1332 = vadd.f32 0.0, %v1331
        %1333 = vdwg.mxu0
        %1334 = vmatpush.msra.mxu0 0.0
        %1335 = vmatpush.msra.mxu0 0.0
        %1336 = vmatpush.msra.mxu0 0.0
        %1337 = vmatpush.msra.mxu0 0.0
        %1338 = vmatpush.msra.mxu0 0.0
        %1339 = vmatpush.msra.mxu0 0.0
        %1340 = vmatpush.msra.mxu0 0.0
        %1341 = vmatpush.msra.mxu0 0.0
        %1342 = vmatpush.msra.mxu0 0.0
        %1343 = vmatpush.msra.mxu0 0.0
        %1344 = vmatpush.msra.mxu0 0.0
        %1345 = vmatpush.msra.mxu0 0.0
        %1346 = vmatpush.msra.mxu0 0.0
        %1347 = vmatpush.msra.mxu0 0.0
        %1348 = vmatpush.msra.mxu0 0.0
        %1349 = vmatpush.msra.mxu0 %v381
        %1350 = vmatmul.f32.gmra.mxu0 %v409
        %v1351 = vpop.f32.mrf.mxu0
        %v1352 = vadd.f32 0.0, %v1351
        %1353 = vmatmul.f32.gmra.mxu0 %v412
        %v1354 = vpop.f32.mrf.mxu0
        %v1355 = vadd.f32 0.0, %v1354
        %1356 = vdwg.mxu0
        %1357 = vmatpush.msra.mxu0 0.0
        %1358 = vmatpush.msra.mxu0 0.0
        %1359 = vmatpush.msra.mxu0 0.0
        %1360 = vmatpush.msra.mxu0 0.0
        %1361 = vmatpush.msra.mxu0 0.0
        %1362 = vmatpush.msra.mxu0 0.0
        %1363 = vmatpush.msra.mxu0 0.0
        %1364 = vmatpush.msra.mxu0 0.0
        %1365 = vmatpush.msra.mxu0 0.0
        %1366 = vmatpush.msra.mxu0 0.0
        %1367 = vmatpush.msra.mxu0 0.0
        %1368 = vmatpush.msra.mxu0 0.0
        %1369 = vmatpush.msra.mxu0 0.0
        %1370 = vmatpush.msra.mxu0 0.0
        %1371 = vmatpush.msra.mxu0 0.0
        %1372 = vmatpush.msra.mxu0 %v382
        %1373 = vmatmul.f32.gmra.mxu0 %v409
        %v1374 = vpop.f32.mrf.mxu0
        %v1375 = vadd.f32 0.0, %v1374
        %1376 = vmatmul.f32.gmra.mxu0 %v412
        %v1377 = vpop.f32.mrf.mxu0
        %v1378 = vadd.f32 0.0, %v1377
        %1379 = vdwg.mxu0
        %1380 = vmatpush.msra.mxu0 0.0
        %1381 = vmatpush.msra.mxu0 0.0
        %1382 = vmatpush.msra.mxu0 0.0
        %1383 = vmatpush.msra.mxu0 0.0
        %1384 = vmatpush.msra.mxu0 0.0
        %1385 = vmatpush.msra.mxu0 0.0
        %1386 = vmatpush.msra.mxu0 0.0
        %1387 = vmatpush.msra.mxu0 0.0
        %1388 = vmatpush.msra.mxu0 0.0
        %1389 = vmatpush.msra.mxu0 0.0
        %1390 = vmatpush.msra.mxu0 0.0
        %1391 = vmatpush.msra.mxu0 0.0
        %1392 = vmatpush.msra.mxu0 0.0
        %1393 = vmatpush.msra.mxu0 0.0
        %1394 = vmatpush.msra.mxu0 0.0
        %1395 = vmatpush.msra.mxu0 %v383
        %1396 = vmatmul.f32.gmra.mxu0 %v409
        %v1397 = vpop.f32.mrf.mxu0
        %v1398 = vadd.f32 0.0, %v1397
        %1399 = vmatmul.f32.gmra.mxu0 %v412
        %v1400 = vpop.f32.mrf.mxu0
        %v1401 = vadd.f32 0.0, %v1400
        %1402 = vdwg.mxu0
        %1403 = vmatpush.msra.mxu0 0.0
        %1404 = vmatpush.msra.mxu0 0.0
        %1405 = vmatpush.msra.mxu0 0.0
        %1406 = vmatpush.msra.mxu0 0.0
        %1407 = vmatpush.msra.mxu0 0.0
        %1408 = vmatpush.msra.mxu0 0.0
        %1409 = vmatpush.msra.mxu0 0.0
        %1410 = vmatpush.msra.mxu0 0.0
        %1411 = vmatpush.msra.mxu0 0.0
        %1412 = vmatpush.msra.mxu0 0.0
        %1413 = vmatpush.msra.mxu0 0.0
        %1414 = vmatpush.msra.mxu0 0.0
        %1415 = vmatpush.msra.mxu0 0.0
        %1416 = vmatpush.msra.mxu0 0.0
        %1417 = vmatpush.msra.mxu0 0.0
        %1418 = vmatpush.msra.mxu0 %v384
        %1419 = vmatmul.f32.gmra.mxu0 %v409
        %v1420 = vpop.f32.mrf.mxu0
        %v1421 = vadd.f32 0.0, %v1420
        %1422 = vmatmul.f32.gmra.mxu0 %v412
        %v1423 = vpop.f32.mrf.mxu0
        %v1424 = vadd.f32 0.0, %v1423
        %1425 = vdwg.mxu0
        %1426 = vmatpush.msra.mxu0 0.0
        %1427 = vmatpush.msra.mxu0 0.0
        %1428 = vmatpush.msra.mxu0 0.0
        %1429 = vmatpush.msra.mxu0 0.0
        %1430 = vmatpush.msra.mxu0 0.0
        %1431 = vmatpush.msra.mxu0 0.0
        %1432 = vmatpush.msra.mxu0 0.0
        %1433 = vmatpush.msra.mxu0 0.0
        %1434 = vmatpush.msra.mxu0 0.0
        %1435 = vmatpush.msra.mxu0 0.0
        %1436 = vmatpush.msra.mxu0 0.0
        %1437 = vmatpush.msra.mxu0 0.0
        %1438 = vmatpush.msra.mxu0 0.0
        %1439 = vmatpush.msra.mxu0 0.0
        %1440 = vmatpush.msra.mxu0 0.0
        %1441 = vmatpush.msra.mxu0 %v385
        %1442 = vmatmul.f32.gmra.mxu0 %v409
        %v1443 = vpop.f32.mrf.mxu0
        %v1444 = vadd.f32 0.0, %v1443
        %1445 = vmatmul.f32.gmra.mxu0 %v412
        %v1446 = vpop.f32.mrf.mxu0
        %v1447 = vadd.f32 0.0, %v1446
        %1448 = vdwg.mxu0
        %1449 = vmatpush.msra.mxu0 0.0
        %1450 = vmatpush.msra.mxu0 0.0
        %1451 = vmatpush.msra.mxu0 0.0
        %1452 = vmatpush.msra.mxu0 0.0
        %1453 = vmatpush.msra.mxu0 0.0
        %1454 = vmatpush.msra.mxu0 0.0
        %1455 = vmatpush.msra.mxu0 0.0
        %1456 = vmatpush.msra.mxu0 0.0
        %1457 = vmatpush.msra.mxu0 0.0
        %1458 = vmatpush.msra.mxu0 0.0
        %1459 = vmatpush.msra.mxu0 0.0
        %1460 = vmatpush.msra.mxu0 0.0
        %1461 = vmatpush.msra.mxu0 0.0
        %1462 = vmatpush.msra.mxu0 0.0
        %1463 = vmatpush.msra.mxu0 0.0
        %1464 = vmatpush.msra.mxu0 %v386
        %1465 = vmatmul.f32.gmra.mxu0 %v409
        %v1466 = vpop.f32.mrf.mxu0
        %v1467 = vadd.f32 0.0, %v1466
        %1468 = vmatmul.f32.gmra.mxu0 %v412
        %v1469 = vpop.f32.mrf.mxu0
        %v1470 = vadd.f32 0.0, %v1469
        %1471 = vdwg.mxu0
        %1472 = vmatpush.msra.mxu0 0.0
        %1473 = vmatpush.msra.mxu0 0.0
        %1474 = vmatpush.msra.mxu0 0.0
        %1475 = vmatpush.msra.mxu0 0.0
        %1476 = vmatpush.msra.mxu0 0.0
        %1477 = vmatpush.msra.mxu0 0.0
        %1478 = vmatpush.msra.mxu0 0.0
        %1479 = vmatpush.msra.mxu0 0.0
        %1480 = vmatpush.msra.mxu0 0.0
        %1481 = vmatpush.msra.mxu0 0.0
        %1482 = vmatpush.msra.mxu0 0.0
        %1483 = vmatpush.msra.mxu0 0.0
        %1484 = vmatpush.msra.mxu0 0.0
        %1485 = vmatpush.msra.mxu0 0.0
        %1486 = vmatpush.msra.mxu0 0.0
        %1487 = vmatpush.msra.mxu0 %v387
        %1488 = vmatmul.f32.gmra.mxu0 %v409
        %v1489 = vpop.f32.mrf.mxu0
        %v1490 = vadd.f32 0.0, %v1489
        %1491 = vmatmul.f32.gmra.mxu0 %v412
        %v1492 = vpop.f32.mrf.mxu0
        %v1493 = vadd.f32 0.0, %v1492
        %1494 = vdwg.mxu0
        %1495 = vmatpush.msra.mxu0 0.0
        %1496 = vmatpush.msra.mxu0 0.0
        %1497 = vmatpush.msra.mxu0 0.0
        %1498 = vmatpush.msra.mxu0 0.0
        %1499 = vmatpush.msra.mxu0 0.0
        %1500 = vmatpush.msra.mxu0 0.0
        %1501 = vmatpush.msra.mxu0 0.0
        %1502 = vmatpush.msra.mxu0 0.0
        %1503 = vmatpush.msra.mxu0 0.0
        %1504 = vmatpush.msra.mxu0 0.0
        %1505 = vmatpush.msra.mxu0 0.0
        %1506 = vmatpush.msra.mxu0 0.0
        %1507 = vmatpush.msra.mxu0 0.0
        %1508 = vmatpush.msra.mxu0 0.0
        %1509 = vmatpush.msra.mxu0 0.0
        %1510 = vmatpush.msra.mxu0 %v388
        %1511 = vmatmul.f32.gmra.mxu0 %v409
        %v1512 = vpop.f32.mrf.mxu0
        %v1513 = vadd.f32 0.0, %v1512
        %1514 = vmatmul.f32.gmra.mxu0 %v412
        %v1515 = vpop.f32.mrf.mxu0
        %v1516 = vadd.f32 0.0, %v1515
        %1517 = vdwg.mxu0
        %1518 = vmatpush.msra.mxu0 0.0
        %1519 = vmatpush.msra.mxu0 0.0
        %1520 = vmatpush.msra.mxu0 0.0
        %1521 = vmatpush.msra.mxu0 0.0
        %1522 = vmatpush.msra.mxu0 0.0
        %1523 = vmatpush.msra.mxu0 0.0
        %1524 = vmatpush.msra.mxu0 0.0
        %1525 = vmatpush.msra.mxu0 0.0
        %1526 = vmatpush.msra.mxu0 0.0
        %1527 = vmatpush.msra.mxu0 0.0
        %1528 = vmatpush.msra.mxu0 0.0
        %1529 = vmatpush.msra.mxu0 0.0
        %1530 = vmatpush.msra.mxu0 0.0
        %1531 = vmatpush.msra.mxu0 0.0
        %1532 = vmatpush.msra.mxu0 0.0
        %1533 = vmatpush.msra.mxu0 %v389
        %1534 = vmatmul.f32.gmra.mxu0 %v409
        %v1535 = vpop.f32.mrf.mxu0
        %v1536 = vadd.f32 0.0, %v1535
        %1537 = vmatmul.f32.gmra.mxu0 %v412
        %v1538 = vpop.f32.mrf.mxu0
        %v1539 = vadd.f32 0.0, %v1538
        %1540 = vdwg.mxu0
        %1541 = vmatpush.msra.mxu0 0.0
        %1542 = vmatpush.msra.mxu0 0.0
        %1543 = vmatpush.msra.mxu0 0.0
        %1544 = vmatpush.msra.mxu0 0.0
        %1545 = vmatpush.msra.mxu0 0.0
        %1546 = vmatpush.msra.mxu0 0.0
        %1547 = vmatpush.msra.mxu0 0.0
        %1548 = vmatpush.msra.mxu0 0.0
        %1549 = vmatpush.msra.mxu0 0.0
        %1550 = vmatpush.msra.mxu0 0.0
        %1551 = vmatpush.msra.mxu0 0.0
        %1552 = vmatpush.msra.mxu0 0.0
        %1553 = vmatpush.msra.mxu0 0.0
        %1554 = vmatpush.msra.mxu0 0.0
        %1555 = vmatpush.msra.mxu0 0.0
        %1556 = vmatpush.msra.mxu0 %v390
        %1557 = vmatmul.f32.gmra.mxu0 %v409
        %v1558 = vpop.f32.mrf.mxu0
        %v1559 = vadd.f32 0.0, %v1558
        %1560 = vmatmul.f32.gmra.mxu0 %v412
        %v1561 = vpop.f32.mrf.mxu0
        %v1562 = vadd.f32 0.0, %v1561
        %1563 = vdwg.mxu0
        %1564 = vmatpush.msra.mxu0 0.0
        %1565 = vmatpush.msra.mxu0 0.0
        %1566 = vmatpush.msra.mxu0 0.0
        %1567 = vmatpush.msra.mxu0 0.0
        %1568 = vmatpush.msra.mxu0 0.0
        %1569 = vmatpush.msra.mxu0 0.0
        %1570 = vmatpush.msra.mxu0 0.0
        %1571 = vmatpush.msra.mxu0 0.0
        %1572 = vmatpush.msra.mxu0 0.0
        %1573 = vmatpush.msra.mxu0 0.0
        %1574 = vmatpush.msra.mxu0 0.0
        %1575 = vmatpush.msra.mxu0 0.0
        %1576 = vmatpush.msra.mxu0 0.0
        %1577 = vmatpush.msra.mxu0 0.0
        %1578 = vmatpush.msra.mxu0 0.0
        %1579 = vmatpush.msra.mxu0 %v391
        %1580 = vmatmul.f32.gmra.mxu0 %v409
        %v1581 = vpop.f32.mrf.mxu0
        %v1582 = vadd.f32 0.0, %v1581
        %1583 = vmatmul.f32.gmra.mxu0 %v412
        %v1584 = vpop.f32.mrf.mxu0
        %v1585 = vadd.f32 0.0, %v1584
        %1586 = vdwg.mxu0
        %1587 = vmatpush.msra.mxu0 0.0
        %1588 = vmatpush.msra.mxu0 0.0
        %1589 = vmatpush.msra.mxu0 0.0
        %1590 = vmatpush.msra.mxu0 0.0
        %1591 = vmatpush.msra.mxu0 0.0
        %1592 = vmatpush.msra.mxu0 0.0
        %1593 = vmatpush.msra.mxu0 0.0
        %1594 = vmatpush.msra.mxu0 0.0
        %1595 = vmatpush.msra.mxu0 0.0
        %1596 = vmatpush.msra.mxu0 0.0
        %1597 = vmatpush.msra.mxu0 0.0
        %1598 = vmatpush.msra.mxu0 0.0
        %1599 = vmatpush.msra.mxu0 0.0
        %1600 = vmatpush.msra.mxu0 0.0
        %1601 = vmatpush.msra.mxu0 0.0
        %1602 = vmatpush.msra.mxu0 %v392
        %1603 = vmatmul.f32.gmra.mxu0 %v409
        %v1604 = vpop.f32.mrf.mxu0
        %v1605 = vadd.f32 0.0, %v1604
        %1606 = vmatmul.f32.gmra.mxu0 %v412
        %v1607 = vpop.f32.mrf.mxu0
        %v1608 = vadd.f32 0.0, %v1607
        %1609 = vdwg.mxu0
        %1610 = vmatpush.msra.mxu0 0.0
        %1611 = vmatpush.msra.mxu0 0.0
        %1612 = vmatpush.msra.mxu0 0.0
        %1613 = vmatpush.msra.mxu0 0.0
        %1614 = vmatpush.msra.mxu0 0.0
        %1615 = vmatpush.msra.mxu0 0.0
        %1616 = vmatpush.msra.mxu0 0.0
        %1617 = vmatpush.msra.mxu0 0.0
        %1618 = vmatpush.msra.mxu0 0.0
        %1619 = vmatpush.msra.mxu0 0.0
        %1620 = vmatpush.msra.mxu0 0.0
        %1621 = vmatpush.msra.mxu0 0.0
        %1622 = vmatpush.msra.mxu0 0.0
        %1623 = vmatpush.msra.mxu0 0.0
        %1624 = vmatpush.msra.mxu0 0.0
        %1625 = vmatpush.msra.mxu0 %v393
        %1626 = vmatmul.f32.gmra.mxu0 %v409
        %v1627 = vpop.f32.mrf.mxu0
        %v1628 = vadd.f32 0.0, %v1627
        %1629 = vmatmul.f32.gmra.mxu0 %v412
        %v1630 = vpop.f32.mrf.mxu0
        %v1631 = vadd.f32 0.0, %v1630
        %1632 = vdwg.mxu0
        %1633 = vmatpush.msra.mxu0 0.0
        %1634 = vmatpush.msra.mxu0 0.0
        %1635 = vmatpush.msra.mxu0 0.0
        %1636 = vmatpush.msra.mxu0 0.0
        %1637 = vmatpush.msra.mxu0 0.0
        %1638 = vmatpush.msra.mxu0 0.0
        %1639 = vmatpush.msra.mxu0 0.0
        %1640 = vmatpush.msra.mxu0 0.0
        %1641 = vmatpush.msra.mxu0 0.0
        %1642 = vmatpush.msra.mxu0 0.0
        %1643 = vmatpush.msra.mxu0 0.0
        %1644 = vmatpush.msra.mxu0 0.0
        %1645 = vmatpush.msra.mxu0 0.0
        %1646 = vmatpush.msra.mxu0 0.0
        %1647 = vmatpush.msra.mxu0 0.0
        %1648 = vmatpush.msra.mxu0 %v394
        %1649 = vmatmul.f32.gmra.mxu0 %v409
        %v1650 = vpop.f32.mrf.mxu0
        %v1651 = vadd.f32 0.0, %v1650
        %1652 = vmatmul.f32.gmra.mxu0 %v412
        %v1653 = vpop.f32.mrf.mxu0
        %v1654 = vadd.f32 0.0, %v1653
        %1655 = vdwg.mxu0
        %1656 = vmatpush.msra.mxu0 0.0
        %1657 = vmatpush.msra.mxu0 0.0
        %1658 = vmatpush.msra.mxu0 0.0
        %1659 = vmatpush.msra.mxu0 0.0
        %1660 = vmatpush.msra.mxu0 0.0
        %1661 = vmatpush.msra.mxu0 0.0
        %1662 = vmatpush.msra.mxu0 0.0
        %1663 = vmatpush.msra.mxu0 0.0
        %1664 = vmatpush.msra.mxu0 0.0
        %1665 = vmatpush.msra.mxu0 0.0
        %1666 = vmatpush.msra.mxu0 0.0
        %1667 = vmatpush.msra.mxu0 0.0
        %1668 = vmatpush.msra.mxu0 0.0
        %1669 = vmatpush.msra.mxu0 0.0
        %1670 = vmatpush.msra.mxu0 0.0
        %1671 = vmatpush.msra.mxu0 %v395
        %1672 = vmatmul.f32.gmra.mxu0 %v409
        %v1673 = vpop.f32.mrf.mxu0
        %v1674 = vadd.f32 0.0, %v1673
        %1675 = vmatmul.f32.gmra.mxu0 %v412
        %v1676 = vpop.f32.mrf.mxu0
        %v1677 = vadd.f32 0.0, %v1676
        %1678 = vdwg.mxu0
        %1679 = vmatpush.msra.mxu0 0.0
        %1680 = vmatpush.msra.mxu0 0.0
        %1681 = vmatpush.msra.mxu0 0.0
        %1682 = vmatpush.msra.mxu0 0.0
        %1683 = vmatpush.msra.mxu0 0.0
        %1684 = vmatpush.msra.mxu0 0.0
        %1685 = vmatpush.msra.mxu0 0.0
        %1686 = vmatpush.msra.mxu0 0.0
        %1687 = vmatpush.msra.mxu0 0.0
        %1688 = vmatpush.msra.mxu0 0.0
        %1689 = vmatpush.msra.mxu0 0.0
        %1690 = vmatpush.msra.mxu0 0.0
        %1691 = vmatpush.msra.mxu0 0.0
        %1692 = vmatpush.msra.mxu0 0.0
        %1693 = vmatpush.msra.mxu0 0.0
        %1694 = vmatpush.msra.mxu0 %v396
        %1695 = vmatmul.f32.gmra.mxu0 %v409
        %v1696 = vpop.f32.mrf.mxu0
        %v1697 = vadd.f32 0.0, %v1696
        %1698 = vmatmul.f32.gmra.mxu0 %v412
        %v1699 = vpop.f32.mrf.mxu0
        %v1700 = vadd.f32 0.0, %v1699
        %1701 = vdwg.mxu0
        %1702 = vmatpush.msra.mxu0 0.0
        %1703 = vmatpush.msra.mxu0 0.0
        %1704 = vmatpush.msra.mxu0 0.0
        %1705 = vmatpush.msra.mxu0 0.0
        %1706 = vmatpush.msra.mxu0 0.0
        %1707 = vmatpush.msra.mxu0 0.0
        %1708 = vmatpush.msra.mxu0 0.0
        %1709 = vmatpush.msra.mxu0 0.0
        %1710 = vmatpush.msra.mxu0 0.0
        %1711 = vmatpush.msra.mxu0 0.0
        %1712 = vmatpush.msra.mxu0 0.0
        %1713 = vmatpush.msra.mxu0 0.0
        %1714 = vmatpush.msra.mxu0 0.0
        %1715 = vmatpush.msra.mxu0 0.0
        %1716 = vmatpush.msra.mxu0 0.0
        %1717 = vmatpush.msra.mxu0 %v397
        %1718 = vmatmul.f32.gmra.mxu0 %v409
        %v1719 = vpop.f32.mrf.mxu0
        %v1720 = vadd.f32 0.0, %v1719
        %1721 = vmatmul.f32.gmra.mxu0 %v412
        %v1722 = vpop.f32.mrf.mxu0
        %v1723 = vadd.f32 0.0, %v1722
        %1724 = vdwg.mxu0
        %1725 = vmatpush.msra.mxu0 0.0
        %1726 = vmatpush.msra.mxu0 0.0
        %1727 = vmatpush.msra.mxu0 0.0
        %1728 = vmatpush.msra.mxu0 0.0
        %1729 = vmatpush.msra.mxu0 0.0
        %1730 = vmatpush.msra.mxu0 0.0
        %1731 = vmatpush.msra.mxu0 0.0
        %1732 = vmatpush.msra.mxu0 0.0
        %1733 = vmatpush.msra.mxu0 0.0
        %1734 = vmatpush.msra.mxu0 0.0
        %1735 = vmatpush.msra.mxu0 0.0
        %1736 = vmatpush.msra.mxu0 0.0
        %1737 = vmatpush.msra.mxu0 0.0
        %1738 = vmatpush.msra.mxu0 0.0
        %1739 = vmatpush.msra.mxu0 0.0
        %1740 = vmatpush.msra.mxu0 %v398
        %1741 = vmatmul.f32.gmra.mxu0 %v409
        %v1742 = vpop.f32.mrf.mxu0
        %v1743 = vadd.f32 0.0, %v1742
        %1744 = vmatmul.f32.gmra.mxu0 %v412
        %v1745 = vpop.f32.mrf.mxu0
        %v1746 = vadd.f32 0.0, %v1745
        %1747 = vdwg.mxu0
        %1748 = vmatpush.msra.mxu0 0.0
        %1749 = vmatpush.msra.mxu0 0.0
        %1750 = vmatpush.msra.mxu0 0.0
        %1751 = vmatpush.msra.mxu0 0.0
        %1752 = vmatpush.msra.mxu0 0.0
        %1753 = vmatpush.msra.mxu0 0.0
        %1754 = vmatpush.msra.mxu0 0.0
        %1755 = vmatpush.msra.mxu0 0.0
        %1756 = vmatpush.msra.mxu0 0.0
        %1757 = vmatpush.msra.mxu0 0.0
        %1758 = vmatpush.msra.mxu0 0.0
        %1759 = vmatpush.msra.mxu0 0.0
        %1760 = vmatpush.msra.mxu0 0.0
        %1761 = vmatpush.msra.mxu0 0.0
        %1762 = vmatpush.msra.mxu0 0.0
        %1763 = vmatpush.msra.mxu0 %v399
        %1764 = vmatmul.f32.gmra.mxu0 %v409
        %v1765 = vpop.f32.mrf.mxu0
        %v1766 = vadd.f32 0.0, %v1765
        %1767 = vmatmul.f32.gmra.mxu0 %v412
        %v1768 = vpop.f32.mrf.mxu0
        %v1769 = vadd.f32 0.0, %v1768
        %1770 = vdwg.mxu0
        %1771 = vmatpush.msra.mxu0 0.0
        %1772 = vmatpush.msra.mxu0 0.0
        %1773 = vmatpush.msra.mxu0 0.0
        %1774 = vmatpush.msra.mxu0 0.0
        %1775 = vmatpush.msra.mxu0 0.0
        %1776 = vmatpush.msra.mxu0 0.0
        %1777 = vmatpush.msra.mxu0 0.0
        %1778 = vmatpush.msra.mxu0 0.0
        %1779 = vmatpush.msra.mxu0 0.0
        %1780 = vmatpush.msra.mxu0 0.0
        %1781 = vmatpush.msra.mxu0 0.0
        %1782 = vmatpush.msra.mxu0 0.0
        %1783 = vmatpush.msra.mxu0 0.0
        %1784 = vmatpush.msra.mxu0 0.0
        %1785 = vmatpush.msra.mxu0 0.0
        %1786 = vmatpush.msra.mxu0 %v400
        %1787 = vmatmul.f32.gmra.mxu0 %v409
        %v1788 = vpop.f32.mrf.mxu0
        %v1789 = vadd.f32 0.0, %v1788
        %1790 = vmatmul.f32.gmra.mxu0 %v412
        %v1791 = vpop.f32.mrf.mxu0
        %v1792 = vadd.f32 0.0, %v1791
        %1793 = vdwg.mxu0
        %1794 = vmatpush.msra.mxu0 0.0
        %1795 = vmatpush.msra.mxu0 0.0
        %1796 = vmatpush.msra.mxu0 0.0
        %1797 = vmatpush.msra.mxu0 0.0
        %1798 = vmatpush.msra.mxu0 0.0
        %1799 = vmatpush.msra.mxu0 0.0
        %1800 = vmatpush.msra.mxu0 0.0
        %1801 = vmatpush.msra.mxu0 0.0
        %1802 = vmatpush.msra.mxu0 0.0
        %1803 = vmatpush.msra.mxu0 0.0
        %1804 = vmatpush.msra.mxu0 0.0
        %1805 = vmatpush.msra.mxu0 0.0
        %1806 = vmatpush.msra.mxu0 0.0
        %1807 = vmatpush.msra.mxu0 0.0
        %1808 = vmatpush.msra.mxu0 0.0
        %1809 = vmatpush.msra.mxu0 %v401
        %1810 = vmatmul.f32.gmra.mxu0 %v409
        %v1811 = vpop.f32.mrf.mxu0
        %v1812 = vadd.f32 0.0, %v1811
        %1813 = vmatmul.f32.gmra.mxu0 %v412
        %v1814 = vpop.f32.mrf.mxu0
        %v1815 = vadd.f32 0.0, %v1814
        %1816 = vdwg.mxu0
        %1817 = vmatpush.msra.mxu0 0.0
        %1818 = vmatpush.msra.mxu0 0.0
        %1819 = vmatpush.msra.mxu0 0.0
        %1820 = vmatpush.msra.mxu0 0.0
        %1821 = vmatpush.msra.mxu0 0.0
        %1822 = vmatpush.msra.mxu0 0.0
        %1823 = vmatpush.msra.mxu0 0.0
        %1824 = vmatpush.msra.mxu0 0.0
        %1825 = vmatpush.msra.mxu0 0.0
        %1826 = vmatpush.msra.mxu0 0.0
        %1827 = vmatpush.msra.mxu0 0.0
        %1828 = vmatpush.msra.mxu0 0.0
        %1829 = vmatpush.msra.mxu0 0.0
        %1830 = vmatpush.msra.mxu0 0.0
        %1831 = vmatpush.msra.mxu0 0.0
        %1832 = vmatpush.msra.mxu0 %v402
        %1833 = vmatmul.f32.gmra.mxu0 %v409
        %v1834 = vpop.f32.mrf.mxu0
        %v1835 = vadd.f32 0.0, %v1834
        %1836 = vmatmul.f32.gmra.mxu0 %v412
        %v1837 = vpop.f32.mrf.mxu0
        %v1838 = vadd.f32 0.0, %v1837
        %1839 = vdwg.mxu0
        %1840 = vmatpush.msra.mxu0 0.0
        %1841 = vmatpush.msra.mxu0 0.0
        %1842 = vmatpush.msra.mxu0 0.0
        %1843 = vmatpush.msra.mxu0 0.0
        %1844 = vmatpush.msra.mxu0 0.0
        %1845 = vmatpush.msra.mxu0 0.0
        %1846 = vmatpush.msra.mxu0 0.0
        %1847 = vmatpush.msra.mxu0 0.0
        %1848 = vmatpush.msra.mxu0 0.0
        %1849 = vmatpush.msra.mxu0 0.0
        %1850 = vmatpush.msra.mxu0 0.0
        %1851 = vmatpush.msra.mxu0 0.0
        %1852 = vmatpush.msra.mxu0 0.0
        %1853 = vmatpush.msra.mxu0 0.0
        %1854 = vmatpush.msra.mxu0 0.0
        %1855 = vmatpush.msra.mxu0 %v403
        %1856 = vmatmul.f32.gmra.mxu0 %v409
        %v1857 = vpop.f32.mrf.mxu0
        %v1858 = vadd.f32 0.0, %v1857
        %1859 = vmatmul.f32.gmra.mxu0 %v412
        %v1860 = vpop.f32.mrf.mxu0
        %v1861 = vadd.f32 0.0, %v1860
        %1862 = vdwg.mxu0
        %1863 = vmatpush.msra.mxu0 0.0
        %1864 = vmatpush.msra.mxu0 0.0
        %1865 = vmatpush.msra.mxu0 0.0
        %1866 = vmatpush.msra.mxu0 0.0
        %1867 = vmatpush.msra.mxu0 0.0
        %1868 = vmatpush.msra.mxu0 0.0
        %1869 = vmatpush.msra.mxu0 0.0
        %1870 = vmatpush.msra.mxu0 0.0
        %1871 = vmatpush.msra.mxu0 0.0
        %1872 = vmatpush.msra.mxu0 0.0
        %1873 = vmatpush.msra.mxu0 0.0
        %1874 = vmatpush.msra.mxu0 0.0
        %1875 = vmatpush.msra.mxu0 0.0
        %1876 = vmatpush.msra.mxu0 0.0
        %1877 = vmatpush.msra.mxu0 0.0
        %1878 = vmatpush.msra.mxu0 %v404
        %1879 = vmatmul.f32.gmra.mxu0 %v409
        %v1880 = vpop.f32.mrf.mxu0
        %v1881 = vadd.f32 0.0, %v1880
        %1882 = vmatmul.f32.gmra.mxu0 %v412
        %v1883 = vpop.f32.mrf.mxu0
        %v1884 = vadd.f32 0.0, %v1883
        %1885 = vdwg.mxu0
        %v1886 = vld [vmem:[%s2] sm:$0xff]
        %v1951 = vrot.slane %v455, 7
        %vm1952 = vcmask 1041409
        %v1953 = vsel %vm1952, %v1951, %v432
        %v1954 = vrot.slane %v478, 6
        %vm1955 = vcmask 1042434
        %v1956 = vsel %vm1955, %v1954, %v1953
        %v1957 = vrot.slane %v501, 5
        %vm1958 = vcmask 1043459
        %v1959 = vsel %vm1958, %v1957, %v1956
        %v1960 = vrot.slane %v524, 4
        %vm1961 = vcmask 1044484
        %v1962 = vsel %vm1961, %v1960, %v1959
        %v1963 = vrot.slane %v547, 3
        %vm1964 = vcmask 1045509
        %v1965 = vsel %vm1964, %v1963, %v1962
        %v1966 = vrot.slane %v570, 2
        %vm1967 = vcmask 1046534
        %v1968 = vsel %vm1967, %v1966, %v1965
        %v1969 = vrot.slane %v593, 1
        %vm1970 = vcmask 1047559
        %v1971 = vsel %vm1970, %v1969, %v1968
        %v1972 = vrot.slane %v639, 7
        %v1973 = vsel %vm1952, %v1972, %v616
        %v1974 = vrot.slane %v662, 6
        %v1975 = vsel %vm1955, %v1974, %v1973
        %v1976 = vrot.slane %v685, 5
        %v1977 = vsel %vm1958, %v1976, %v1975
        %v1978 = vrot.slane %v708, 4
        %v1979 = vsel %vm1961, %v1978, %v1977
        %v1980 = vrot.slane %v731, 3
        %v1981 = vsel %vm1964, %v1980, %v1979
        %v1982 = vrot.slane %v754, 2
        %v1983 = vsel %vm1967, %v1982, %v1981
        %v1984 = vrot.slane %v777, 1
        %v1985 = vsel %vm1970, %v1984, %v1983
        %v1986 = vrot.slane %v823, 7
        %v1987 = vsel %vm1952, %v1986, %v800
        %v1988 = vrot.slane %v846, 6
        %v1989 = vsel %vm1955, %v1988, %v1987
        %v1990 = vrot.slane %v869, 5
        %v1991 = vsel %vm1958, %v1990, %v1989
        %v1992 = vrot.slane %v892, 4
        %v1993 = vsel %vm1961, %v1992, %v1991
        %v1994 = vrot.slane %v915, 3
        %v1995 = vsel %vm1964, %v1994, %v1993
        %v1996 = vrot.slane %v938, 2
        %v1997 = vsel %vm1967, %v1996, %v1995
        %v1998 = vrot.slane %v961, 1
        %v1999 = vsel %vm1970, %v1998, %v1997
        %v2000 = vrot.slane %v1007, 7
        %v2001 = vsel %vm1952, %v2000, %v984
        %v2002 = vrot.slane %v1030, 6
        %v2003 = vsel %vm1955, %v2002, %v2001
        %v2004 = vrot.slane %v1053, 5
        %v2005 = vsel %vm1958, %v2004, %v2003
        %v2006 = vrot.slane %v1076, 4
        %v2007 = vsel %vm1961, %v2006, %v2005
        %v2008 = vrot.slane %v1099, 3
        %v2009 = vsel %vm1964, %v2008, %v2007
        %v2010 = vrot.slane %v1122, 2
        %v2011 = vsel %vm1967, %v2010, %v2009
        %v2012 = vrot.slane %v1145, 1
        %v2013 = vsel %vm1970, %v2012, %v2011
        %v2014 = vrot.slane %v1191, 7
        %v2015 = vsel %vm1952, %v2014, %v1168
        %v2016 = vrot.slane %v1214, 6
        %v2017 = vsel %vm1955, %v2016, %v2015
        %v2018 = vrot.slane %v1237, 5
        %v2019 = vsel %vm1958, %v2018, %v2017
        %v2020 = vrot.slane %v1260, 4
        %v2021 = vsel %vm1961, %v2020, %v2019
        %v2022 = vrot.slane %v1283, 3
        %v2023 = vsel %vm1964, %v2022, %v2021
        %v2024 = vrot.slane %v1306, 2
        %v2025 = vsel %vm1967, %v2024, %v2023
        %v2026 = vrot.slane %v1329, 1
        %v2027 = vsel %vm1970, %v2026, %v2025
        %v2028 = vrot.slane %v1375, 7
        %v2029 = vsel %vm1952, %v2028, %v1352
        %v2030 = vrot.slane %v1398, 6
        %v2031 = vsel %vm1955, %v2030, %v2029
        %v2032 = vrot.slane %v1421, 5
        %v2033 = vsel %vm1958, %v2032, %v2031
        %v2034 = vrot.slane %v1444, 4
        %v2035 = vsel %vm1961, %v2034, %v2033
        %v2036 = vrot.slane %v1467, 3
        %v2037 = vsel %vm1964, %v2036, %v2035
        %v2038 = vrot.slane %v1490, 2
        %v2039 = vsel %vm1967, %v2038, %v2037
        %v2040 = vrot.slane %v1513, 1
        %v2041 = vsel %vm1970, %v2040, %v2039
        %v2042 = vrot.slane %v1559, 7
        %v2043 = vsel %vm1952, %v2042, %v1536
        %v2044 = vrot.slane %v1582, 6
        %v2045 = vsel %vm1955, %v2044, %v2043
        %v2046 = vrot.slane %v1605, 5
        %v2047 = vsel %vm1958, %v2046, %v2045
        %v2048 = vrot.slane %v1628, 4
        %v2049 = vsel %vm1961, %v2048, %v2047
        %v2050 = vrot.slane %v1651, 3
        %v2051 = vsel %vm1964, %v2050, %v2049
        %v2052 = vrot.slane %v1674, 2
        %v2053 = vsel %vm1967, %v2052, %v2051
        %v2054 = vrot.slane %v1697, 1
        %v2055 = vsel %vm1970, %v2054, %v2053
        %v2056 = vrot.slane %v1743, 7
        %v2057 = vsel %vm1952, %v2056, %v1720
        %v2058 = vrot.slane %v1766, 6
        %v2059 = vsel %vm1955, %v2058, %v2057
        %v2060 = vrot.slane %v1789, 5
        %v2061 = vsel %vm1958, %v2060, %v2059
        %v2062 = vrot.slane %v1812, 4
        %v2063 = vsel %vm1961, %v2062, %v2061
        %v2064 = vrot.slane %v1835, 3
        %v2065 = vsel %vm1964, %v2064, %v2063
        %v2066 = vrot.slane %v1858, 2
        %v2067 = vsel %vm1967, %v2066, %v2065
        %v2068 = vrot.slane %v1881, 1
        %v2069 = vsel %vm1970, %v2068, %v2067
        %v2070 = vsel %vm407, %v1971, 0
        %v2072 = vsel %vm407, %v1985, 0
        %v2074 = vsel %vm407, %v1999, 0
        %v2076 = vsel %vm407, %v2013, 0
        %v2078 = vsel %vm407, %v2027, 0
        %v2080 = vsel %vm407, %v2041, 0
        %v2082 = vsel %vm407, %v2055, 0
        %v2084 = vsel %vm407, %v2069, 0
        %2086 = vmatpush.msra.mxu0 0.0
        %2087 = vmatpush.msra.mxu0 0.0
        %2088 = vmatpush.msra.mxu0 0.0
        %2089 = vmatpush.msra.mxu0 0.0
        %2090 = vmatpush.msra.mxu0 0.0
        %2091 = vmatpush.msra.mxu0 0.0
        %2092 = vmatpush.msra.mxu0 0.0
        %2093 = vmatpush.msra.mxu0 0.0
        %2094 = vmatpush.msra.mxu0 0.0
        %2095 = vmatpush.msra.mxu0 0.0
        %2096 = vmatpush.msra.mxu0 0.0
        %2097 = vmatpush.msra.mxu0 0.0
        %2098 = vmatpush.msra.mxu0 0.0
        %2099 = vmatpush.msra.mxu0 0.0
        %2100 = vmatpush.msra.mxu0 0.0
        %2101 = vmatpush.msra.mxu0 %v1886
        %2102 = vmatmul.f32.gmra.mxu0 %v2070
        %v2103 = vpop.f32.mrf.mxu0
        %v2104 = vadd.f32 0.0, %v2103
        %2105 = vmatmul.f32.gmra.mxu0 %v2072
        %v2106 = vpop.f32.mrf.mxu0
        %v2107 = vadd.f32 0.0, %v2106
        %2108 = vmatmul.f32.gmra.mxu0 %v2074
        %v2109 = vpop.f32.mrf.mxu0
        %v2110 = vadd.f32 0.0, %v2109
        %2111 = vmatmul.f32.gmra.mxu0 %v2076
        %v2112 = vpop.f32.mrf.mxu0
        %v2113 = vadd.f32 0.0, %v2112
        %2114 = vmatmul.f32.gmra.mxu0 %v2078
        %v2115 = vpop.f32.mrf.mxu0
        %v2116 = vadd.f32 0.0, %v2115
        %2117 = vmatmul.f32.gmra.mxu0 %v2080
        %v2118 = vpop.f32.mrf.mxu0
        %v2119 = vadd.f32 0.0, %v2118
        %2120 = vmatmul.f32.gmra.mxu0 %v2082
        %v2121 = vpop.f32.mrf.mxu0
        %v2122 = vadd.f32 0.0, %v2121
        %2123 = vmatmul.f32.gmra.mxu0 %v2084
        %v2124 = vpop.f32.mrf.mxu0
        %v2125 = vadd.f32 0.0, %v2124
        %2126 = vdwg.mxu0
        %2135 = vrot.lane.b32.xlu0 %v2104, 1
        %v2136 = vpop.permute.xlu0 %2135
        %2137 = vrot.lane.b32.xlu0 %v2107, 1
        %v2138 = vpop.permute.xlu0 %2137
        %2139 = vrot.lane.b32.xlu0 %v2110, 1
        %v2140 = vpop.permute.xlu0 %2139
        %2141 = vrot.lane.b32.xlu0 %v2113, 1
        %v2142 = vpop.permute.xlu0 %2141
        %2143 = vrot.lane.b32.xlu0 %v2116, 1
        %v2144 = vpop.permute.xlu0 %2143
        %2145 = vrot.lane.b32.xlu0 %v2119, 1
        %v2146 = vpop.permute.xlu0 %2145
        %2147 = vrot.lane.b32.xlu0 %v2122, 1
        %v2148 = vpop.permute.xlu0 %2147
        %2149 = vrot.lane.b32.xlu0 %v2125, 1
        %v2150 = vpop.permute.xlu0 %2149
        %vm2159 = vcmask 7168
        %v2160 = vsel %vm2159, 0.0, %v2136
        %v2161 = vsel %vm2159, 0.0, %v2138
        %v2162 = vsel %vm2159, 0.0, %v2140
        %v2163 = vsel %vm2159, 0.0, %v2142
        %v2164 = vsel %vm2159, 0.0, %v2144
        %v2165 = vsel %vm2159, 0.0, %v2146
        %v2166 = vsel %vm2159, 0.0, %v2148
        %v2167 = vsel %vm2159, 0.0, %v2150
        %vm2168 = vcmask 138240
        %v2169 = vsel %vm2168, %v2160, 0.0
        %v2170 = vsel %vm2168, %v2161, 0.0
        %v2171 = vsel %vm2168, %v2162, 0.0
        %v2172 = vsel %vm2168, %v2163, 0.0
        %v2173 = vsel %vm2168, %v2164, 0.0
        %v2174 = vsel %vm2168, %v2165, 0.0
        %v2175 = vsel %vm2168, %v2166, 0.0
        %v2176 = vsel %vm2168, %v2167, 0.0
        %v2177 = vpack.c.bf16 %v2169, %v2169
        %v2178 = vpack.c.bf16 %v2170, %v2170
        %v2179 = vpack.c.bf16 %v2171, %v2171
        %v2180 = vpack.c.bf16 %v2172, %v2172
        %v2181 = vpack.c.bf16 %v2173, %v2173
        %v2182 = vpack.c.bf16 %v2174, %v2174
        %v2183 = vpack.c.bf16 %v2175, %v2175
        %v2184 = vpack.c.bf16 %v2176, %v2176
        %2193 = vrot.lane.b32.xlu0 %v2177, 1
        %v2194 = vpop.permute.xlu0 %2193
        %2195 = vrot.lane.b32.xlu0 %v2178, 1
        %v2196 = vpop.permute.xlu0 %2195
        %2197 = vrot.lane.b32.xlu0 %v2179, 1
        %v2198 = vpop.permute.xlu0 %2197
        %2199 = vrot.lane.b32.xlu0 %v2180, 1
        %v2200 = vpop.permute.xlu0 %2199
        %2201 = vrot.lane.b32.xlu0 %v2181, 1
        %v2202 = vpop.permute.xlu0 %2201
        %2203 = vrot.lane.b32.xlu0 %v2182, 1
        %v2204 = vpop.permute.xlu0 %2203
        %2205 = vrot.lane.b32.xlu0 %v2183, 1
        %v2206 = vpop.permute.xlu0 %2205
        %2207 = vrot.lane.b32.xlu0 %v2184, 1
        %v2208 = vpop.permute.xlu0 %2207
        %vm2217 = vcmask 150536
        %2218 = vst.msk [vmem:[#allocation2] sm:$0xf] %vm2217, %v2194
        %2219 = vst.msk [vmem:[#allocation2 + $0x8] sm:$0xf] %vm2217, %v2196
        %2220 = vst.msk [vmem:[#allocation2 + $0x10] sm:$0xf] %vm2217, %v2198
        %2221 = vst.msk [vmem:[#allocation2 + $0x18] sm:$0xf] %vm2217, %v2200
        %2222 = vst.msk [vmem:[#allocation2 + $0x20] sm:$0xf] %vm2217, %v2202
        %2223 = vst.msk [vmem:[#allocation2 + $0x28] sm:$0xf] %vm2217, %v2204
        %2224 = vst.msk [vmem:[#allocation2 + $0x30] sm:$0xf] %vm2217, %v2206
        %2225 = vst.msk [vmem:[#allocation2 + $0x38] sm:$0xf] %vm2217, %v2208
        %v2226 = vld [vmem:[%s2] sm:$0xff]
        %v2227 = vrot.slane %v432, 1
        %v2228 = vsel %vm1952, %v455, %v2227
        %v2229 = vrot.slane %v478, 7
        %v2230 = vsel %vm1955, %v2229, %v2228
        %v2231 = vrot.slane %v501, 6
        %v2232 = vsel %vm1958, %v2231, %v2230
        %v2233 = vrot.slane %v524, 5
        %v2234 = vsel %vm1961, %v2233, %v2232
        %v2235 = vrot.slane %v547, 4
        %v2236 = vsel %vm1964, %v2235, %v2234
        %v2237 = vrot.slane %v570, 3
        %v2238 = vsel %vm1967, %v2237, %v2236
        %v2239 = vrot.slane %v593, 2
        %v2240 = vsel %vm1970, %v2239, %v2238
        %v2241 = vrot.slane %v616, 1
        %v2242 = vsel %vm1952, %v639, %v2241
        %v2243 = vrot.slane %v662, 7
        %v2244 = vsel %vm1955, %v2243, %v2242
        %v2245 = vrot.slane %v685, 6
        %v2246 = vsel %vm1958, %v2245, %v2244
        %v2247 = vrot.slane %v708, 5
        %v2248 = vsel %vm1961, %v2247, %v2246
        %v2249 = vrot.slane %v731, 4
        %v2250 = vsel %vm1964, %v2249, %v2248
        %v2251 = vrot.slane %v754, 3
        %v2252 = vsel %vm1967, %v2251, %v2250
        %v2253 = vrot.slane %v777, 2
        %v2254 = vsel %vm1970, %v2253, %v2252
        %v2255 = vrot.slane %v800, 1
        %v2256 = vsel %vm1952, %v823, %v2255
        %v2257 = vrot.slane %v846, 7
        %v2258 = vsel %vm1955, %v2257, %v2256
        %v2259 = vrot.slane %v869, 6
        %v2260 = vsel %vm1958, %v2259, %v2258
        %v2261 = vrot.slane %v892, 5
        %v2262 = vsel %vm1961, %v2261, %v2260
        %v2263 = vrot.slane %v915, 4
        %v2264 = vsel %vm1964, %v2263, %v2262
        %v2265 = vrot.slane %v938, 3
        %v2266 = vsel %vm1967, %v2265, %v2264
        %v2267 = vrot.slane %v961, 2
        %v2268 = vsel %vm1970, %v2267, %v2266
        %v2269 = vrot.slane %v984, 1
        %v2270 = vsel %vm1952, %v1007, %v2269
        %v2271 = vrot.slane %v1030, 7
        %v2272 = vsel %vm1955, %v2271, %v2270
        %v2273 = vrot.slane %v1053, 6
        %v2274 = vsel %vm1958, %v2273, %v2272
        %v2275 = vrot.slane %v1076, 5
        %v2276 = vsel %vm1961, %v2275, %v2274
        %v2277 = vrot.slane %v1099, 4
        %v2278 = vsel %vm1964, %v2277, %v2276
        %v2279 = vrot.slane %v1122, 3
        %v2280 = vsel %vm1967, %v2279, %v2278
        %v2281 = vrot.slane %v1145, 2
        %v2282 = vsel %vm1970, %v2281, %v2280
        %v2283 = vrot.slane %v1168, 1
        %v2284 = vsel %vm1952, %v1191, %v2283
        %v2285 = vrot.slane %v1214, 7
        %v2286 = vsel %vm1955, %v2285, %v2284
        %v2287 = vrot.slane %v1237, 6
        %v2288 = vsel %vm1958, %v2287, %v2286
        %v2289 = vrot.slane %v1260, 5
        %v2290 = vsel %vm1961, %v2289, %v2288
        %v2291 = vrot.slane %v1283, 4
        %v2292 = vsel %vm1964, %v2291, %v2290
        %v2293 = vrot.slane %v1306, 3
        %v2294 = vsel %vm1967, %v2293, %v2292
        %v2295 = vrot.slane %v1329, 2
        %v2296 = vsel %vm1970, %v2295, %v2294
        %v2297 = vrot.slane %v1352, 1
        %v2298 = vsel %vm1952, %v1375, %v2297
        %v2299 = vrot.slane %v1398, 7
        %v2300 = vsel %vm1955, %v2299, %v2298
        %v2301 = vrot.slane %v1421, 6
        %v2302 = vsel %vm1958, %v2301, %v2300
        %v2303 = vrot.slane %v1444, 5
        %v2304 = vsel %vm1961, %v2303, %v2302
        %v2305 = vrot.slane %v1467, 4
        %v2306 = vsel %vm1964, %v2305, %v2304
        %v2307 = vrot.slane %v1490, 3
        %v2308 = vsel %vm1967, %v2307, %v2306
        %v2309 = vrot.slane %v1513, 2
        %v2310 = vsel %vm1970, %v2309, %v2308
        %v2311 = vrot.slane %v1536, 1
        %v2312 = vsel %vm1952, %v1559, %v2311
        %v2313 = vrot.slane %v1582, 7
        %v2314 = vsel %vm1955, %v2313, %v2312
        %v2315 = vrot.slane %v1605, 6
        %v2316 = vsel %vm1958, %v2315, %v2314
        %v2317 = vrot.slane %v1628, 5
        %v2318 = vsel %vm1961, %v2317, %v2316
        %v2319 = vrot.slane %v1651, 4
        %v2320 = vsel %vm1964, %v2319, %v2318
        %v2321 = vrot.slane %v1674, 3
        %v2322 = vsel %vm1967, %v2321, %v2320
        %v2323 = vrot.slane %v1697, 2
        %v2324 = vsel %vm1970, %v2323, %v2322
        %v2325 = vrot.slane %v1720, 1
        %v2326 = vsel %vm1952, %v1743, %v2325
        %v2327 = vrot.slane %v1766, 7
        %v2328 = vsel %vm1955, %v2327, %v2326
        %v2329 = vrot.slane %v1789, 6
        %v2330 = vsel %vm1958, %v2329, %v2328
        %v2331 = vrot.slane %v1812, 5
        %v2332 = vsel %vm1961, %v2331, %v2330
        %v2333 = vrot.slane %v1835, 4
        %v2334 = vsel %vm1964, %v2333, %v2332
        %v2335 = vrot.slane %v1858, 3
        %v2336 = vsel %vm1967, %v2335, %v2334
        %v2337 = vrot.slane %v1881, 2
        %v2338 = vsel %vm1970, %v2337, %v2336
        %v2339 = vsel %vm407, %v2240, 0
        %v2341 = vsel %vm407, %v2254, 0
        %v2343 = vsel %vm407, %v2268, 0
        %v2345 = vsel %vm407, %v2282, 0
        %v2347 = vsel %vm407, %v2296, 0
        %v2349 = vsel %vm407, %v2310, 0
        %v2351 = vsel %vm407, %v2324, 0
        %v2353 = vsel %vm407, %v2338, 0
        %2355 = vmatpush.msra.mxu0 0.0
        %2356 = vmatpush.msra.mxu0 0.0
        %2357 = vmatpush.msra.mxu0 0.0
        %2358 = vmatpush.msra.mxu0 0.0
        %2359 = vmatpush.msra.mxu0 0.0
        %2360 = vmatpush.msra.mxu0 0.0
        %2361 = vmatpush.msra.mxu0 0.0
        %2362 = vmatpush.msra.mxu0 0.0
        %2363 = vmatpush.msra.mxu0 0.0
        %2364 = vmatpush.msra.mxu0 0.0
        %2365 = vmatpush.msra.mxu0 0.0
        %2366 = vmatpush.msra.mxu0 0.0
        %2367 = vmatpush.msra.mxu0 0.0
        %2368 = vmatpush.msra.mxu0 0.0
        %2369 = vmatpush.msra.mxu0 0.0
        %2370 = vmatpush.msra.mxu0 %v2226
        %2371 = vmatmul.f32.gmra.mxu0 %v2339
        %v2372 = vpop.f32.mrf.mxu0
        %v2373 = vadd.f32 0.0, %v2372
        %2374 = vmatmul.f32.gmra.mxu0 %v2341
        %v2375 = vpop.f32.mrf.mxu0
        %v2376 = vadd.f32 0.0, %v2375
        %2377 = vmatmul.f32.gmra.mxu0 %v2343
        %v2378 = vpop.f32.mrf.mxu0
        %v2379 = vadd.f32 0.0, %v2378
        %2380 = vmatmul.f32.gmra.mxu0 %v2345
        %v2381 = vpop.f32.mrf.mxu0
        %v2382 = vadd.f32 0.0, %v2381
        %2383 = vmatmul.f32.gmra.mxu0 %v2347
        %v2384 = vpop.f32.mrf.mxu0
        %v2385 = vadd.f32 0.0, %v2384
        %2386 = vmatmul.f32.gmra.mxu0 %v2349
        %v2387 = vpop.f32.mrf.mxu0
        %v2388 = vadd.f32 0.0, %v2387
        %2389 = vmatmul.f32.gmra.mxu0 %v2351
        %v2390 = vpop.f32.mrf.mxu0
        %v2391 = vadd.f32 0.0, %v2390
        %2392 = vmatmul.f32.gmra.mxu0 %v2353
        %v2393 = vpop.f32.mrf.mxu0
        %v2394 = vadd.f32 0.0, %v2393
        %2395 = vdwg.mxu0
        %2404 = vrot.lane.b32.xlu0 %v2373, 1
        %v2405 = vpop.permute.xlu0 %2404
        %2406 = vrot.lane.b32.xlu0 %v2376, 1
        %v2407 = vpop.permute.xlu0 %2406
        %2408 = vrot.lane.b32.xlu0 %v2379, 1
        %v2409 = vpop.permute.xlu0 %2408
        %2410 = vrot.lane.b32.xlu0 %v2382, 1
        %v2411 = vpop.permute.xlu0 %2410
        %2412 = vrot.lane.b32.xlu0 %v2385, 1
        %v2413 = vpop.permute.xlu0 %2412
        %2414 = vrot.lane.b32.xlu0 %v2388, 1
        %v2415 = vpop.permute.xlu0 %2414
        %2416 = vrot.lane.b32.xlu0 %v2391, 1
        %v2417 = vpop.permute.xlu0 %2416
        %2418 = vrot.lane.b32.xlu0 %v2394, 1
        %v2419 = vpop.permute.xlu0 %2418
        %v2428 = vsel %vm2159, 0.0, %v2405
        %v2429 = vsel %vm2159, 0.0, %v2407
        %v2430 = vsel %vm2159, 0.0, %v2409
        %v2431 = vsel %vm2159, 0.0, %v2411
        %v2432 = vsel %vm2159, 0.0, %v2413
        %v2433 = vsel %vm2159, 0.0, %v2415
        %v2434 = vsel %vm2159, 0.0, %v2417
        %v2435 = vsel %vm2159, 0.0, %v2419
        %v2436 = vsel %vm2168, %v2428, 0.0
        %v2437 = vsel %vm2168, %v2429, 0.0
        %v2438 = vsel %vm2168, %v2430, 0.0
        %v2439 = vsel %vm2168, %v2431, 0.0
        %v2440 = vsel %vm2168, %v2432, 0.0
        %v2441 = vsel %vm2168, %v2433, 0.0
        %v2442 = vsel %vm2168, %v2434, 0.0
        %v2443 = vsel %vm2168, %v2435, 0.0
        %v2444 = vpack.c.bf16 %v2436, %v2436
        %v2445 = vpack.c.bf16 %v2437, %v2437
        %v2446 = vpack.c.bf16 %v2438, %v2438
        %v2447 = vpack.c.bf16 %v2439, %v2439
        %v2448 = vpack.c.bf16 %v2440, %v2440
        %v2449 = vpack.c.bf16 %v2441, %v2441
        %v2450 = vpack.c.bf16 %v2442, %v2442
        %v2451 = vpack.c.bf16 %v2443, %v2443
        %2460 = vrot.lane.b32.xlu0 %v2444, 19
        %v2461 = vpop.permute.xlu0 %2460
        %2462 = vrot.lane.b32.xlu0 %v2445, 19
        %v2463 = vpop.permute.xlu0 %2462
        %2464 = vrot.lane.b32.xlu0 %v2446, 19
        %v2465 = vpop.permute.xlu0 %2464
        %2466 = vrot.lane.b32.xlu0 %v2447, 19
        %v2467 = vpop.permute.xlu0 %2466
        %2468 = vrot.lane.b32.xlu0 %v2448, 19
        %v2469 = vpop.permute.xlu0 %2468
        %2470 = vrot.lane.b32.xlu0 %v2449, 19
        %v2471 = vpop.permute.xlu0 %2470
        %2472 = vrot.lane.b32.xlu0 %v2450, 19
        %v2473 = vpop.permute.xlu0 %2472
        %2474 = vrot.lane.b32.xlu0 %v2451, 19
        %v2475 = vpop.permute.xlu0 %2474
        %vm2484 = vcmask 298136
        %2485 = vst.msk [vmem:[#allocation2] sm:$0xf] %vm2484, %v2461
        %2486 = vst.msk [vmem:[#allocation2 + $0x8] sm:$0xf] %vm2484, %v2463
        %2487 = vst.msk [vmem:[#allocation2 + $0x10] sm:$0xf] %vm2484, %v2465
        %2488 = vst.msk [vmem:[#allocation2 + $0x18] sm:$0xf] %vm2484, %v2467
        %2489 = vst.msk [vmem:[#allocation2 + $0x20] sm:$0xf] %vm2484, %v2469
        %2490 = vst.msk [vmem:[#allocation2 + $0x28] sm:$0xf] %vm2484, %v2471
        %2491 = vst.msk [vmem:[#allocation2 + $0x30] sm:$0xf] %vm2484, %v2473
        %2492 = vst.msk [vmem:[#allocation2 + $0x38] sm:$0xf] %vm2484, %v2475
        %v2493 = vld [vmem:[%s2] sm:$0xff]
        %v2494 = vrot.slane %v432, 2
        %v2495 = vrot.slane %v455, 1
        %v2496 = vsel %vm1952, %v2495, %v2494
        %v2497 = vsel %vm1955, %v478, %v2496
        %v2498 = vrot.slane %v501, 7
        %v2499 = vsel %vm1958, %v2498, %v2497
        %v2500 = vrot.slane %v524, 6
        %v2501 = vsel %vm1961, %v2500, %v2499
        %v2502 = vrot.slane %v547, 5
        %v2503 = vsel %vm1964, %v2502, %v2501
        %v2504 = vrot.slane %v570, 4
        %v2505 = vsel %vm1967, %v2504, %v2503
        %v2506 = vrot.slane %v593, 3
        %v2507 = vsel %vm1970, %v2506, %v2505
        %v2508 = vrot.slane %v616, 2
        %v2509 = vrot.slane %v639, 1
        %v2510 = vsel %vm1952, %v2509, %v2508
        %v2511 = vsel %vm1955, %v662, %v2510
        %v2512 = vrot.slane %v685, 7
        %v2513 = vsel %vm1958, %v2512, %v2511
        %v2514 = vrot.slane %v708, 6
        %v2515 = vsel %vm1961, %v2514, %v2513
        %v2516 = vrot.slane %v731, 5
        %v2517 = vsel %vm1964, %v2516, %v2515
        %v2518 = vrot.slane %v754, 4
        %v2519 = vsel %vm1967, %v2518, %v2517
        %v2520 = vrot.slane %v777, 3
        %v2521 = vsel %vm1970, %v2520, %v2519
        %v2522 = vrot.slane %v800, 2
        %v2523 = vrot.slane %v823, 1
        %v2524 = vsel %vm1952, %v2523, %v2522
        %v2525 = vsel %vm1955, %v846, %v2524
        %v2526 = vrot.slane %v869, 7
        %v2527 = vsel %vm1958, %v2526, %v2525
        %v2528 = vrot.slane %v892, 6
        %v2529 = vsel %vm1961, %v2528, %v2527
        %v2530 = vrot.slane %v915, 5
        %v2531 = vsel %vm1964, %v2530, %v2529
        %v2532 = vrot.slane %v938, 4
        %v2533 = vsel %vm1967, %v2532, %v2531
        %v2534 = vrot.slane %v961, 3
        %v2535 = vsel %vm1970, %v2534, %v2533
        %v2536 = vrot.slane %v984, 2
        %v2537 = vrot.slane %v1007, 1
        %v2538 = vsel %vm1952, %v2537, %v2536
        %v2539 = vsel %vm1955, %v1030, %v2538
        %v2540 = vrot.slane %v1053, 7
        %v2541 = vsel %vm1958, %v2540, %v2539
        %v2542 = vrot.slane %v1076, 6
        %v2543 = vsel %vm1961, %v2542, %v2541
        %v2544 = vrot.slane %v1099, 5
        %v2545 = vsel %vm1964, %v2544, %v2543
        %v2546 = vrot.slane %v1122, 4
        %v2547 = vsel %vm1967, %v2546, %v2545
        %v2548 = vrot.slane %v1145, 3
        %v2549 = vsel %vm1970, %v2548, %v2547
        %v2550 = vrot.slane %v1168, 2
        %v2551 = vrot.slane %v1191, 1
        %v2552 = vsel %vm1952, %v2551, %v2550
        %v2553 = vsel %vm1955, %v1214, %v2552
        %v2554 = vrot.slane %v1237, 7
        %v2555 = vsel %vm1958, %v2554, %v2553
        %v2556 = vrot.slane %v1260, 6
        %v2557 = vsel %vm1961, %v2556, %v2555
        %v2558 = vrot.slane %v1283, 5
        %v2559 = vsel %vm1964, %v2558, %v2557
        %v2560 = vrot.slane %v1306, 4
        %v2561 = vsel %vm1967, %v2560, %v2559
        %v2562 = vrot.slane %v1329, 3
        %v2563 = vsel %vm1970, %v2562, %v2561
        %v2564 = vrot.slane %v1352, 2
        %v2565 = vrot.slane %v1375, 1
        %v2566 = vsel %vm1952, %v2565, %v2564
        %v2567 = vsel %vm1955, %v1398, %v2566
        %v2568 = vrot.slane %v1421, 7
        %v2569 = vsel %vm1958, %v2568, %v2567
        %v2570 = vrot.slane %v1444, 6
        %v2571 = vsel %vm1961, %v2570, %v2569
        %v2572 = vrot.slane %v1467, 5
        %v2573 = vsel %vm1964, %v2572, %v2571
        %v2574 = vrot.slane %v1490, 4
        %v2575 = vsel %vm1967, %v2574, %v2573
        %v2576 = vrot.slane %v1513, 3
        %v2577 = vsel %vm1970, %v2576, %v2575
        %v2578 = vrot.slane %v1536, 2
        %v2579 = vrot.slane %v1559, 1
        %v2580 = vsel %vm1952, %v2579, %v2578
        %v2581 = vsel %vm1955, %v1582, %v2580
        %v2582 = vrot.slane %v1605, 7
        %v2583 = vsel %vm1958, %v2582, %v2581
        %v2584 = vrot.slane %v1628, 6
        %v2585 = vsel %vm1961, %v2584, %v2583
        %v2586 = vrot.slane %v1651, 5
        %v2587 = vsel %vm1964, %v2586, %v2585
        %v2588 = vrot.slane %v1674, 4
        %v2589 = vsel %vm1967, %v2588, %v2587
        %v2590 = vrot.slane %v1697, 3
        %v2591 = vsel %vm1970, %v2590, %v2589
        %v2592 = vrot.slane %v1720, 2
        %v2593 = vrot.slane %v1743, 1
        %v2594 = vsel %vm1952, %v2593, %v2592
        %v2595 = vsel %vm1955, %v1766, %v2594
        %v2596 = vrot.slane %v1789, 7
        %v2597 = vsel %vm1958, %v2596, %v2595
        %v2598 = vrot.slane %v1812, 6
        %v2599 = vsel %vm1961, %v2598, %v2597
        %v2600 = vrot.slane %v1835, 5
        %v2601 = vsel %vm1964, %v2600, %v2599
        %v2602 = vrot.slane %v1858, 4
        %v2603 = vsel %vm1967, %v2602, %v2601
        %v2604 = vrot.slane %v1881, 3
        %v2605 = vsel %vm1970, %v2604, %v2603
        %v2606 = vsel %vm407, %v2507, 0
        %v2608 = vsel %vm407, %v2521, 0
        %v2610 = vsel %vm407, %v2535, 0
        %v2612 = vsel %vm407, %v2549, 0
        %v2614 = vsel %vm407, %v2563, 0
        %v2616 = vsel %vm407, %v2577, 0
        %v2618 = vsel %vm407, %v2591, 0
        %v2620 = vsel %vm407, %v2605, 0
        %2622 = vmatpush.msra.mxu0 0.0
        %2623 = vmatpush.msra.mxu0 0.0
        %2624 = vmatpush.msra.mxu0 0.0
        %2625 = vmatpush.msra.mxu0 0.0
        %2626 = vmatpush.msra.mxu0 0.0
        %2627 = vmatpush.msra.mxu0 0.0
        %2628 = vmatpush.msra.mxu0 0.0
        %2629 = vmatpush.msra.mxu0 0.0
        %2630 = vmatpush.msra.mxu0 0.0
        %2631 = vmatpush.msra.mxu0 0.0
        %2632 = vmatpush.msra.mxu0 0.0
        %2633 = vmatpush.msra.mxu0 0.0
        %2634 = vmatpush.msra.mxu0 0.0
        %2635 = vmatpush.msra.mxu0 0.0
        %2636 = vmatpush.msra.mxu0 0.0
        %2637 = vmatpush.msra.mxu0 %v2493
        %2638 = vmatmul.f32.gmra.mxu0 %v2606
        %v2639 = vpop.f32.mrf.mxu0
        %v2640 = vadd.f32 0.0, %v2639
        %2641 = vmatmul.f32.gmra.mxu0 %v2608
        %v2642 = vpop.f32.mrf.mxu0
        %v2643 = vadd.f32 0.0, %v2642
        %2644 = vmatmul.f32.gmra.mxu0 %v2610
        %v2645 = vpop.f32.mrf.mxu0
        %v2646 = vadd.f32 0.0, %v2645
        %2647 = vmatmul.f32.gmra.mxu0 %v2612
        %v2648 = vpop.f32.mrf.mxu0
        %v2649 = vadd.f32 0.0, %v2648
        %2650 = vmatmul.f32.gmra.mxu0 %v2614
        %v2651 = vpop.f32.mrf.mxu0
        %v2652 = vadd.f32 0.0, %v2651
        %2653 = vmatmul.f32.gmra.mxu0 %v2616
        %v2654 = vpop.f32.mrf.mxu0
        %v2655 = vadd.f32 0.0, %v2654
        %2656 = vmatmul.f32.gmra.mxu0 %v2618
        %v2657 = vpop.f32.mrf.mxu0
        %v2658 = vadd.f32 0.0, %v2657
        %2659 = vmatmul.f32.gmra.mxu0 %v2620
        %v2660 = vpop.f32.mrf.mxu0
        %v2661 = vadd.f32 0.0, %v2660
        %2662 = vdwg.mxu0
        %2671 = vrot.lane.b32.xlu0 %v2640, 1
        %v2672 = vpop.permute.xlu0 %2671
        %2673 = vrot.lane.b32.xlu0 %v2643, 1
        %v2674 = vpop.permute.xlu0 %2673
        %2675 = vrot.lane.b32.xlu0 %v2646, 1
        %v2676 = vpop.permute.xlu0 %2675
        %2677 = vrot.lane.b32.xlu0 %v2649, 1
        %v2678 = vpop.permute.xlu0 %2677
        %2679 = vrot.lane.b32.xlu0 %v2652, 1
        %v2680 = vpop.permute.xlu0 %2679
        %2681 = vrot.lane.b32.xlu0 %v2655, 1
        %v2682 = vpop.permute.xlu0 %2681
        %2683 = vrot.lane.b32.xlu0 %v2658, 1
        %v2684 = vpop.permute.xlu0 %2683
        %2685 = vrot.lane.b32.xlu0 %v2661, 1
        %v2686 = vpop.permute.xlu0 %2685
        %v2695 = vsel %vm2159, 0.0, %v2672
        %v2696 = vsel %vm2159, 0.0, %v2674
        %v2697 = vsel %vm2159, 0.0, %v2676
        %v2698 = vsel %vm2159, 0.0, %v2678
        %v2699 = vsel %vm2159, 0.0, %v2680
        %v2700 = vsel %vm2159, 0.0, %v2682
        %v2701 = vsel %vm2159, 0.0, %v2684
        %v2702 = vsel %vm2159, 0.0, %v2686
        %v2703 = vsel %vm2168, %v2695, 0.0
        %v2704 = vsel %vm2168, %v2696, 0.0
        %v2705 = vsel %vm2168, %v2697, 0.0
        %v2706 = vsel %vm2168, %v2698, 0.0
        %v2707 = vsel %vm2168, %v2699, 0.0
        %v2708 = vsel %vm2168, %v2700, 0.0
        %v2709 = vsel %vm2168, %v2701, 0.0
        %v2710 = vsel %vm2168, %v2702, 0.0
        %v2711 = vpack.c.bf16 %v2703, %v2703
        %v2712 = vpack.c.bf16 %v2704, %v2704
        %v2713 = vpack.c.bf16 %v2705, %v2705
        %v2714 = vpack.c.bf16 %v2706, %v2706
        %v2715 = vpack.c.bf16 %v2707, %v2707
        %v2716 = vpack.c.bf16 %v2708, %v2708
        %v2717 = vpack.c.bf16 %v2709, %v2709
        %v2718 = vpack.c.bf16 %v2710, %v2710
        %2727 = vrot.lane.b32.xlu0 %v2711, 37
        %v2728 = vpop.permute.xlu0 %2727
        %2729 = vrot.lane.b32.xlu0 %v2712, 37
        %v2730 = vpop.permute.xlu0 %2729
        %2731 = vrot.lane.b32.xlu0 %v2713, 37
        %v2732 = vpop.permute.xlu0 %2731
        %2733 = vrot.lane.b32.xlu0 %v2714, 37
        %v2734 = vpop.permute.xlu0 %2733
        %2735 = vrot.lane.b32.xlu0 %v2715, 37
        %v2736 = vpop.permute.xlu0 %2735
        %2737 = vrot.lane.b32.xlu0 %v2716, 37
        %v2738 = vpop.permute.xlu0 %2737
        %2739 = vrot.lane.b32.xlu0 %v2717, 37
        %v2740 = vpop.permute.xlu0 %2739
        %2741 = vrot.lane.b32.xlu0 %v2718, 37
        %v2742 = vpop.permute.xlu0 %2741
        %vm2751 = vcmask 445736
        %2752 = vst.msk [vmem:[#allocation2] sm:$0xf] %vm2751, %v2728
        %2753 = vst.msk [vmem:[#allocation2 + $0x8] sm:$0xf] %vm2751, %v2730
        %2754 = vst.msk [vmem:[#allocation2 + $0x10] sm:$0xf] %vm2751, %v2732
        %2755 = vst.msk [vmem:[#allocation2 + $0x18] sm:$0xf] %vm2751, %v2734
        %2756 = vst.msk [vmem:[#allocation2 + $0x20] sm:$0xf] %vm2751, %v2736
        %2757 = vst.msk [vmem:[#allocation2 + $0x28] sm:$0xf] %vm2751, %v2738
        %2758 = vst.msk [vmem:[#allocation2 + $0x30] sm:$0xf] %vm2751, %v2740
        %2759 = vst.msk [vmem:[#allocation2 + $0x38] sm:$0xf] %vm2751, %v2742
        %v2760 = vld [vmem:[%s2] sm:$0xff]
        %v2761 = vrot.slane %v432, 3
        %v2762 = vrot.slane %v455, 2
        %v2763 = vsel %vm1952, %v2762, %v2761
        %v2764 = vrot.slane %v478, 1
        %v2765 = vsel %vm1955, %v2764, %v2763
        %v2766 = vsel %vm1958, %v501, %v2765
        %v2767 = vrot.slane %v524, 7
        %v2768 = vsel %vm1961, %v2767, %v2766
        %v2769 = vrot.slane %v547, 6
        %v2770 = vsel %vm1964, %v2769, %v2768
        %v2771 = vrot.slane %v570, 5
        %v2772 = vsel %vm1967, %v2771, %v2770
        %v2773 = vrot.slane %v593, 4
        %v2774 = vsel %vm1970, %v2773, %v2772
        %v2775 = vrot.slane %v616, 3
        %v2776 = vrot.slane %v639, 2
        %v2777 = vsel %vm1952, %v2776, %v2775
        %v2778 = vrot.slane %v662, 1
        %v2779 = vsel %vm1955, %v2778, %v2777
        %v2780 = vsel %vm1958, %v685, %v2779
        %v2781 = vrot.slane %v708, 7
        %v2782 = vsel %vm1961, %v2781, %v2780
        %v2783 = vrot.slane %v731, 6
        %v2784 = vsel %vm1964, %v2783, %v2782
        %v2785 = vrot.slane %v754, 5
        %v2786 = vsel %vm1967, %v2785, %v2784
        %v2787 = vrot.slane %v777, 4
        %v2788 = vsel %vm1970, %v2787, %v2786
        %v2789 = vrot.slane %v800, 3
        %v2790 = vrot.slane %v823, 2
        %v2791 = vsel %vm1952, %v2790, %v2789
        %v2792 = vrot.slane %v846, 1
        %v2793 = vsel %vm1955, %v2792, %v2791
        %v2794 = vsel %vm1958, %v869, %v2793
        %v2795 = vrot.slane %v892, 7
        %v2796 = vsel %vm1961, %v2795, %v2794
        %v2797 = vrot.slane %v915, 6
        %v2798 = vsel %vm1964, %v2797, %v2796
        %v2799 = vrot.slane %v938, 5
        %v2800 = vsel %vm1967, %v2799, %v2798
        %v2801 = vrot.slane %v961, 4
        %v2802 = vsel %vm1970, %v2801, %v2800
        %v2803 = vrot.slane %v984, 3
        %v2804 = vrot.slane %v1007, 2
        %v2805 = vsel %vm1952, %v2804, %v2803
        %v2806 = vrot.slane %v1030, 1
        %v2807 = vsel %vm1955, %v2806, %v2805
        %v2808 = vsel %vm1958, %v1053, %v2807
        %v2809 = vrot.slane %v1076, 7
        %v2810 = vsel %vm1961, %v2809, %v2808
        %v2811 = vrot.slane %v1099, 6
        %v2812 = vsel %vm1964, %v2811, %v2810
        %v2813 = vrot.slane %v1122, 5
        %v2814 = vsel %vm1967, %v2813, %v2812
        %v2815 = vrot.slane %v1145, 4
        %v2816 = vsel %vm1970, %v2815, %v2814
        %v2817 = vrot.slane %v1168, 3
        %v2818 = vrot.slane %v1191, 2
        %v2819 = vsel %vm1952, %v2818, %v2817
        %v2820 = vrot.slane %v1214, 1
        %v2821 = vsel %vm1955, %v2820, %v2819
        %v2822 = vsel %vm1958, %v1237, %v2821
        %v2823 = vrot.slane %v1260, 7
        %v2824 = vsel %vm1961, %v2823, %v2822
        %v2825 = vrot.slane %v1283, 6
        %v2826 = vsel %vm1964, %v2825, %v2824
        %v2827 = vrot.slane %v1306, 5
        %v2828 = vsel %vm1967, %v2827, %v2826
        %v2829 = vrot.slane %v1329, 4
        %v2830 = vsel %vm1970, %v2829, %v2828
        %v2831 = vrot.slane %v1352, 3
        %v2832 = vrot.slane %v1375, 2
        %v2833 = vsel %vm1952, %v2832, %v2831
        %v2834 = vrot.slane %v1398, 1
        %v2835 = vsel %vm1955, %v2834, %v2833
        %v2836 = vsel %vm1958, %v1421, %v2835
        %v2837 = vrot.slane %v1444, 7
        %v2838 = vsel %vm1961, %v2837, %v2836
        %v2839 = vrot.slane %v1467, 6
        %v2840 = vsel %vm1964, %v2839, %v2838
        %v2841 = vrot.slane %v1490, 5
        %v2842 = vsel %vm1967, %v2841, %v2840
        %v2843 = vrot.slane %v1513, 4
        %v2844 = vsel %vm1970, %v2843, %v2842
        %v2845 = vrot.slane %v1536, 3
        %v2846 = vrot.slane %v1559, 2
        %v2847 = vsel %vm1952, %v2846, %v2845
        %v2848 = vrot.slane %v1582, 1
        %v2849 = vsel %vm1955, %v2848, %v2847
        %v2850 = vsel %vm1958, %v1605, %v2849
        %v2851 = vrot.slane %v1628, 7
        %v2852 = vsel %vm1961, %v2851, %v2850
        %v2853 = vrot.slane %v1651, 6
        %v2854 = vsel %vm1964, %v2853, %v2852
        %v2855 = vrot.slane %v1674, 5
        %v2856 = vsel %vm1967, %v2855, %v2854
        %v2857 = vrot.slane %v1697, 4
        %v2858 = vsel %vm1970, %v2857, %v2856
        %v2859 = vrot.slane %v1720, 3
        %v2860 = vrot.slane %v1743, 2
        %v2861 = vsel %vm1952, %v2860, %v2859
        %v2862 = vrot.slane %v1766, 1
        %v2863 = vsel %vm1955, %v2862, %v2861
        %v2864 = vsel %vm1958, %v1789, %v2863
        %v2865 = vrot.slane %v1812, 7
        %v2866 = vsel %vm1961, %v2865, %v2864
        %v2867 = vrot.slane %v1835, 6
        %v2868 = vsel %vm1964, %v2867, %v2866
        %v2869 = vrot.slane %v1858, 5
        %v2870 = vsel %vm1967, %v2869, %v2868
        %v2871 = vrot.slane %v1881, 4
        %v2872 = vsel %vm1970, %v2871, %v2870
        %v2873 = vsel %vm407, %v2774, 0
        %v2875 = vsel %vm407, %v2788, 0
        %v2877 = vsel %vm407, %v2802, 0
        %v2879 = vsel %vm407, %v2816, 0
        %v2881 = vsel %vm407, %v2830, 0
        %v2883 = vsel %vm407, %v2844, 0
        %v2885 = vsel %vm407, %v2858, 0
        %v2887 = vsel %vm407, %v2872, 0
        %2889 = vmatpush.msra.mxu0 0.0
        %2890 = vmatpush.msra.mxu0 0.0
        %2891 = vmatpush.msra.mxu0 0.0
        %2892 = vmatpush.msra.mxu0 0.0
        %2893 = vmatpush.msra.mxu0 0.0
        %2894 = vmatpush.msra.mxu0 0.0
        %2895 = vmatpush.msra.mxu0 0.0
        %2896 = vmatpush.msra.mxu0 0.0
        %2897 = vmatpush.msra.mxu0 0.0
        %2898 = vmatpush.msra.mxu0 0.0
        %2899 = vmatpush.msra.mxu0 0.0
        %2900 = vmatpush.msra.mxu0 0.0
        %2901 = vmatpush.msra.mxu0 0.0
        %2902 = vmatpush.msra.mxu0 0.0
        %2903 = vmatpush.msra.mxu0 0.0
        %2904 = vmatpush.msra.mxu0 %v2760
        %2905 = vmatmul.f32.gmra.mxu0 %v2873
        %v2906 = vpop.f32.mrf.mxu0
        %v2907 = vadd.f32 0.0, %v2906
        %2908 = vmatmul.f32.gmra.mxu0 %v2875
        %v2909 = vpop.f32.mrf.mxu0
        %v2910 = vadd.f32 0.0, %v2909
        %2911 = vmatmul.f32.gmra.mxu0 %v2877
        %v2912 = vpop.f32.mrf.mxu0
        %v2913 = vadd.f32 0.0, %v2912
        %2914 = vmatmul.f32.gmra.mxu0 %v2879
        %v2915 = vpop.f32.mrf.mxu0
        %v2916 = vadd.f32 0.0, %v2915
        %2917 = vmatmul.f32.gmra.mxu0 %v2881
        %v2918 = vpop.f32.mrf.mxu0
        %v2919 = vadd.f32 0.0, %v2918
        %2920 = vmatmul.f32.gmra.mxu0 %v2883
        %v2921 = vpop.f32.mrf.mxu0
        %v2922 = vadd.f32 0.0, %v2921
        %2923 = vmatmul.f32.gmra.mxu0 %v2885
        %v2924 = vpop.f32.mrf.mxu0
        %v2925 = vadd.f32 0.0, %v2924
        %2926 = vmatmul.f32.gmra.mxu0 %v2887
        %v2927 = vpop.f32.mrf.mxu0
        %v2928 = vadd.f32 0.0, %v2927
        %2929 = vdwg.mxu0
        %2938 = vrot.lane.b32.xlu0 %v2907, 1
        %v2939 = vpop.permute.xlu0 %2938
        %2940 = vrot.lane.b32.xlu0 %v2910, 1
        %v2941 = vpop.permute.xlu0 %2940
        %2942 = vrot.lane.b32.xlu0 %v2913, 1
        %v2943 = vpop.permute.xlu0 %2942
        %2944 = vrot.lane.b32.xlu0 %v2916, 1
        %v2945 = vpop.permute.xlu0 %2944
        %2946 = vrot.lane.b32.xlu0 %v2919, 1
        %v2947 = vpop.permute.xlu0 %2946
        %2948 = vrot.lane.b32.xlu0 %v2922, 1
        %v2949 = vpop.permute.xlu0 %2948
        %2950 = vrot.lane.b32.xlu0 %v2925, 1
        %v2951 = vpop.permute.xlu0 %2950
        %2952 = vrot.lane.b32.xlu0 %v2928, 1
        %v2953 = vpop.permute.xlu0 %2952
        %v2962 = vsel %vm2159, 0.0, %v2939
        %v2963 = vsel %vm2159, 0.0, %v2941
        %v2964 = vsel %vm2159, 0.0, %v2943
        %v2965 = vsel %vm2159, 0.0, %v2945
        %v2966 = vsel %vm2159, 0.0, %v2947
        %v2967 = vsel %vm2159, 0.0, %v2949
        %v2968 = vsel %vm2159, 0.0, %v2951
        %v2969 = vsel %vm2159, 0.0, %v2953
        %v2970 = vsel %vm2168, %v2962, 0.0
        %v2971 = vsel %vm2168, %v2963, 0.0
        %v2972 = vsel %vm2168, %v2964, 0.0
        %v2973 = vsel %vm2168, %v2965, 0.0
        %v2974 = vsel %vm2168, %v2966, 0.0
        %v2975 = vsel %vm2168, %v2967, 0.0
        %v2976 = vsel %vm2168, %v2968, 0.0
        %v2977 = vsel %vm2168, %v2969, 0.0
        %v2978 = vpack.c.bf16 %v2970, %v2970
        %v2979 = vpack.c.bf16 %v2971, %v2971
        %v2980 = vpack.c.bf16 %v2972, %v2972
        %v2981 = vpack.c.bf16 %v2973, %v2973
        %v2982 = vpack.c.bf16 %v2974, %v2974
        %v2983 = vpack.c.bf16 %v2975, %v2975
        %v2984 = vpack.c.bf16 %v2976, %v2976
        %v2985 = vpack.c.bf16 %v2977, %v2977
        %2994 = vrot.lane.b32.xlu0 %v2978, 55
        %v2995 = vpop.permute.xlu0 %2994
        %2996 = vrot.lane.b32.xlu0 %v2979, 55
        %v2997 = vpop.permute.xlu0 %2996
        %2998 = vrot.lane.b32.xlu0 %v2980, 55
        %v2999 = vpop.permute.xlu0 %2998
        %3000 = vrot.lane.b32.xlu0 %v2981, 55
        %v3001 = vpop.permute.xlu0 %3000
        %3002 = vrot.lane.b32.xlu0 %v2982, 55
        %v3003 = vpop.permute.xlu0 %3002
        %3004 = vrot.lane.b32.xlu0 %v2983, 55
        %v3005 = vpop.permute.xlu0 %3004
        %3006 = vrot.lane.b32.xlu0 %v2984, 55
        %v3007 = vpop.permute.xlu0 %3006
        %3008 = vrot.lane.b32.xlu0 %v2985, 55
        %v3009 = vpop.permute.xlu0 %3008
        %vm3018 = vcmask 593336
        %3019 = vst.msk [vmem:[#allocation2] sm:$0xf] %vm3018, %v2995
        %3020 = vst.msk [vmem:[#allocation2 + $0x8] sm:$0xf] %vm3018, %v2997
        %3021 = vst.msk [vmem:[#allocation2 + $0x10] sm:$0xf] %vm3018, %v2999
        %3022 = vst.msk [vmem:[#allocation2 + $0x18] sm:$0xf] %vm3018, %v3001
        %3023 = vst.msk [vmem:[#allocation2 + $0x20] sm:$0xf] %vm3018, %v3003
        %3024 = vst.msk [vmem:[#allocation2 + $0x28] sm:$0xf] %vm3018, %v3005
        %3025 = vst.msk [vmem:[#allocation2 + $0x30] sm:$0xf] %vm3018, %v3007
        %3026 = vst.msk [vmem:[#allocation2 + $0x38] sm:$0xf] %vm3018, %v3009
        %v3027 = vld [vmem:[%s2] sm:$0xff]
        %v3028 = vrot.slane %v432, 4
        %v3029 = vrot.slane %v455, 3
        %v3030 = vsel %vm1952, %v3029, %v3028
        %v3031 = vrot.slane %v478, 2
        %v3032 = vsel %vm1955, %v3031, %v3030
        %v3033 = vrot.slane %v501, 1
        %v3034 = vsel %vm1958, %v3033, %v3032
        %v3035 = vsel %vm1961, %v524, %v3034
        %v3036 = vrot.slane %v547, 7
        %v3037 = vsel %vm1964, %v3036, %v3035
        %v3038 = vrot.slane %v570, 6
        %v3039 = vsel %vm1967, %v3038, %v3037
        %v3040 = vrot.slane %v593, 5
        %v3041 = vsel %vm1970, %v3040, %v3039
        %v3042 = vrot.slane %v616, 4
        %v3043 = vrot.slane %v639, 3
        %v3044 = vsel %vm1952, %v3043, %v3042
        %v3045 = vrot.slane %v662, 2
        %v3046 = vsel %vm1955, %v3045, %v3044
        %v3047 = vrot.slane %v685, 1
        %v3048 = vsel %vm1958, %v3047, %v3046
        %v3049 = vsel %vm1961, %v708, %v3048
        %v3050 = vrot.slane %v731, 7
        %v3051 = vsel %vm1964, %v3050, %v3049
        %v3052 = vrot.slane %v754, 6
        %v3053 = vsel %vm1967, %v3052, %v3051
        %v3054 = vrot.slane %v777, 5
        %v3055 = vsel %vm1970, %v3054, %v3053
        %v3056 = vrot.slane %v800, 4
        %v3057 = vrot.slane %v823, 3
        %v3058 = vsel %vm1952, %v3057, %v3056
        %v3059 = vrot.slane %v846, 2
        %v3060 = vsel %vm1955, %v3059, %v3058
        %v3061 = vrot.slane %v869, 1
        %v3062 = vsel %vm1958, %v3061, %v3060
        %v3063 = vsel %vm1961, %v892, %v3062
        %v3064 = vrot.slane %v915, 7
        %v3065 = vsel %vm1964, %v3064, %v3063
        %v3066 = vrot.slane %v938, 6
        %v3067 = vsel %vm1967, %v3066, %v3065
        %v3068 = vrot.slane %v961, 5
        %v3069 = vsel %vm1970, %v3068, %v3067
        %v3070 = vrot.slane %v984, 4
        %v3071 = vrot.slane %v1007, 3
        %v3072 = vsel %vm1952, %v3071, %v3070
        %v3073 = vrot.slane %v1030, 2
        %v3074 = vsel %vm1955, %v3073, %v3072
        %v3075 = vrot.slane %v1053, 1
        %v3076 = vsel %vm1958, %v3075, %v3074
        %v3077 = vsel %vm1961, %v1076, %v3076
        %v3078 = vrot.slane %v1099, 7
        %v3079 = vsel %vm1964, %v3078, %v3077
        %v3080 = vrot.slane %v1122, 6
        %v3081 = vsel %vm1967, %v3080, %v3079
        %v3082 = vrot.slane %v1145, 5
        %v3083 = vsel %vm1970, %v3082, %v3081
        %v3084 = vrot.slane %v1168, 4
        %v3085 = vrot.slane %v1191, 3
        %v3086 = vsel %vm1952, %v3085, %v3084
        %v3087 = vrot.slane %v1214, 2
        %v3088 = vsel %vm1955, %v3087, %v3086
        %v3089 = vrot.slane %v1237, 1
        %v3090 = vsel %vm1958, %v3089, %v3088
        %v3091 = vsel %vm1961, %v1260, %v3090
        %v3092 = vrot.slane %v1283, 7
        %v3093 = vsel %vm1964, %v3092, %v3091
        %v3094 = vrot.slane %v1306, 6
        %v3095 = vsel %vm1967, %v3094, %v3093
        %v3096 = vrot.slane %v1329, 5
        %v3097 = vsel %vm1970, %v3096, %v3095
        %v3098 = vrot.slane %v1352, 4
        %v3099 = vrot.slane %v1375, 3
        %v3100 = vsel %vm1952, %v3099, %v3098
        %v3101 = vrot.slane %v1398, 2
        %v3102 = vsel %vm1955, %v3101, %v3100
        %v3103 = vrot.slane %v1421, 1
        %v3104 = vsel %vm1958, %v3103, %v3102
        %v3105 = vsel %vm1961, %v1444, %v3104
        %v3106 = vrot.slane %v1467, 7
        %v3107 = vsel %vm1964, %v3106, %v3105
        %v3108 = vrot.slane %v1490, 6
        %v3109 = vsel %vm1967, %v3108, %v3107
        %v3110 = vrot.slane %v1513, 5
        %v3111 = vsel %vm1970, %v3110, %v3109
        %v3112 = vrot.slane %v1536, 4
        %v3113 = vrot.slane %v1559, 3
        %v3114 = vsel %vm1952, %v3113, %v3112
        %v3115 = vrot.slane %v1582, 2
        %v3116 = vsel %vm1955, %v3115, %v3114
        %v3117 = vrot.slane %v1605, 1
        %v3118 = vsel %vm1958, %v3117, %v3116
        %v3119 = vsel %vm1961, %v1628, %v3118
        %v3120 = vrot.slane %v1651, 7
        %v3121 = vsel %vm1964, %v3120, %v3119
        %v3122 = vrot.slane %v1674, 6
        %v3123 = vsel %vm1967, %v3122, %v3121
        %v3124 = vrot.slane %v1697, 5
        %v3125 = vsel %vm1970, %v3124, %v3123
        %v3126 = vrot.slane %v1720, 4
        %v3127 = vrot.slane %v1743, 3
        %v3128 = vsel %vm1952, %v3127, %v3126
        %v3129 = vrot.slane %v1766, 2
        %v3130 = vsel %vm1955, %v3129, %v3128
        %v3131 = vrot.slane %v1789, 1
        %v3132 = vsel %vm1958, %v3131, %v3130
        %v3133 = vsel %vm1961, %v1812, %v3132
        %v3134 = vrot.slane %v1835, 7
        %v3135 = vsel %vm1964, %v3134, %v3133
        %v3136 = vrot.slane %v1858, 6
        %v3137 = vsel %vm1967, %v3136, %v3135
        %v3138 = vrot.slane %v1881, 5
        %v3139 = vsel %vm1970, %v3138, %v3137
        %v3140 = vsel %vm407, %v3041, 0
        %v3142 = vsel %vm407, %v3055, 0
        %v3144 = vsel %vm407, %v3069, 0
        %v3146 = vsel %vm407, %v3083, 0
        %v3148 = vsel %vm407, %v3097, 0
        %v3150 = vsel %vm407, %v3111, 0
        %v3152 = vsel %vm407, %v3125, 0
        %v3154 = vsel %vm407, %v3139, 0
        %3156 = vmatpush.msra.mxu0 0.0
        %3157 = vmatpush.msra.mxu0 0.0
        %3158 = vmatpush.msra.mxu0 0.0
        %3159 = vmatpush.msra.mxu0 0.0
        %3160 = vmatpush.msra.mxu0 0.0
        %3161 = vmatpush.msra.mxu0 0.0
        %3162 = vmatpush.msra.mxu0 0.0
        %3163 = vmatpush.msra.mxu0 0.0
        %3164 = vmatpush.msra.mxu0 0.0
        %3165 = vmatpush.msra.mxu0 0.0
        %3166 = vmatpush.msra.mxu0 0.0
        %3167 = vmatpush.msra.mxu0 0.0
        %3168 = vmatpush.msra.mxu0 0.0
        %3169 = vmatpush.msra.mxu0 0.0
        %3170 = vmatpush.msra.mxu0 0.0
        %3171 = vmatpush.msra.mxu0 %v3027
        %3172 = vmatmul.f32.gmra.mxu0 %v3140
        %v3173 = vpop.f32.mrf.mxu0
        %v3174 = vadd.f32 0.0, %v3173
        %3175 = vmatmul.f32.gmra.mxu0 %v3142
        %v3176 = vpop.f32.mrf.mxu0
        %v3177 = vadd.f32 0.0, %v3176
        %3178 = vmatmul.f32.gmra.mxu0 %v3144
        %v3179 = vpop.f32.mrf.mxu0
        %v3180 = vadd.f32 0.0, %v3179
        %3181 = vmatmul.f32.gmra.mxu0 %v3146
        %v3182 = vpop.f32.mrf.mxu0
        %v3183 = vadd.f32 0.0, %v3182
        %3184 = vmatmul.f32.gmra.mxu0 %v3148
        %v3185 = vpop.f32.mrf.mxu0
        %v3186 = vadd.f32 0.0, %v3185
        %3187 = vmatmul.f32.gmra.mxu0 %v3150
        %v3188 = vpop.f32.mrf.mxu0
        %v3189 = vadd.f32 0.0, %v3188
        %3190 = vmatmul.f32.gmra.mxu0 %v3152
        %v3191 = vpop.f32.mrf.mxu0
        %v3192 = vadd.f32 0.0, %v3191
        %3193 = vmatmul.f32.gmra.mxu0 %v3154
        %v3194 = vpop.f32.mrf.mxu0
        %v3195 = vadd.f32 0.0, %v3194
        %3196 = vdwg.mxu0
        %3205 = vrot.lane.b32.xlu0 %v3174, 1
        %v3206 = vpop.permute.xlu0 %3205
        %3207 = vrot.lane.b32.xlu0 %v3177, 1
        %v3208 = vpop.permute.xlu0 %3207
        %3209 = vrot.lane.b32.xlu0 %v3180, 1
        %v3210 = vpop.permute.xlu0 %3209
        %3211 = vrot.lane.b32.xlu0 %v3183, 1
        %v3212 = vpop.permute.xlu0 %3211
        %3213 = vrot.lane.b32.xlu0 %v3186, 1
        %v3214 = vpop.permute.xlu0 %3213
        %3215 = vrot.lane.b32.xlu0 %v3189, 1
        %v3216 = vpop.permute.xlu0 %3215
        %3217 = vrot.lane.b32.xlu0 %v3192, 1
        %v3218 = vpop.permute.xlu0 %3217
        %3219 = vrot.lane.b32.xlu0 %v3195, 1
        %v3220 = vpop.permute.xlu0 %3219
        %v3229 = vsel %vm2159, 0.0, %v3206
        %v3230 = vsel %vm2159, 0.0, %v3208
        %v3231 = vsel %vm2159, 0.0, %v3210
        %v3232 = vsel %vm2159, 0.0, %v3212
        %v3233 = vsel %vm2159, 0.0, %v3214
        %v3234 = vsel %vm2159, 0.0, %v3216
        %v3235 = vsel %vm2159, 0.0, %v3218
        %v3236 = vsel %vm2159, 0.0, %v3220
        %v3237 = vsel %vm2168, %v3229, 0.0
        %v3238 = vsel %vm2168, %v3230, 0.0
        %v3239 = vsel %vm2168, %v3231, 0.0
        %v3240 = vsel %vm2168, %v3232, 0.0
        %v3241 = vsel %vm2168, %v3233, 0.0
        %v3242 = vsel %vm2168, %v3234, 0.0
        %v3243 = vsel %vm2168, %v3235, 0.0
        %v3244 = vsel %vm2168, %v3236, 0.0
        %v3245 = vpack.c.bf16 %v3237, %v3237
        %v3246 = vpack.c.bf16 %v3238, %v3238
        %v3247 = vpack.c.bf16 %v3239, %v3239
        %v3248 = vpack.c.bf16 %v3240, %v3240
        %v3249 = vpack.c.bf16 %v3241, %v3241
        %v3250 = vpack.c.bf16 %v3242, %v3242
        %v3251 = vpack.c.bf16 %v3243, %v3243
        %v3252 = vpack.c.bf16 %v3244, %v3244
        %3261 = vrot.lane.b32.xlu0 %v3245, 73
        %v3262 = vpop.permute.xlu0 %3261
        %3263 = vrot.lane.b32.xlu0 %v3246, 73
        %v3264 = vpop.permute.xlu0 %3263
        %3265 = vrot.lane.b32.xlu0 %v3247, 73
        %v3266 = vpop.permute.xlu0 %3265
        %3267 = vrot.lane.b32.xlu0 %v3248, 73
        %v3268 = vpop.permute.xlu0 %3267
        %3269 = vrot.lane.b32.xlu0 %v3249, 73
        %v3270 = vpop.permute.xlu0 %3269
        %3271 = vrot.lane.b32.xlu0 %v3250, 73
        %v3272 = vpop.permute.xlu0 %3271
        %3273 = vrot.lane.b32.xlu0 %v3251, 73
        %v3274 = vpop.permute.xlu0 %3273
        %3275 = vrot.lane.b32.xlu0 %v3252, 73
        %v3276 = vpop.permute.xlu0 %3275
        %vm3285 = vcmask 740936
        %3286 = vst.msk [vmem:[#allocation2] sm:$0xf] %vm3285, %v3262
        %3287 = vst.msk [vmem:[#allocation2 + $0x8] sm:$0xf] %vm3285, %v3264
        %3288 = vst.msk [vmem:[#allocation2 + $0x10] sm:$0xf] %vm3285, %v3266
        %3289 = vst.msk [vmem:[#allocation2 + $0x18] sm:$0xf] %vm3285, %v3268
        %3290 = vst.msk [vmem:[#allocation2 + $0x20] sm:$0xf] %vm3285, %v3270
        %3291 = vst.msk [vmem:[#allocation2 + $0x28] sm:$0xf] %vm3285, %v3272
        %3292 = vst.msk [vmem:[#allocation2 + $0x30] sm:$0xf] %vm3285, %v3274
        %3293 = vst.msk [vmem:[#allocation2 + $0x38] sm:$0xf] %vm3285, %v3276
        %v3294 = vld [vmem:[%s2] sm:$0xff]
        %v3295 = vrot.slane %v432, 5
        %v3296 = vrot.slane %v455, 4
        %v3297 = vsel %vm1952, %v3296, %v3295
        %v3298 = vrot.slane %v478, 3
        %v3299 = vsel %vm1955, %v3298, %v3297
        %v3300 = vrot.slane %v501, 2
        %v3301 = vsel %vm1958, %v3300, %v3299
        %v3302 = vrot.slane %v524, 1
        %v3303 = vsel %vm1961, %v3302, %v3301
        %v3304 = vsel %vm1964, %v547, %v3303
        %v3305 = vrot.slane %v570, 7
        %v3306 = vsel %vm1967, %v3305, %v3304
        %v3307 = vrot.slane %v593, 6
        %v3308 = vsel %vm1970, %v3307, %v3306
        %v3309 = vrot.slane %v616, 5
        %v3310 = vrot.slane %v639, 4
        %v3311 = vsel %vm1952, %v3310, %v3309
        %v3312 = vrot.slane %v662, 3
        %v3313 = vsel %vm1955, %v3312, %v3311
        %v3314 = vrot.slane %v685, 2
        %v3315 = vsel %vm1958, %v3314, %v3313
        %v3316 = vrot.slane %v708, 1
        %v3317 = vsel %vm1961, %v3316, %v3315
        %v3318 = vsel %vm1964, %v731, %v3317
        %v3319 = vrot.slane %v754, 7
        %v3320 = vsel %vm1967, %v3319, %v3318
        %v3321 = vrot.slane %v777, 6
        %v3322 = vsel %vm1970, %v3321, %v3320
        %v3323 = vrot.slane %v800, 5
        %v3324 = vrot.slane %v823, 4
        %v3325 = vsel %vm1952, %v3324, %v3323
        %v3326 = vrot.slane %v846, 3
        %v3327 = vsel %vm1955, %v3326, %v3325
        %v3328 = vrot.slane %v869, 2
        %v3329 = vsel %vm1958, %v3328, %v3327
        %v3330 = vrot.slane %v892, 1
        %v3331 = vsel %vm1961, %v3330, %v3329
        %v3332 = vsel %vm1964, %v915, %v3331
        %v3333 = vrot.slane %v938, 7
        %v3334 = vsel %vm1967, %v3333, %v3332
        %v3335 = vrot.slane %v961, 6
        %v3336 = vsel %vm1970, %v3335, %v3334
        %v3337 = vrot.slane %v984, 5
        %v3338 = vrot.slane %v1007, 4
        %v3339 = vsel %vm1952, %v3338, %v3337
        %v3340 = vrot.slane %v1030, 3
        %v3341 = vsel %vm1955, %v3340, %v3339
        %v3342 = vrot.slane %v1053, 2
        %v3343 = vsel %vm1958, %v3342, %v3341
        %v3344 = vrot.slane %v1076, 1
        %v3345 = vsel %vm1961, %v3344, %v3343
        %v3346 = vsel %vm1964, %v1099, %v3345
        %v3347 = vrot.slane %v1122, 7
        %v3348 = vsel %vm1967, %v3347, %v3346
        %v3349 = vrot.slane %v1145, 6
        %v3350 = vsel %vm1970, %v3349, %v3348
        %v3351 = vrot.slane %v1168, 5
        %v3352 = vrot.slane %v1191, 4
        %v3353 = vsel %vm1952, %v3352, %v3351
        %v3354 = vrot.slane %v1214, 3
        %v3355 = vsel %vm1955, %v3354, %v3353
        %v3356 = vrot.slane %v1237, 2
        %v3357 = vsel %vm1958, %v3356, %v3355
        %v3358 = vrot.slane %v1260, 1
        %v3359 = vsel %vm1961, %v3358, %v3357
        %v3360 = vsel %vm1964, %v1283, %v3359
        %v3361 = vrot.slane %v1306, 7
        %v3362 = vsel %vm1967, %v3361, %v3360
        %v3363 = vrot.slane %v1329, 6
        %v3364 = vsel %vm1970, %v3363, %v3362
        %v3365 = vrot.slane %v1352, 5
        %v3366 = vrot.slane %v1375, 4
        %v3367 = vsel %vm1952, %v3366, %v3365
        %v3368 = vrot.slane %v1398, 3
        %v3369 = vsel %vm1955, %v3368, %v3367
        %v3370 = vrot.slane %v1421, 2
        %v3371 = vsel %vm1958, %v3370, %v3369
        %v3372 = vrot.slane %v1444, 1
        %v3373 = vsel %vm1961, %v3372, %v3371
        %v3374 = vsel %vm1964, %v1467, %v3373
        %v3375 = vrot.slane %v1490, 7
        %v3376 = vsel %vm1967, %v3375, %v3374
        %v3377 = vrot.slane %v1513, 6
        %v3378 = vsel %vm1970, %v3377, %v3376
        %v3379 = vrot.slane %v1536, 5
        %v3380 = vrot.slane %v1559, 4
        %v3381 = vsel %vm1952, %v3380, %v3379
        %v3382 = vrot.slane %v1582, 3
        %v3383 = vsel %vm1955, %v3382, %v3381
        %v3384 = vrot.slane %v1605, 2
        %v3385 = vsel %vm1958, %v3384, %v3383
        %v3386 = vrot.slane %v1628, 1
        %v3387 = vsel %vm1961, %v3386, %v3385
        %v3388 = vsel %vm1964, %v1651, %v3387
        %v3389 = vrot.slane %v1674, 7
        %v3390 = vsel %vm1967, %v3389, %v3388
        %v3391 = vrot.slane %v1697, 6
        %v3392 = vsel %vm1970, %v3391, %v3390
        %v3393 = vrot.slane %v1720, 5
        %v3394 = vrot.slane %v1743, 4
        %v3395 = vsel %vm1952, %v3394, %v3393
        %v3396 = vrot.slane %v1766, 3
        %v3397 = vsel %vm1955, %v3396, %v3395
        %v3398 = vrot.slane %v1789, 2
        %v3399 = vsel %vm1958, %v3398, %v3397
        %v3400 = vrot.slane %v1812, 1
        %v3401 = vsel %vm1961, %v3400, %v3399
        %v3402 = vsel %vm1964, %v1835, %v3401
        %v3403 = vrot.slane %v1858, 7
        %v3404 = vsel %vm1967, %v3403, %v3402
        %v3405 = vrot.slane %v1881, 6
        %v3406 = vsel %vm1970, %v3405, %v3404
        %v3407 = vsel %vm407, %v3308, 0
        %v3409 = vsel %vm407, %v3322, 0
        %v3411 = vsel %vm407, %v3336, 0
        %v3413 = vsel %vm407, %v3350, 0
        %v3415 = vsel %vm407, %v3364, 0
        %v3417 = vsel %vm407, %v3378, 0
        %v3419 = vsel %vm407, %v3392, 0
        %v3421 = vsel %vm407, %v3406, 0
        %3423 = vmatpush.msra.mxu0 0.0
        %3424 = vmatpush.msra.mxu0 0.0
        %3425 = vmatpush.msra.mxu0 0.0
        %3426 = vmatpush.msra.mxu0 0.0
        %3427 = vmatpush.msra.mxu0 0.0
        %3428 = vmatpush.msra.mxu0 0.0
        %3429 = vmatpush.msra.mxu0 0.0
        %3430 = vmatpush.msra.mxu0 0.0
        %3431 = vmatpush.msra.mxu0 0.0
        %3432 = vmatpush.msra.mxu0 0.0
        %3433 = vmatpush.msra.mxu0 0.0
        %3434 = vmatpush.msra.mxu0 0.0
        %3435 = vmatpush.msra.mxu0 0.0
        %3436 = vmatpush.msra.mxu0 0.0
        %3437 = vmatpush.msra.mxu0 0.0
        %3438 = vmatpush.msra.mxu0 %v3294
        %3439 = vmatmul.f32.gmra.mxu0 %v3407
        %v3440 = vpop.f32.mrf.mxu0
        %v3441 = vadd.f32 0.0, %v3440
        %3442 = vmatmul.f32.gmra.mxu0 %v3409
        %v3443 = vpop.f32.mrf.mxu0
        %v3444 = vadd.f32 0.0, %v3443
        %3445 = vmatmul.f32.gmra.mxu0 %v3411
        %v3446 = vpop.f32.mrf.mxu0
        %v3447 = vadd.f32 0.0, %v3446
        %3448 = vmatmul.f32.gmra.mxu0 %v3413
        %v3449 = vpop.f32.mrf.mxu0
        %v3450 = vadd.f32 0.0, %v3449
        %3451 = vmatmul.f32.gmra.mxu0 %v3415
        %v3452 = vpop.f32.mrf.mxu0
        %v3453 = vadd.f32 0.0, %v3452
        %3454 = vmatmul.f32.gmra.mxu0 %v3417
        %v3455 = vpop.f32.mrf.mxu0
        %v3456 = vadd.f32 0.0, %v3455
        %3457 = vmatmul.f32.gmra.mxu0 %v3419
        %v3458 = vpop.f32.mrf.mxu0
        %v3459 = vadd.f32 0.0, %v3458
        %3460 = vmatmul.f32.gmra.mxu0 %v3421
        %v3461 = vpop.f32.mrf.mxu0
        %v3462 = vadd.f32 0.0, %v3461
        %3463 = vdwg.mxu0
        %3472 = vrot.lane.b32.xlu0 %v3441, 1
        %v3473 = vpop.permute.xlu0 %3472
        %3474 = vrot.lane.b32.xlu0 %v3444, 1
        %v3475 = vpop.permute.xlu0 %3474
        %3476 = vrot.lane.b32.xlu0 %v3447, 1
        %v3477 = vpop.permute.xlu0 %3476
        %3478 = vrot.lane.b32.xlu0 %v3450, 1
        %v3479 = vpop.permute.xlu0 %3478
        %3480 = vrot.lane.b32.xlu0 %v3453, 1
        %v3481 = vpop.permute.xlu0 %3480
        %3482 = vrot.lane.b32.xlu0 %v3456, 1
        %v3483 = vpop.permute.xlu0 %3482
        %3484 = vrot.lane.b32.xlu0 %v3459, 1
        %v3485 = vpop.permute.xlu0 %3484
        %3486 = vrot.lane.b32.xlu0 %v3462, 1
        %v3487 = vpop.permute.xlu0 %3486
        %v3496 = vsel %vm2159, 0.0, %v3473
        %v3497 = vsel %vm2159, 0.0, %v3475
        %v3498 = vsel %vm2159, 0.0, %v3477
        %v3499 = vsel %vm2159, 0.0, %v3479
        %v3500 = vsel %vm2159, 0.0, %v3481
        %v3501 = vsel %vm2159, 0.0, %v3483
        %v3502 = vsel %vm2159, 0.0, %v3485
        %v3503 = vsel %vm2159, 0.0, %v3487
        %v3504 = vsel %vm2168, %v3496, 0.0
        %v3505 = vsel %vm2168, %v3497, 0.0
        %v3506 = vsel %vm2168, %v3498, 0.0
        %v3507 = vsel %vm2168, %v3499, 0.0
        %v3508 = vsel %vm2168, %v3500, 0.0
        %v3509 = vsel %vm2168, %v3501, 0.0
        %v3510 = vsel %vm2168, %v3502, 0.0
        %v3511 = vsel %vm2168, %v3503, 0.0
        %v3512 = vpack.c.bf16 %v3504, %v3504
        %v3513 = vpack.c.bf16 %v3505, %v3505
        %v3514 = vpack.c.bf16 %v3506, %v3506
        %v3515 = vpack.c.bf16 %v3507, %v3507
        %v3516 = vpack.c.bf16 %v3508, %v3508
        %v3517 = vpack.c.bf16 %v3509, %v3509
        %v3518 = vpack.c.bf16 %v3510, %v3510
        %v3519 = vpack.c.bf16 %v3511, %v3511
        %3528 = vrot.lane.b32.xlu0 %v3512, 91
        %v3529 = vpop.permute.xlu0 %3528
        %3530 = vrot.lane.b32.xlu0 %v3513, 91
        %v3531 = vpop.permute.xlu0 %3530
        %3532 = vrot.lane.b32.xlu0 %v3514, 91
        %v3533 = vpop.permute.xlu0 %3532
        %3534 = vrot.lane.b32.xlu0 %v3515, 91
        %v3535 = vpop.permute.xlu0 %3534
        %3536 = vrot.lane.b32.xlu0 %v3516, 91
        %v3537 = vpop.permute.xlu0 %3536
        %3538 = vrot.lane.b32.xlu0 %v3517, 91
        %v3539 = vpop.permute.xlu0 %3538
        %3540 = vrot.lane.b32.xlu0 %v3518, 91
        %v3541 = vpop.permute.xlu0 %3540
        %3542 = vrot.lane.b32.xlu0 %v3519, 91
        %v3543 = vpop.permute.xlu0 %3542
        %vm3552 = vcmask 888536
        %3553 = vst.msk [vmem:[#allocation2] sm:$0xf] %vm3552, %v3529
        %3554 = vst.msk [vmem:[#allocation2 + $0x8] sm:$0xf] %vm3552, %v3531
        %3555 = vst.msk [vmem:[#allocation2 + $0x10] sm:$0xf] %vm3552, %v3533
        %3556 = vst.msk [vmem:[#allocation2 + $0x18] sm:$0xf] %vm3552, %v3535
        %3557 = vst.msk [vmem:[#allocation2 + $0x20] sm:$0xf] %vm3552, %v3537
        %3558 = vst.msk [vmem:[#allocation2 + $0x28] sm:$0xf] %vm3552, %v3539
        %3559 = vst.msk [vmem:[#allocation2 + $0x30] sm:$0xf] %vm3552, %v3541
        %3560 = vst.msk [vmem:[#allocation2 + $0x38] sm:$0xf] %vm3552, %v3543
        %v3561 = vld [vmem:[%s2] sm:$0xff]
        %v3562 = vrot.slane %v432, 6
        %v3563 = vrot.slane %v455, 5
        %v3564 = vsel %vm1952, %v3563, %v3562
        %v3565 = vrot.slane %v478, 4
        %v3566 = vsel %vm1955, %v3565, %v3564
        %v3567 = vrot.slane %v501, 3
        %v3568 = vsel %vm1958, %v3567, %v3566
        %v3569 = vrot.slane %v524, 2
        %v3570 = vsel %vm1961, %v3569, %v3568
        %v3571 = vrot.slane %v547, 1
        %v3572 = vsel %vm1964, %v3571, %v3570
        %v3573 = vsel %vm1967, %v570, %v3572
        %v3574 = vrot.slane %v593, 7
        %v3575 = vsel %vm1970, %v3574, %v3573
        %v3576 = vrot.slane %v616, 6
        %v3577 = vrot.slane %v639, 5
        %v3578 = vsel %vm1952, %v3577, %v3576
        %v3579 = vrot.slane %v662, 4
        %v3580 = vsel %vm1955, %v3579, %v3578
        %v3581 = vrot.slane %v685, 3
        %v3582 = vsel %vm1958, %v3581, %v3580
        %v3583 = vrot.slane %v708, 2
        %v3584 = vsel %vm1961, %v3583, %v3582
        %v3585 = vrot.slane %v731, 1
        %v3586 = vsel %vm1964, %v3585, %v3584
        %v3587 = vsel %vm1967, %v754, %v3586
        %v3588 = vrot.slane %v777, 7
        %v3589 = vsel %vm1970, %v3588, %v3587
        %v3590 = vrot.slane %v800, 6
        %v3591 = vrot.slane %v823, 5
        %v3592 = vsel %vm1952, %v3591, %v3590
        %v3593 = vrot.slane %v846, 4
        %v3594 = vsel %vm1955, %v3593, %v3592
        %v3595 = vrot.slane %v869, 3
        %v3596 = vsel %vm1958, %v3595, %v3594
        %v3597 = vrot.slane %v892, 2
        %v3598 = vsel %vm1961, %v3597, %v3596
        %v3599 = vrot.slane %v915, 1
        %v3600 = vsel %vm1964, %v3599, %v3598
        %v3601 = vsel %vm1967, %v938, %v3600
        %v3602 = vrot.slane %v961, 7
        %v3603 = vsel %vm1970, %v3602, %v3601
        %v3604 = vrot.slane %v984, 6
        %v3605 = vrot.slane %v1007, 5
        %v3606 = vsel %vm1952, %v3605, %v3604
        %v3607 = vrot.slane %v1030, 4
        %v3608 = vsel %vm1955, %v3607, %v3606
        %v3609 = vrot.slane %v1053, 3
        %v3610 = vsel %vm1958, %v3609, %v3608
        %v3611 = vrot.slane %v1076, 2
        %v3612 = vsel %vm1961, %v3611, %v3610
        %v3613 = vrot.slane %v1099, 1
        %v3614 = vsel %vm1964, %v3613, %v3612
        %v3615 = vsel %vm1967, %v1122, %v3614
        %v3616 = vrot.slane %v1145, 7
        %v3617 = vsel %vm1970, %v3616, %v3615
        %v3618 = vrot.slane %v1168, 6
        %v3619 = vrot.slane %v1191, 5
        %v3620 = vsel %vm1952, %v3619, %v3618
        %v3621 = vrot.slane %v1214, 4
        %v3622 = vsel %vm1955, %v3621, %v3620
        %v3623 = vrot.slane %v1237, 3
        %v3624 = vsel %vm1958, %v3623, %v3622
        %v3625 = vrot.slane %v1260, 2
        %v3626 = vsel %vm1961, %v3625, %v3624
        %v3627 = vrot.slane %v1283, 1
        %v3628 = vsel %vm1964, %v3627, %v3626
        %v3629 = vsel %vm1967, %v1306, %v3628
        %v3630 = vrot.slane %v1329, 7
        %v3631 = vsel %vm1970, %v3630, %v3629
        %v3632 = vrot.slane %v1352, 6
        %v3633 = vrot.slane %v1375, 5
        %v3634 = vsel %vm1952, %v3633, %v3632
        %v3635 = vrot.slane %v1398, 4
        %v3636 = vsel %vm1955, %v3635, %v3634
        %v3637 = vrot.slane %v1421, 3
        %v3638 = vsel %vm1958, %v3637, %v3636
        %v3639 = vrot.slane %v1444, 2
        %v3640 = vsel %vm1961, %v3639, %v3638
        %v3641 = vrot.slane %v1467, 1
        %v3642 = vsel %vm1964, %v3641, %v3640
        %v3643 = vsel %vm1967, %v1490, %v3642
        %v3644 = vrot.slane %v1513, 7
        %v3645 = vsel %vm1970, %v3644, %v3643
        %v3646 = vrot.slane %v1536, 6
        %v3647 = vrot.slane %v1559, 5
        %v3648 = vsel %vm1952, %v3647, %v3646
        %v3649 = vrot.slane %v1582, 4
        %v3650 = vsel %vm1955, %v3649, %v3648
        %v3651 = vrot.slane %v1605, 3
        %v3652 = vsel %vm1958, %v3651, %v3650
        %v3653 = vrot.slane %v1628, 2
        %v3654 = vsel %vm1961, %v3653, %v3652
        %v3655 = vrot.slane %v1651, 1
        %v3656 = vsel %vm1964, %v3655, %v3654
        %v3657 = vsel %vm1967, %v1674, %v3656
        %v3658 = vrot.slane %v1697, 7
        %v3659 = vsel %vm1970, %v3658, %v3657
        %v3660 = vrot.slane %v1720, 6
        %v3661 = vrot.slane %v1743, 5
        %v3662 = vsel %vm1952, %v3661, %v3660
        %v3663 = vrot.slane %v1766, 4
        %v3664 = vsel %vm1955, %v3663, %v3662
        %v3665 = vrot.slane %v1789, 3
        %v3666 = vsel %vm1958, %v3665, %v3664
        %v3667 = vrot.slane %v1812, 2
        %v3668 = vsel %vm1961, %v3667, %v3666
        %v3669 = vrot.slane %v1835, 1
        %v3670 = vsel %vm1964, %v3669, %v3668
        %v3671 = vsel %vm1967, %v1858, %v3670
        %v3672 = vrot.slane %v1881, 7
        %v3673 = vsel %vm1970, %v3672, %v3671
        %v3674 = vsel %vm407, %v3575, 0
        %v3676 = vsel %vm407, %v3589, 0
        %v3678 = vsel %vm407, %v3603, 0
        %v3680 = vsel %vm407, %v3617, 0
        %v3682 = vsel %vm407, %v3631, 0
        %v3684 = vsel %vm407, %v3645, 0
        %v3686 = vsel %vm407, %v3659, 0
        %v3688 = vsel %vm407, %v3673, 0
        %3690 = vmatpush.msra.mxu0 0.0
        %3691 = vmatpush.msra.mxu0 0.0
        %3692 = vmatpush.msra.mxu0 0.0
        %3693 = vmatpush.msra.mxu0 0.0
        %3694 = vmatpush.msra.mxu0 0.0
        %3695 = vmatpush.msra.mxu0 0.0
        %3696 = vmatpush.msra.mxu0 0.0
        %3697 = vmatpush.msra.mxu0 0.0
        %3698 = vmatpush.msra.mxu0 0.0
        %3699 = vmatpush.msra.mxu0 0.0
        %3700 = vmatpush.msra.mxu0 0.0
        %3701 = vmatpush.msra.mxu0 0.0
        %3702 = vmatpush.msra.mxu0 0.0
        %3703 = vmatpush.msra.mxu0 0.0
        %3704 = vmatpush.msra.mxu0 0.0
        %3705 = vmatpush.msra.mxu0 %v3561
        %3706 = vmatmul.f32.gmra.mxu0 %v3674
        %v3707 = vpop.f32.mrf.mxu0
        %v3708 = vadd.f32 0.0, %v3707
        %3709 = vmatmul.f32.gmra.mxu0 %v3676
        %v3710 = vpop.f32.mrf.mxu0
        %v3711 = vadd.f32 0.0, %v3710
        %3712 = vmatmul.f32.gmra.mxu0 %v3678
        %v3713 = vpop.f32.mrf.mxu0
        %v3714 = vadd.f32 0.0, %v3713
        %3715 = vmatmul.f32.gmra.mxu0 %v3680
        %v3716 = vpop.f32.mrf.mxu0
        %v3717 = vadd.f32 0.0, %v3716
        %3718 = vmatmul.f32.gmra.mxu0 %v3682
        %v3719 = vpop.f32.mrf.mxu0
        %v3720 = vadd.f32 0.0, %v3719
        %3721 = vmatmul.f32.gmra.mxu0 %v3684
        %v3722 = vpop.f32.mrf.mxu0
        %v3723 = vadd.f32 0.0, %v3722
        %3724 = vmatmul.f32.gmra.mxu0 %v3686
        %v3725 = vpop.f32.mrf.mxu0
        %v3726 = vadd.f32 0.0, %v3725
        %3727 = vmatmul.f32.gmra.mxu0 %v3688
        %v3728 = vpop.f32.mrf.mxu0
        %v3729 = vadd.f32 0.0, %v3728
        %3730 = vdwg.mxu0
        %3739 = vrot.lane.b32.xlu0 %v3708, 1
        %v3740 = vpop.permute.xlu0 %3739
        %3741 = vrot.lane.b32.xlu0 %v3711, 1
        %v3742 = vpop.permute.xlu0 %3741
        %3743 = vrot.lane.b32.xlu0 %v3714, 1
        %v3744 = vpop.permute.xlu0 %3743
        %3745 = vrot.lane.b32.xlu0 %v3717, 1
        %v3746 = vpop.permute.xlu0 %3745
        %3747 = vrot.lane.b32.xlu0 %v3720, 1
        %v3748 = vpop.permute.xlu0 %3747
        %3749 = vrot.lane.b32.xlu0 %v3723, 1
        %v3750 = vpop.permute.xlu0 %3749
        %3751 = vrot.lane.b32.xlu0 %v3726, 1
        %v3752 = vpop.permute.xlu0 %3751
        %3753 = vrot.lane.b32.xlu0 %v3729, 1
        %v3754 = vpop.permute.xlu0 %3753
        %v3763 = vsel %vm2159, 0.0, %v3740
        %v3764 = vsel %vm2159, 0.0, %v3742
        %v3765 = vsel %vm2159, 0.0, %v3744
        %v3766 = vsel %vm2159, 0.0, %v3746
        %v3767 = vsel %vm2159, 0.0, %v3748
        %v3768 = vsel %vm2159, 0.0, %v3750
        %v3769 = vsel %vm2159, 0.0, %v3752
        %v3770 = vsel %vm2159, 0.0, %v3754
        %v3771 = vsel %vm2168, %v3763, 0.0
        %v3772 = vsel %vm2168, %v3764, 0.0
        %v3773 = vsel %vm2168, %v3765, 0.0
        %v3774 = vsel %vm2168, %v3766, 0.0
        %v3775 = vsel %vm2168, %v3767, 0.0
        %v3776 = vsel %vm2168, %v3768, 0.0
        %v3777 = vsel %vm2168, %v3769, 0.0
        %v3778 = vsel %vm2168, %v3770, 0.0
        %v3779 = vpack.c.bf16 %v3771, %v3771
        %v3780 = vpack.c.bf16 %v3772, %v3772
        %v3781 = vpack.c.bf16 %v3773, %v3773
        %v3782 = vpack.c.bf16 %v3774, %v3774
        %v3783 = vpack.c.bf16 %v3775, %v3775
        %v3784 = vpack.c.bf16 %v3776, %v3776
        %v3785 = vpack.c.bf16 %v3777, %v3777
        %v3786 = vpack.c.bf16 %v3778, %v3778
        %3795 = vrot.lane.b32.xlu0 %v3779, 109
        %v3796 = vpop.permute.xlu0 %3795
        %3797 = vrot.lane.b32.xlu0 %v3780, 109
        %v3798 = vpop.permute.xlu0 %3797
        %3799 = vrot.lane.b32.xlu0 %v3781, 109
        %v3800 = vpop.permute.xlu0 %3799
        %3801 = vrot.lane.b32.xlu0 %v3782, 109
        %v3802 = vpop.permute.xlu0 %3801
        %3803 = vrot.lane.b32.xlu0 %v3783, 109
        %v3804 = vpop.permute.xlu0 %3803
        %3805 = vrot.lane.b32.xlu0 %v3784, 109
        %v3806 = vpop.permute.xlu0 %3805
        %3807 = vrot.lane.b32.xlu0 %v3785, 109
        %v3808 = vpop.permute.xlu0 %3807
        %3809 = vrot.lane.b32.xlu0 %v3786, 109
        %v3810 = vpop.permute.xlu0 %3809
        %vm3819 = vcmask 1036136
        %3820 = vst.msk [vmem:[#allocation2] sm:$0xf] %vm3819, %v3796
        %3821 = vst.msk [vmem:[#allocation2 + $0x8] sm:$0xf] %vm3819, %v3798
        %3822 = vst.msk [vmem:[#allocation2 + $0x10] sm:$0xf] %vm3819, %v3800
        %3823 = vst.msk [vmem:[#allocation2 + $0x18] sm:$0xf] %vm3819, %v3802
        %3824 = vst.msk [vmem:[#allocation2 + $0x20] sm:$0xf] %vm3819, %v3804
        %3825 = vst.msk [vmem:[#allocation2 + $0x28] sm:$0xf] %vm3819, %v3806
        %3826 = vst.msk [vmem:[#allocation2 + $0x30] sm:$0xf] %vm3819, %v3808
        %3827 = vst.msk [vmem:[#allocation2 + $0x38] sm:$0xf] %vm3819, %v3810
        %v3828 = vld [vmem:[%s2] sm:$0xff]
        %v3829 = vrot.slane %v432, 7
        %v3830 = vrot.slane %v455, 6
        %v3831 = vsel %vm1952, %v3830, %v3829
        %v3832 = vrot.slane %v478, 5
        %v3833 = vsel %vm1955, %v3832, %v3831
        %v3834 = vrot.slane %v501, 4
        %v3835 = vsel %vm1958, %v3834, %v3833
        %v3836 = vrot.slane %v524, 3
        %v3837 = vsel %vm1961, %v3836, %v3835
        %v3838 = vrot.slane %v547, 2
        %v3839 = vsel %vm1964, %v3838, %v3837
        %v3840 = vrot.slane %v570, 1
        %v3841 = vsel %vm1967, %v3840, %v3839
        %v3842 = vsel %vm1970, %v593, %v3841
        %v3843 = vrot.slane %v616, 7
        %v3844 = vrot.slane %v639, 6
        %v3845 = vsel %vm1952, %v3844, %v3843
        %v3846 = vrot.slane %v662, 5
        %v3847 = vsel %vm1955, %v3846, %v3845
        %v3848 = vrot.slane %v685, 4
        %v3849 = vsel %vm1958, %v3848, %v3847
        %v3850 = vrot.slane %v708, 3
        %v3851 = vsel %vm1961, %v3850, %v3849
        %v3852 = vrot.slane %v731, 2
        %v3853 = vsel %vm1964, %v3852, %v3851
        %v3854 = vrot.slane %v754, 1
        %v3855 = vsel %vm1967, %v3854, %v3853
        %v3856 = vsel %vm1970, %v777, %v3855
        %v3857 = vrot.slane %v800, 7
        %v3858 = vrot.slane %v823, 6
        %v3859 = vsel %vm1952, %v3858, %v3857
        %v3860 = vrot.slane %v846, 5
        %v3861 = vsel %vm1955, %v3860, %v3859
        %v3862 = vrot.slane %v869, 4
        %v3863 = vsel %vm1958, %v3862, %v3861
        %v3864 = vrot.slane %v892, 3
        %v3865 = vsel %vm1961, %v3864, %v3863
        %v3866 = vrot.slane %v915, 2
        %v3867 = vsel %vm1964, %v3866, %v3865
        %v3868 = vrot.slane %v938, 1
        %v3869 = vsel %vm1967, %v3868, %v3867
        %v3870 = vsel %vm1970, %v961, %v3869
        %v3871 = vrot.slane %v984, 7
        %v3872 = vrot.slane %v1007, 6
        %v3873 = vsel %vm1952, %v3872, %v3871
        %v3874 = vrot.slane %v1030, 5
        %v3875 = vsel %vm1955, %v3874, %v3873
        %v3876 = vrot.slane %v1053, 4
        %v3877 = vsel %vm1958, %v3876, %v3875
        %v3878 = vrot.slane %v1076, 3
        %v3879 = vsel %vm1961, %v3878, %v3877
        %v3880 = vrot.slane %v1099, 2
        %v3881 = vsel %vm1964, %v3880, %v3879
        %v3882 = vrot.slane %v1122, 1
        %v3883 = vsel %vm1967, %v3882, %v3881
        %v3884 = vsel %vm1970, %v1145, %v3883
        %v3885 = vrot.slane %v1168, 7
        %v3886 = vrot.slane %v1191, 6
        %v3887 = vsel %vm1952, %v3886, %v3885
        %v3888 = vrot.slane %v1214, 5
        %v3889 = vsel %vm1955, %v3888, %v3887
        %v3890 = vrot.slane %v1237, 4
        %v3891 = vsel %vm1958, %v3890, %v3889
        %v3892 = vrot.slane %v1260, 3
        %v3893 = vsel %vm1961, %v3892, %v3891
        %v3894 = vrot.slane %v1283, 2
        %v3895 = vsel %vm1964, %v3894, %v3893
        %v3896 = vrot.slane %v1306, 1
        %v3897 = vsel %vm1967, %v3896, %v3895
        %v3898 = vsel %vm1970, %v1329, %v3897
        %v3899 = vrot.slane %v1352, 7
        %v3900 = vrot.slane %v1375, 6
        %v3901 = vsel %vm1952, %v3900, %v3899
        %v3902 = vrot.slane %v1398, 5
        %v3903 = vsel %vm1955, %v3902, %v3901
        %v3904 = vrot.slane %v1421, 4
        %v3905 = vsel %vm1958, %v3904, %v3903
        %v3906 = vrot.slane %v1444, 3
        %v3907 = vsel %vm1961, %v3906, %v3905
        %v3908 = vrot.slane %v1467, 2
        %v3909 = vsel %vm1964, %v3908, %v3907
        %v3910 = vrot.slane %v1490, 1
        %v3911 = vsel %vm1967, %v3910, %v3909
        %v3912 = vsel %vm1970, %v1513, %v3911
        %v3913 = vrot.slane %v1536, 7
        %v3914 = vrot.slane %v1559, 6
        %v3915 = vsel %vm1952, %v3914, %v3913
        %v3916 = vrot.slane %v1582, 5
        %v3917 = vsel %vm1955, %v3916, %v3915
        %v3918 = vrot.slane %v1605, 4
        %v3919 = vsel %vm1958, %v3918, %v3917
        %v3920 = vrot.slane %v1628, 3
        %v3921 = vsel %vm1961, %v3920, %v3919
        %v3922 = vrot.slane %v1651, 2
        %v3923 = vsel %vm1964, %v3922, %v3921
        %v3924 = vrot.slane %v1674, 1
        %v3925 = vsel %vm1967, %v3924, %v3923
        %v3926 = vsel %vm1970, %v1697, %v3925
        %v3927 = vrot.slane %v1720, 7
        %v3928 = vrot.slane %v1743, 6
        %v3929 = vsel %vm1952, %v3928, %v3927
        %v3930 = vrot.slane %v1766, 5
        %v3931 = vsel %vm1955, %v3930, %v3929
        %v3932 = vrot.slane %v1789, 4
        %v3933 = vsel %vm1958, %v3932, %v3931
        %v3934 = vrot.slane %v1812, 3
        %v3935 = vsel %vm1961, %v3934, %v3933
        %v3936 = vrot.slane %v1835, 2
        %v3937 = vsel %vm1964, %v3936, %v3935
        %v3938 = vrot.slane %v1858, 1
        %v3939 = vsel %vm1967, %v3938, %v3937
        %v3940 = vsel %vm1970, %v1881, %v3939
        %v3941 = vsel %vm407, %v3842, 0
        %v3943 = vsel %vm407, %v3856, 0
        %v3945 = vsel %vm407, %v3870, 0
        %v3947 = vsel %vm407, %v3884, 0
        %v3949 = vsel %vm407, %v3898, 0
        %v3951 = vsel %vm407, %v3912, 0
        %v3953 = vsel %vm407, %v3926, 0
        %v3955 = vsel %vm407, %v3940, 0
        %3957 = vmatpush.msra.mxu0 0.0
        %3958 = vmatpush.msra.mxu0 0.0
        %3959 = vmatpush.msra.mxu0 0.0
        %3960 = vmatpush.msra.mxu0 0.0
        %3961 = vmatpush.msra.mxu0 0.0
        %3962 = vmatpush.msra.mxu0 0.0
        %3963 = vmatpush.msra.mxu0 0.0
        %3964 = vmatpush.msra.mxu0 0.0
        %3965 = vmatpush.msra.mxu0 0.0
        %3966 = vmatpush.msra.mxu0 0.0
        %3967 = vmatpush.msra.mxu0 0.0
        %3968 = vmatpush.msra.mxu0 0.0
        %3969 = vmatpush.msra.mxu0 0.0
        %3970 = vmatpush.msra.mxu0 0.0
        %3971 = vmatpush.msra.mxu0 0.0
        %3972 = vmatpush.msra.mxu0 %v3828
        %3973 = vmatmul.f32.gmra.mxu0 %v3941
        %v3974 = vpop.f32.mrf.mxu0
        %v3975 = vadd.f32 0.0, %v3974
        %3976 = vmatmul.f32.gmra.mxu0 %v3943
        %v3977 = vpop.f32.mrf.mxu0
        %v3978 = vadd.f32 0.0, %v3977
        %3979 = vmatmul.f32.gmra.mxu0 %v3945
        %v3980 = vpop.f32.mrf.mxu0
        %v3981 = vadd.f32 0.0, %v3980
        %3982 = vmatmul.f32.gmra.mxu0 %v3947
        %v3983 = vpop.f32.mrf.mxu0
        %v3984 = vadd.f32 0.0, %v3983
        %3985 = vmatmul.f32.gmra.mxu0 %v3949
        %v3986 = vpop.f32.mrf.mxu0
        %v3987 = vadd.f32 0.0, %v3986
        %3988 = vmatmul.f32.gmra.mxu0 %v3951
        %v3989 = vpop.f32.mrf.mxu0
        %v3990 = vadd.f32 0.0, %v3989
        %3991 = vmatmul.f32.gmra.mxu0 %v3953
        %v3992 = vpop.f32.mrf.mxu0
        %v3993 = vadd.f32 0.0, %v3992
        %3994 = vmatmul.f32.gmra.mxu0 %v3955
        %v3995 = vpop.f32.mrf.mxu0
        %v3996 = vadd.f32 0.0, %v3995
        %3997 = vdwg.mxu0
        %4006 = vrot.lane.b32.xlu0 %v3975, 1
        %v4007 = vpop.permute.xlu0 %4006
        %4008 = vrot.lane.b32.xlu0 %v3978, 1
        %v4009 = vpop.permute.xlu0 %4008
        %4010 = vrot.lane.b32.xlu0 %v3981, 1
        %v4011 = vpop.permute.xlu0 %4010
        %4012 = vrot.lane.b32.xlu0 %v3984, 1
        %v4013 = vpop.permute.xlu0 %4012
        %4014 = vrot.lane.b32.xlu0 %v3987, 1
        %v4015 = vpop.permute.xlu0 %4014
        %4016 = vrot.lane.b32.xlu0 %v3990, 1
        %v4017 = vpop.permute.xlu0 %4016
        %4018 = vrot.lane.b32.xlu0 %v3993, 1
        %v4019 = vpop.permute.xlu0 %4018
        %4020 = vrot.lane.b32.xlu0 %v3996, 1
        %v4021 = vpop.permute.xlu0 %4020
        %v4030 = vsel %vm2159, 0.0, %v4007
        %v4031 = vsel %vm2159, 0.0, %v4009
        %v4032 = vsel %vm2159, 0.0, %v4011
        %v4033 = vsel %vm2159, 0.0, %v4013
        %v4034 = vsel %vm2159, 0.0, %v4015
        %v4035 = vsel %vm2159, 0.0, %v4017
        %v4036 = vsel %vm2159, 0.0, %v4019
        %v4037 = vsel %vm2159, 0.0, %v4021
        %v4038 = vsel %vm2168, %v4030, 0.0
        %v4039 = vsel %vm2168, %v4031, 0.0
        %v4040 = vsel %vm2168, %v4032, 0.0
        %v4041 = vsel %vm2168, %v4033, 0.0
        %v4042 = vsel %vm2168, %v4034, 0.0
        %v4043 = vsel %vm2168, %v4035, 0.0
        %v4044 = vsel %vm2168, %v4036, 0.0
        %v4045 = vsel %vm2168, %v4037, 0.0
        %v4046 = vpack.c.bf16 %v4038, %v4038
        %v4047 = vpack.c.bf16 %v4039, %v4039
        %v4048 = vpack.c.bf16 %v4040, %v4040
        %v4049 = vpack.c.bf16 %v4041, %v4041
        %v4050 = vpack.c.bf16 %v4042, %v4042
        %v4051 = vpack.c.bf16 %v4043, %v4043
        %v4052 = vpack.c.bf16 %v4044, %v4044
        %v4053 = vpack.c.bf16 %v4045, %v4045
        %4062 = vrot.lane.b32.xlu0 %v4046, 127
        %v4063 = vpop.permute.xlu0 %4062
        %4064 = vrot.lane.b32.xlu0 %v4047, 127
        %v4065 = vpop.permute.xlu0 %4064
        %4066 = vrot.lane.b32.xlu0 %v4048, 127
        %v4067 = vpop.permute.xlu0 %4066
        %4068 = vrot.lane.b32.xlu0 %v4049, 127
        %v4069 = vpop.permute.xlu0 %4068
        %4070 = vrot.lane.b32.xlu0 %v4050, 127
        %v4071 = vpop.permute.xlu0 %4070
        %4072 = vrot.lane.b32.xlu0 %v4051, 127
        %v4073 = vpop.permute.xlu0 %4072
        %4074 = vrot.lane.b32.xlu0 %v4052, 127
        %v4075 = vpop.permute.xlu0 %4074
        %4076 = vrot.lane.b32.xlu0 %v4053, 127
        %v4077 = vpop.permute.xlu0 %4076
        %v4078 = vrot.slane %v4063, 4
        %v4079 = vrot.slane %v4065, 4
        %v4080 = vrot.slane %v4067, 4
        %v4081 = vrot.slane %v4069, 4
        %v4082 = vrot.slane %v4071, 4
        %v4083 = vrot.slane %v4073, 4
        %v4084 = vrot.slane %v4075, 4
        %v4085 = vrot.slane %v4077, 4
        %vm4086 = vcmask 1039360
        %v4087 = vsel %vm4086, %v4078, %v4063
        %v4088 = vsel %vm4086, %v4079, %v4065
        %v4089 = vsel %vm4086, %v4080, %v4067
        %v4090 = vsel %vm4086, %v4081, %v4069
        %v4091 = vsel %vm4086, %v4082, %v4071
        %v4092 = vsel %vm4086, %v4083, %v4073
        %v4093 = vsel %vm4086, %v4084, %v4075
        %v4094 = vsel %vm4086, %v4085, %v4077
        %vm4103 = vcmask 1044472
        %vm4104 = vcmask 138244
        %vm4105 = vmor %vm4104, %vm4103
        %4106 = vst.msk [vmem:[#allocation2] sm:$0xff] %vm4105, %v4087
        %4107 = vst.msk [vmem:[#allocation2 + $0x8] sm:$0xff] %vm4105, %v4088
        %4108 = vst.msk [vmem:[#allocation2 + $0x10] sm:$0xff] %vm4105, %v4089
        %4109 = vst.msk [vmem:[#allocation2 + $0x18] sm:$0xff] %vm4105, %v4090
        %4110 = vst.msk [vmem:[#allocation2 + $0x20] sm:$0xff] %vm4105, %v4091
        %4111 = vst.msk [vmem:[#allocation2 + $0x28] sm:$0xff] %vm4105, %v4092
        %4112 = vst.msk [vmem:[#allocation2 + $0x30] sm:$0xff] %vm4105, %v4093
        %4113 = vst.msk [vmem:[#allocation2 + $0x38] sm:$0xff] %vm4105, %v4094
        %v4114 = vld [vmem:[%s2] sm:$0xff]
        %v4179 = vrot.slane %v458, 7
        %v4180 = vsel %vm1952, %v4179, %v435
        %v4181 = vrot.slane %v481, 6
        %v4182 = vsel %vm1955, %v4181, %v4180
        %v4183 = vrot.slane %v504, 5
        %v4184 = vsel %vm1958, %v4183, %v4182
        %v4185 = vrot.slane %v527, 4
        %v4186 = vsel %vm1961, %v4185, %v4184
        %v4187 = vrot.slane %v550, 3
        %v4188 = vsel %vm1964, %v4187, %v4186
        %v4189 = vrot.slane %v573, 2
        %v4190 = vsel %vm1967, %v4189, %v4188
        %v4191 = vrot.slane %v596, 1
        %v4192 = vsel %vm1970, %v4191, %v4190
        %v4193 = vrot.slane %v642, 7
        %v4194 = vsel %vm1952, %v4193, %v619
        %v4195 = vrot.slane %v665, 6
        %v4196 = vsel %vm1955, %v4195, %v4194
        %v4197 = vrot.slane %v688, 5
        %v4198 = vsel %vm1958, %v4197, %v4196
        %v4199 = vrot.slane %v711, 4
        %v4200 = vsel %vm1961, %v4199, %v4198
        %v4201 = vrot.slane %v734, 3
        %v4202 = vsel %vm1964, %v4201, %v4200
        %v4203 = vrot.slane %v757, 2
        %v4204 = vsel %vm1967, %v4203, %v4202
        %v4205 = vrot.slane %v780, 1
        %v4206 = vsel %vm1970, %v4205, %v4204
        %v4207 = vrot.slane %v826, 7
        %v4208 = vsel %vm1952, %v4207, %v803
        %v4209 = vrot.slane %v849, 6
        %v4210 = vsel %vm1955, %v4209, %v4208
        %v4211 = vrot.slane %v872, 5
        %v4212 = vsel %vm1958, %v4211, %v4210
        %v4213 = vrot.slane %v895, 4
        %v4214 = vsel %vm1961, %v4213, %v4212
        %v4215 = vrot.slane %v918, 3
        %v4216 = vsel %vm1964, %v4215, %v4214
        %v4217 = vrot.slane %v941, 2
        %v4218 = vsel %vm1967, %v4217, %v4216
        %v4219 = vrot.slane %v964, 1
        %v4220 = vsel %vm1970, %v4219, %v4218
        %v4221 = vrot.slane %v1010, 7
        %v4222 = vsel %vm1952, %v4221, %v987
        %v4223 = vrot.slane %v1033, 6
        %v4224 = vsel %vm1955, %v4223, %v4222
        %v4225 = vrot.slane %v1056, 5
        %v4226 = vsel %vm1958, %v4225, %v4224
        %v4227 = vrot.slane %v1079, 4
        %v4228 = vsel %vm1961, %v4227, %v4226
        %v4229 = vrot.slane %v1102, 3
        %v4230 = vsel %vm1964, %v4229, %v4228
        %v4231 = vrot.slane %v1125, 2
        %v4232 = vsel %vm1967, %v4231, %v4230
        %v4233 = vrot.slane %v1148, 1
        %v4234 = vsel %vm1970, %v4233, %v4232
        %v4235 = vrot.slane %v1194, 7
        %v4236 = vsel %vm1952, %v4235, %v1171
        %v4237 = vrot.slane %v1217, 6
        %v4238 = vsel %vm1955, %v4237, %v4236
        %v4239 = vrot.slane %v1240, 5
        %v4240 = vsel %vm1958, %v4239, %v4238
        %v4241 = vrot.slane %v1263, 4
        %v4242 = vsel %vm1961, %v4241, %v4240
        %v4243 = vrot.slane %v1286, 3
        %v4244 = vsel %vm1964, %v4243, %v4242
        %v4245 = vrot.slane %v1309, 2
        %v4246 = vsel %vm1967, %v4245, %v4244
        %v4247 = vrot.slane %v1332, 1
        %v4248 = vsel %vm1970, %v4247, %v4246
        %v4249 = vrot.slane %v1378, 7
        %v4250 = vsel %vm1952, %v4249, %v1355
        %v4251 = vrot.slane %v1401, 6
        %v4252 = vsel %vm1955, %v4251, %v4250
        %v4253 = vrot.slane %v1424, 5
        %v4254 = vsel %vm1958, %v4253, %v4252
        %v4255 = vrot.slane %v1447, 4
        %v4256 = vsel %vm1961, %v4255, %v4254
        %v4257 = vrot.slane %v1470, 3
        %v4258 = vsel %vm1964, %v4257, %v4256
        %v4259 = vrot.slane %v1493, 2
        %v4260 = vsel %vm1967, %v4259, %v4258
        %v4261 = vrot.slane %v1516, 1
        %v4262 = vsel %vm1970, %v4261, %v4260
        %v4263 = vrot.slane %v1562, 7
        %v4264 = vsel %vm1952, %v4263, %v1539
        %v4265 = vrot.slane %v1585, 6
        %v4266 = vsel %vm1955, %v4265, %v4264
        %v4267 = vrot.slane %v1608, 5
        %v4268 = vsel %vm1958, %v4267, %v4266
        %v4269 = vrot.slane %v1631, 4
        %v4270 = vsel %vm1961, %v4269, %v4268
        %v4271 = vrot.slane %v1654, 3
        %v4272 = vsel %vm1964, %v4271, %v4270
        %v4273 = vrot.slane %v1677, 2
        %v4274 = vsel %vm1967, %v4273, %v4272
        %v4275 = vrot.slane %v1700, 1
        %v4276 = vsel %vm1970, %v4275, %v4274
        %v4277 = vrot.slane %v1746, 7
        %v4278 = vsel %vm1952, %v4277, %v1723
        %v4279 = vrot.slane %v1769, 6
        %v4280 = vsel %vm1955, %v4279, %v4278
        %v4281 = vrot.slane %v1792, 5
        %v4282 = vsel %vm1958, %v4281, %v4280
        %v4283 = vrot.slane %v1815, 4
        %v4284 = vsel %vm1961, %v4283, %v4282
        %v4285 = vrot.slane %v1838, 3
        %v4286 = vsel %vm1964, %v4285, %v4284
        %v4287 = vrot.slane %v1861, 2
        %v4288 = vsel %vm1967, %v4287, %v4286
        %v4289 = vrot.slane %v1884, 1
        %v4290 = vsel %vm1970, %v4289, %v4288
        %v4291 = vsel %vm407, %v4192, 0
        %v4293 = vsel %vm407, %v4206, 0
        %v4295 = vsel %vm407, %v4220, 0
        %v4297 = vsel %vm407, %v4234, 0
        %v4299 = vsel %vm407, %v4248, 0
        %v4301 = vsel %vm407, %v4262, 0
        %v4303 = vsel %vm407, %v4276, 0
        %v4305 = vsel %vm407, %v4290, 0
        %4307 = vmatpush.msra.mxu0 0.0
        %4308 = vmatpush.msra.mxu0 0.0
        %4309 = vmatpush.msra.mxu0 0.0
        %4310 = vmatpush.msra.mxu0 0.0
        %4311 = vmatpush.msra.mxu0 0.0
        %4312 = vmatpush.msra.mxu0 0.0
        %4313 = vmatpush.msra.mxu0 0.0
        %4314 = vmatpush.msra.mxu0 0.0
        %4315 = vmatpush.msra.mxu0 0.0
        %4316 = vmatpush.msra.mxu0 0.0
        %4317 = vmatpush.msra.mxu0 0.0
        %4318 = vmatpush.msra.mxu0 0.0
        %4319 = vmatpush.msra.mxu0 0.0
        %4320 = vmatpush.msra.mxu0 0.0
        %4321 = vmatpush.msra.mxu0 0.0
        %4322 = vmatpush.msra.mxu0 %v4114
        %4323 = vmatmul.f32.gmra.mxu0 %v4291
        %v4324 = vpop.f32.mrf.mxu0
        %v4325 = vadd.f32 0.0, %v4324
        %4326 = vmatmul.f32.gmra.mxu0 %v4293
        %v4327 = vpop.f32.mrf.mxu0
        %v4328 = vadd.f32 0.0, %v4327
        %4329 = vmatmul.f32.gmra.mxu0 %v4295
        %v4330 = vpop.f32.mrf.mxu0
        %v4331 = vadd.f32 0.0, %v4330
        %4332 = vmatmul.f32.gmra.mxu0 %v4297
        %v4333 = vpop.f32.mrf.mxu0
        %v4334 = vadd.f32 0.0, %v4333
        %4335 = vmatmul.f32.gmra.mxu0 %v4299
        %v4336 = vpop.f32.mrf.mxu0
        %v4337 = vadd.f32 0.0, %v4336
        %4338 = vmatmul.f32.gmra.mxu0 %v4301
        %v4339 = vpop.f32.mrf.mxu0
        %v4340 = vadd.f32 0.0, %v4339
        %4341 = vmatmul.f32.gmra.mxu0 %v4303
        %v4342 = vpop.f32.mrf.mxu0
        %v4343 = vadd.f32 0.0, %v4342
        %4344 = vmatmul.f32.gmra.mxu0 %v4305
        %v4345 = vpop.f32.mrf.mxu0
        %v4346 = vadd.f32 0.0, %v4345
        %4347 = vdwg.mxu0
        %4356 = vrot.lane.b32.xlu0 %v4325, 1
        %v4357 = vpop.permute.xlu0 %4356
        %4358 = vrot.lane.b32.xlu0 %v4328, 1
        %v4359 = vpop.permute.xlu0 %4358
        %4360 = vrot.lane.b32.xlu0 %v4331, 1
        %v4361 = vpop.permute.xlu0 %4360
        %4362 = vrot.lane.b32.xlu0 %v4334, 1
        %v4363 = vpop.permute.xlu0 %4362
        %4364 = vrot.lane.b32.xlu0 %v4337, 1
        %v4365 = vpop.permute.xlu0 %4364
        %4366 = vrot.lane.b32.xlu0 %v4340, 1
        %v4367 = vpop.permute.xlu0 %4366
        %4368 = vrot.lane.b32.xlu0 %v4343, 1
        %v4369 = vpop.permute.xlu0 %4368
        %4370 = vrot.lane.b32.xlu0 %v4346, 1
        %v4371 = vpop.permute.xlu0 %4370
        %v4380 = vsel %vm2159, 0.0, %v4357
        %v4381 = vsel %vm2159, 0.0, %v4359
        %v4382 = vsel %vm2159, 0.0, %v4361
        %v4383 = vsel %vm2159, 0.0, %v4363
        %v4384 = vsel %vm2159, 0.0, %v4365
        %v4385 = vsel %vm2159, 0.0, %v4367
        %v4386 = vsel %vm2159, 0.0, %v4369
        %v4387 = vsel %vm2159, 0.0, %v4371
        %v4388 = vsel %vm2168, %v4380, 0.0
        %v4389 = vsel %vm2168, %v4381, 0.0
        %v4390 = vsel %vm2168, %v4382, 0.0
        %v4391 = vsel %vm2168, %v4383, 0.0
        %v4392 = vsel %vm2168, %v4384, 0.0
        %v4393 = vsel %vm2168, %v4385, 0.0
        %v4394 = vsel %vm2168, %v4386, 0.0
        %v4395 = vsel %vm2168, %v4387, 0.0
        %v4396 = vpack.c.bf16 %v4388, %v4388
        %v4397 = vpack.c.bf16 %v4389, %v4389
        %v4398 = vpack.c.bf16 %v4390, %v4390
        %v4399 = vpack.c.bf16 %v4391, %v4391
        %v4400 = vpack.c.bf16 %v4392, %v4392
        %v4401 = vpack.c.bf16 %v4393, %v4393
        %v4402 = vpack.c.bf16 %v4394, %v4394
        %v4403 = vpack.c.bf16 %v4395, %v4395
        %4412 = vrot.lane.b32.xlu0 %v4396, 17
        %v4413 = vpop.permute.xlu0 %4412
        %4414 = vrot.lane.b32.xlu0 %v4397, 17
        %v4415 = vpop.permute.xlu0 %4414
        %4416 = vrot.lane.b32.xlu0 %v4398, 17
        %v4417 = vpop.permute.xlu0 %4416
        %4418 = vrot.lane.b32.xlu0 %v4399, 17
        %v4419 = vpop.permute.xlu0 %4418
        %4420 = vrot.lane.b32.xlu0 %v4400, 17
        %v4421 = vpop.permute.xlu0 %4420
        %4422 = vrot.lane.b32.xlu0 %v4401, 17
        %v4423 = vpop.permute.xlu0 %4422
        %4424 = vrot.lane.b32.xlu0 %v4402, 17
        %v4425 = vpop.permute.xlu0 %4424
        %4426 = vrot.lane.b32.xlu0 %v4403, 17
        %v4427 = vpop.permute.xlu0 %4426
        %vm4436 = vcmask 281736
        %4437 = vst.msk [vmem:[#allocation2 + $0x4] sm:$0xf] %vm4436, %v4413
        %4438 = vst.msk [vmem:[#allocation2 + $0xc] sm:$0xf] %vm4436, %v4415
        %4439 = vst.msk [vmem:[#allocation2 + $0x14] sm:$0xf] %vm4436, %v4417
        %4440 = vst.msk [vmem:[#allocation2 + $0x1c] sm:$0xf] %vm4436, %v4419
        %4441 = vst.msk [vmem:[#allocation2 + $0x24] sm:$0xf] %vm4436, %v4421
        %4442 = vst.msk [vmem:[#allocation2 + $0x2c] sm:$0xf] %vm4436, %v4423
        %4443 = vst.msk [vmem:[#allocation2 + $0x34] sm:$0xf] %vm4436, %v4425
        %4444 = vst.msk [vmem:[#allocation2 + $0x3c] sm:$0xf] %vm4436, %v4427
        %v4445 = vld [vmem:[%s2] sm:$0xff]
        %v4446 = vrot.slane %v435, 1
        %v4447 = vsel %vm1952, %v458, %v4446
        %v4448 = vrot.slane %v481, 7
        %v4449 = vsel %vm1955, %v4448, %v4447
        %v4450 = vrot.slane %v504, 6
        %v4451 = vsel %vm1958, %v4450, %v4449
        %v4452 = vrot.slane %v527, 5
        %v4453 = vsel %vm1961, %v4452, %v4451
        %v4454 = vrot.slane %v550, 4
        %v4455 = vsel %vm1964, %v4454, %v4453
        %v4456 = vrot.slane %v573, 3
        %v4457 = vsel %vm1967, %v4456, %v4455
        %v4458 = vrot.slane %v596, 2
        %v4459 = vsel %vm1970, %v4458, %v4457
        %v4460 = vrot.slane %v619, 1
        %v4461 = vsel %vm1952, %v642, %v4460
        %v4462 = vrot.slane %v665, 7
        %v4463 = vsel %vm1955, %v4462, %v4461
        %v4464 = vrot.slane %v688, 6
        %v4465 = vsel %vm1958, %v4464, %v4463
        %v4466 = vrot.slane %v711, 5
        %v4467 = vsel %vm1961, %v4466, %v4465
        %v4468 = vrot.slane %v734, 4
        %v4469 = vsel %vm1964, %v4468, %v4467
        %v4470 = vrot.slane %v757, 3
        %v4471 = vsel %vm1967, %v4470, %v4469
        %v4472 = vrot.slane %v780, 2
        %v4473 = vsel %vm1970, %v4472, %v4471
        %v4474 = vrot.slane %v803, 1
        %v4475 = vsel %vm1952, %v826, %v4474
        %v4476 = vrot.slane %v849, 7
        %v4477 = vsel %vm1955, %v4476, %v4475
        %v4478 = vrot.slane %v872, 6
        %v4479 = vsel %vm1958, %v4478, %v4477
        %v4480 = vrot.slane %v895, 5
        %v4481 = vsel %vm1961, %v4480, %v4479
        %v4482 = vrot.slane %v918, 4
        %v4483 = vsel %vm1964, %v4482, %v4481
        %v4484 = vrot.slane %v941, 3
        %v4485 = vsel %vm1967, %v4484, %v4483
        %v4486 = vrot.slane %v964, 2
        %v4487 = vsel %vm1970, %v4486, %v4485
        %v4488 = vrot.slane %v987, 1
        %v4489 = vsel %vm1952, %v1010, %v4488
        %v4490 = vrot.slane %v1033, 7
        %v4491 = vsel %vm1955, %v4490, %v4489
        %v4492 = vrot.slane %v1056, 6
        %v4493 = vsel %vm1958, %v4492, %v4491
        %v4494 = vrot.slane %v1079, 5
        %v4495 = vsel %vm1961, %v4494, %v4493
        %v4496 = vrot.slane %v1102, 4
        %v4497 = vsel %vm1964, %v4496, %v4495
        %v4498 = vrot.slane %v1125, 3
        %v4499 = vsel %vm1967, %v4498, %v4497
        %v4500 = vrot.slane %v1148, 2
        %v4501 = vsel %vm1970, %v4500, %v4499
        %v4502 = vrot.slane %v1171, 1
        %v4503 = vsel %vm1952, %v1194, %v4502
        %v4504 = vrot.slane %v1217, 7
        %v4505 = vsel %vm1955, %v4504, %v4503
        %v4506 = vrot.slane %v1240, 6
        %v4507 = vsel %vm1958, %v4506, %v4505
        %v4508 = vrot.slane %v1263, 5
        %v4509 = vsel %vm1961, %v4508, %v4507
        %v4510 = vrot.slane %v1286, 4
        %v4511 = vsel %vm1964, %v4510, %v4509
        %v4512 = vrot.slane %v1309, 3
        %v4513 = vsel %vm1967, %v4512, %v4511
        %v4514 = vrot.slane %v1332, 2
        %v4515 = vsel %vm1970, %v4514, %v4513
        %v4516 = vrot.slane %v1355, 1
        %v4517 = vsel %vm1952, %v1378, %v4516
        %v4518 = vrot.slane %v1401, 7
        %v4519 = vsel %vm1955, %v4518, %v4517
        %v4520 = vrot.slane %v1424, 6
        %v4521 = vsel %vm1958, %v4520, %v4519
        %v4522 = vrot.slane %v1447, 5
        %v4523 = vsel %vm1961, %v4522, %v4521
        %v4524 = vrot.slane %v1470, 4
        %v4525 = vsel %vm1964, %v4524, %v4523
        %v4526 = vrot.slane %v1493, 3
        %v4527 = vsel %vm1967, %v4526, %v4525
        %v4528 = vrot.slane %v1516, 2
        %v4529 = vsel %vm1970, %v4528, %v4527
        %v4530 = vrot.slane %v1539, 1
        %v4531 = vsel %vm1952, %v1562, %v4530
        %v4532 = vrot.slane %v1585, 7
        %v4533 = vsel %vm1955, %v4532, %v4531
        %v4534 = vrot.slane %v1608, 6
        %v4535 = vsel %vm1958, %v4534, %v4533
        %v4536 = vrot.slane %v1631, 5
        %v4537 = vsel %vm1961, %v4536, %v4535
        %v4538 = vrot.slane %v1654, 4
        %v4539 = vsel %vm1964, %v4538, %v4537
        %v4540 = vrot.slane %v1677, 3
        %v4541 = vsel %vm1967, %v4540, %v4539
        %v4542 = vrot.slane %v1700, 2
        %v4543 = vsel %vm1970, %v4542, %v4541
        %v4544 = vrot.slane %v1723, 1
        %v4545 = vsel %vm1952, %v1746, %v4544
        %v4546 = vrot.slane %v1769, 7
        %v4547 = vsel %vm1955, %v4546, %v4545
        %v4548 = vrot.slane %v1792, 6
        %v4549 = vsel %vm1958, %v4548, %v4547
        %v4550 = vrot.slane %v1815, 5
        %v4551 = vsel %vm1961, %v4550, %v4549
        %v4552 = vrot.slane %v1838, 4
        %v4553 = vsel %vm1964, %v4552, %v4551
        %v4554 = vrot.slane %v1861, 3
        %v4555 = vsel %vm1967, %v4554, %v4553
        %v4556 = vrot.slane %v1884, 2
        %v4557 = vsel %vm1970, %v4556, %v4555
        %v4558 = vsel %vm407, %v4459, 0
        %v4560 = vsel %vm407, %v4473, 0
        %v4562 = vsel %vm407, %v4487, 0
        %v4564 = vsel %vm407, %v4501, 0
        %v4566 = vsel %vm407, %v4515, 0
        %v4568 = vsel %vm407, %v4529, 0
        %v4570 = vsel %vm407, %v4543, 0
        %v4572 = vsel %vm407, %v4557, 0
        %4574 = vmatpush.msra.mxu0 0.0
        %4575 = vmatpush.msra.mxu0 0.0
        %4576 = vmatpush.msra.mxu0 0.0
        %4577 = vmatpush.msra.mxu0 0.0
        %4578 = vmatpush.msra.mxu0 0.0
        %4579 = vmatpush.msra.mxu0 0.0
        %4580 = vmatpush.msra.mxu0 0.0
        %4581 = vmatpush.msra.mxu0 0.0
        %4582 = vmatpush.msra.mxu0 0.0
        %4583 = vmatpush.msra.mxu0 0.0
        %4584 = vmatpush.msra.mxu0 0.0
        %4585 = vmatpush.msra.mxu0 0.0
        %4586 = vmatpush.msra.mxu0 0.0
        %4587 = vmatpush.msra.mxu0 0.0
        %4588 = vmatpush.msra.mxu0 0.0
        %4589 = vmatpush.msra.mxu0 %v4445
        %4590 = vmatmul.f32.gmra.mxu0 %v4558
        %v4591 = vpop.f32.mrf.mxu0
        %v4592 = vadd.f32 0.0, %v4591
        %4593 = vmatmul.f32.gmra.mxu0 %v4560
        %v4594 = vpop.f32.mrf.mxu0
        %v4595 = vadd.f32 0.0, %v4594
        %4596 = vmatmul.f32.gmra.mxu0 %v4562
        %v4597 = vpop.f32.mrf.mxu0
        %v4598 = vadd.f32 0.0, %v4597
        %4599 = vmatmul.f32.gmra.mxu0 %v4564
        %v4600 = vpop.f32.mrf.mxu0
        %v4601 = vadd.f32 0.0, %v4600
        %4602 = vmatmul.f32.gmra.mxu0 %v4566
        %v4603 = vpop.f32.mrf.mxu0
        %v4604 = vadd.f32 0.0, %v4603
        %4605 = vmatmul.f32.gmra.mxu0 %v4568
        %v4606 = vpop.f32.mrf.mxu0
        %v4607 = vadd.f32 0.0, %v4606
        %4608 = vmatmul.f32.gmra.mxu0 %v4570
        %v4609 = vpop.f32.mrf.mxu0
        %v4610 = vadd.f32 0.0, %v4609
        %4611 = vmatmul.f32.gmra.mxu0 %v4572
        %v4612 = vpop.f32.mrf.mxu0
        %v4613 = vadd.f32 0.0, %v4612
        %4614 = vdwg.mxu0
        %4623 = vrot.lane.b32.xlu0 %v4592, 1
        %v4624 = vpop.permute.xlu0 %4623
        %4625 = vrot.lane.b32.xlu0 %v4595, 1
        %v4626 = vpop.permute.xlu0 %4625
        %4627 = vrot.lane.b32.xlu0 %v4598, 1
        %v4628 = vpop.permute.xlu0 %4627
        %4629 = vrot.lane.b32.xlu0 %v4601, 1
        %v4630 = vpop.permute.xlu0 %4629
        %4631 = vrot.lane.b32.xlu0 %v4604, 1
        %v4632 = vpop.permute.xlu0 %4631
        %4633 = vrot.lane.b32.xlu0 %v4607, 1
        %v4634 = vpop.permute.xlu0 %4633
        %4635 = vrot.lane.b32.xlu0 %v4610, 1
        %v4636 = vpop.permute.xlu0 %4635
        %4637 = vrot.lane.b32.xlu0 %v4613, 1
        %v4638 = vpop.permute.xlu0 %4637
        %v4647 = vsel %vm2159, 0.0, %v4624
        %v4648 = vsel %vm2159, 0.0, %v4626
        %v4649 = vsel %vm2159, 0.0, %v4628
        %v4650 = vsel %vm2159, 0.0, %v4630
        %v4651 = vsel %vm2159, 0.0, %v4632
        %v4652 = vsel %vm2159, 0.0, %v4634
        %v4653 = vsel %vm2159, 0.0, %v4636
        %v4654 = vsel %vm2159, 0.0, %v4638
        %v4655 = vsel %vm2168, %v4647, 0.0
        %v4656 = vsel %vm2168, %v4648, 0.0
        %v4657 = vsel %vm2168, %v4649, 0.0
        %v4658 = vsel %vm2168, %v4650, 0.0
        %v4659 = vsel %vm2168, %v4651, 0.0
        %v4660 = vsel %vm2168, %v4652, 0.0
        %v4661 = vsel %vm2168, %v4653, 0.0
        %v4662 = vsel %vm2168, %v4654, 0.0
        %v4663 = vpack.c.bf16 %v4655, %v4655
        %v4664 = vpack.c.bf16 %v4656, %v4656
        %v4665 = vpack.c.bf16 %v4657, %v4657
        %v4666 = vpack.c.bf16 %v4658, %v4658
        %v4667 = vpack.c.bf16 %v4659, %v4659
        %v4668 = vpack.c.bf16 %v4660, %v4660
        %v4669 = vpack.c.bf16 %v4661, %v4661
        %v4670 = vpack.c.bf16 %v4662, %v4662
        %4679 = vrot.lane.b32.xlu0 %v4663, 35
        %v4680 = vpop.permute.xlu0 %4679
        %4681 = vrot.lane.b32.xlu0 %v4664, 35
        %v4682 = vpop.permute.xlu0 %4681
        %4683 = vrot.lane.b32.xlu0 %v4665, 35
        %v4684 = vpop.permute.xlu0 %4683
        %4685 = vrot.lane.b32.xlu0 %v4666, 35
        %v4686 = vpop.permute.xlu0 %4685
        %4687 = vrot.lane.b32.xlu0 %v4667, 35
        %v4688 = vpop.permute.xlu0 %4687
        %4689 = vrot.lane.b32.xlu0 %v4668, 35
        %v4690 = vpop.permute.xlu0 %4689
        %4691 = vrot.lane.b32.xlu0 %v4669, 35
        %v4692 = vpop.permute.xlu0 %4691
        %4693 = vrot.lane.b32.xlu0 %v4670, 35
        %v4694 = vpop.permute.xlu0 %4693
        %vm4703 = vcmask 429336
        %4704 = vst.msk [vmem:[#allocation2 + $0x4] sm:$0xf] %vm4703, %v4680
        %4705 = vst.msk [vmem:[#allocation2 + $0xc] sm:$0xf] %vm4703, %v4682
        %4706 = vst.msk [vmem:[#allocation2 + $0x14] sm:$0xf] %vm4703, %v4684
        %4707 = vst.msk [vmem:[#allocation2 + $0x1c] sm:$0xf] %vm4703, %v4686
        %4708 = vst.msk [vmem:[#allocation2 + $0x24] sm:$0xf] %vm4703, %v4688
        %4709 = vst.msk [vmem:[#allocation2 + $0x2c] sm:$0xf] %vm4703, %v4690
        %4710 = vst.msk [vmem:[#allocation2 + $0x34] sm:$0xf] %vm4703, %v4692
        %4711 = vst.msk [vmem:[#allocation2 + $0x3c] sm:$0xf] %vm4703, %v4694
        %v4712 = vld [vmem:[%s2] sm:$0xff]
        %v4713 = vrot.slane %v435, 2
        %v4714 = vrot.slane %v458, 1
        %v4715 = vsel %vm1952, %v4714, %v4713
        %v4716 = vsel %vm1955, %v481, %v4715
        %v4717 = vrot.slane %v504, 7
        %v4718 = vsel %vm1958, %v4717, %v4716
        %v4719 = vrot.slane %v527, 6
        %v4720 = vsel %vm1961, %v4719, %v4718
        %v4721 = vrot.slane %v550, 5
        %v4722 = vsel %vm1964, %v4721, %v4720
        %v4723 = vrot.slane %v573, 4
        %v4724 = vsel %vm1967, %v4723, %v4722
        %v4725 = vrot.slane %v596, 3
        %v4726 = vsel %vm1970, %v4725, %v4724
        %v4727 = vrot.slane %v619, 2
        %v4728 = vrot.slane %v642, 1
        %v4729 = vsel %vm1952, %v4728, %v4727
        %v4730 = vsel %vm1955, %v665, %v4729
        %v4731 = vrot.slane %v688, 7
        %v4732 = vsel %vm1958, %v4731, %v4730
        %v4733 = vrot.slane %v711, 6
        %v4734 = vsel %vm1961, %v4733, %v4732
        %v4735 = vrot.slane %v734, 5
        %v4736 = vsel %vm1964, %v4735, %v4734
        %v4737 = vrot.slane %v757, 4
        %v4738 = vsel %vm1967, %v4737, %v4736
        %v4739 = vrot.slane %v780, 3
        %v4740 = vsel %vm1970, %v4739, %v4738
        %v4741 = vrot.slane %v803, 2
        %v4742 = vrot.slane %v826, 1
        %v4743 = vsel %vm1952, %v4742, %v4741
        %v4744 = vsel %vm1955, %v849, %v4743
        %v4745 = vrot.slane %v872, 7
        %v4746 = vsel %vm1958, %v4745, %v4744
        %v4747 = vrot.slane %v895, 6
        %v4748 = vsel %vm1961, %v4747, %v4746
        %v4749 = vrot.slane %v918, 5
        %v4750 = vsel %vm1964, %v4749, %v4748
        %v4751 = vrot.slane %v941, 4
        %v4752 = vsel %vm1967, %v4751, %v4750
        %v4753 = vrot.slane %v964, 3
        %v4754 = vsel %vm1970, %v4753, %v4752
        %v4755 = vrot.slane %v987, 2
        %v4756 = vrot.slane %v1010, 1
        %v4757 = vsel %vm1952, %v4756, %v4755
        %v4758 = vsel %vm1955, %v1033, %v4757
        %v4759 = vrot.slane %v1056, 7
        %v4760 = vsel %vm1958, %v4759, %v4758
        %v4761 = vrot.slane %v1079, 6
        %v4762 = vsel %vm1961, %v4761, %v4760
        %v4763 = vrot.slane %v1102, 5
        %v4764 = vsel %vm1964, %v4763, %v4762
        %v4765 = vrot.slane %v1125, 4
        %v4766 = vsel %vm1967, %v4765, %v4764
        %v4767 = vrot.slane %v1148, 3
        %v4768 = vsel %vm1970, %v4767, %v4766
        %v4769 = vrot.slane %v1171, 2
        %v4770 = vrot.slane %v1194, 1
        %v4771 = vsel %vm1952, %v4770, %v4769
        %v4772 = vsel %vm1955, %v1217, %v4771
        %v4773 = vrot.slane %v1240, 7
        %v4774 = vsel %vm1958, %v4773, %v4772
        %v4775 = vrot.slane %v1263, 6
        %v4776 = vsel %vm1961, %v4775, %v4774
        %v4777 = vrot.slane %v1286, 5
        %v4778 = vsel %vm1964, %v4777, %v4776
        %v4779 = vrot.slane %v1309, 4
        %v4780 = vsel %vm1967, %v4779, %v4778
        %v4781 = vrot.slane %v1332, 3
        %v4782 = vsel %vm1970, %v4781, %v4780
        %v4783 = vrot.slane %v1355, 2
        %v4784 = vrot.slane %v1378, 1
        %v4785 = vsel %vm1952, %v4784, %v4783
        %v4786 = vsel %vm1955, %v1401, %v4785
        %v4787 = vrot.slane %v1424, 7
        %v4788 = vsel %vm1958, %v4787, %v4786
        %v4789 = vrot.slane %v1447, 6
        %v4790 = vsel %vm1961, %v4789, %v4788
        %v4791 = vrot.slane %v1470, 5
        %v4792 = vsel %vm1964, %v4791, %v4790
        %v4793 = vrot.slane %v1493, 4
        %v4794 = vsel %vm1967, %v4793, %v4792
        %v4795 = vrot.slane %v1516, 3
        %v4796 = vsel %vm1970, %v4795, %v4794
        %v4797 = vrot.slane %v1539, 2
        %v4798 = vrot.slane %v1562, 1
        %v4799 = vsel %vm1952, %v4798, %v4797
        %v4800 = vsel %vm1955, %v1585, %v4799
        %v4801 = vrot.slane %v1608, 7
        %v4802 = vsel %vm1958, %v4801, %v4800
        %v4803 = vrot.slane %v1631, 6
        %v4804 = vsel %vm1961, %v4803, %v4802
        %v4805 = vrot.slane %v1654, 5
        %v4806 = vsel %vm1964, %v4805, %v4804
        %v4807 = vrot.slane %v1677, 4
        %v4808 = vsel %vm1967, %v4807, %v4806
        %v4809 = vrot.slane %v1700, 3
        %v4810 = vsel %vm1970, %v4809, %v4808
        %v4811 = vrot.slane %v1723, 2
        %v4812 = vrot.slane %v1746, 1
        %v4813 = vsel %vm1952, %v4812, %v4811
        %v4814 = vsel %vm1955, %v1769, %v4813
        %v4815 = vrot.slane %v1792, 7
        %v4816 = vsel %vm1958, %v4815, %v4814
        %v4817 = vrot.slane %v1815, 6
        %v4818 = vsel %vm1961, %v4817, %v4816
        %v4819 = vrot.slane %v1838, 5
        %v4820 = vsel %vm1964, %v4819, %v4818
        %v4821 = vrot.slane %v1861, 4
        %v4822 = vsel %vm1967, %v4821, %v4820
        %v4823 = vrot.slane %v1884, 3
        %v4824 = vsel %vm1970, %v4823, %v4822
        %v4825 = vsel %vm407, %v4726, 0
        %v4827 = vsel %vm407, %v4740, 0
        %v4829 = vsel %vm407, %v4754, 0
        %v4831 = vsel %vm407, %v4768, 0
        %v4833 = vsel %vm407, %v4782, 0
        %v4835 = vsel %vm407, %v4796, 0
        %v4837 = vsel %vm407, %v4810, 0
        %v4839 = vsel %vm407, %v4824, 0
        %4841 = vmatpush.msra.mxu0 0.0
        %4842 = vmatpush.msra.mxu0 0.0
        %4843 = vmatpush.msra.mxu0 0.0
        %4844 = vmatpush.msra.mxu0 0.0
        %4845 = vmatpush.msra.mxu0 0.0
        %4846 = vmatpush.msra.mxu0 0.0
        %4847 = vmatpush.msra.mxu0 0.0
        %4848 = vmatpush.msra.mxu0 0.0
        %4849 = vmatpush.msra.mxu0 0.0
        %4850 = vmatpush.msra.mxu0 0.0
        %4851 = vmatpush.msra.mxu0 0.0
        %4852 = vmatpush.msra.mxu0 0.0
        %4853 = vmatpush.msra.mxu0 0.0
        %4854 = vmatpush.msra.mxu0 0.0
        %4855 = vmatpush.msra.mxu0 0.0
        %4856 = vmatpush.msra.mxu0 %v4712
        %4857 = vmatmul.f32.gmra.mxu0 %v4825
        %v4858 = vpop.f32.mrf.mxu0
        %v4859 = vadd.f32 0.0, %v4858
        %4860 = vmatmul.f32.gmra.mxu0 %v4827
        %v4861 = vpop.f32.mrf.mxu0
        %v4862 = vadd.f32 0.0, %v4861
        %4863 = vmatmul.f32.gmra.mxu0 %v4829
        %v4864 = vpop.f32.mrf.mxu0
        %v4865 = vadd.f32 0.0, %v4864
        %4866 = vmatmul.f32.gmra.mxu0 %v4831
        %v4867 = vpop.f32.mrf.mxu0
        %v4868 = vadd.f32 0.0, %v4867
        %4869 = vmatmul.f32.gmra.mxu0 %v4833
        %v4870 = vpop.f32.mrf.mxu0
        %v4871 = vadd.f32 0.0, %v4870
        %4872 = vmatmul.f32.gmra.mxu0 %v4835
        %v4873 = vpop.f32.mrf.mxu0
        %v4874 = vadd.f32 0.0, %v4873
        %4875 = vmatmul.f32.gmra.mxu0 %v4837
        %v4876 = vpop.f32.mrf.mxu0
        %v4877 = vadd.f32 0.0, %v4876
        %4878 = vmatmul.f32.gmra.mxu0 %v4839
        %v4879 = vpop.f32.mrf.mxu0
        %v4880 = vadd.f32 0.0, %v4879
        %4881 = vdwg.mxu0
        %4890 = vrot.lane.b32.xlu0 %v4859, 1
        %v4891 = vpop.permute.xlu0 %4890
        %4892 = vrot.lane.b32.xlu0 %v4862, 1
        %v4893 = vpop.permute.xlu0 %4892
        %4894 = vrot.lane.b32.xlu0 %v4865, 1
        %v4895 = vpop.permute.xlu0 %4894
        %4896 = vrot.lane.b32.xlu0 %v4868, 1
        %v4897 = vpop.permute.xlu0 %4896
        %4898 = vrot.lane.b32.xlu0 %v4871, 1
        %v4899 = vpop.permute.xlu0 %4898
        %4900 = vrot.lane.b32.xlu0 %v4874, 1
        %v4901 = vpop.permute.xlu0 %4900
        %4902 = vrot.lane.b32.xlu0 %v4877, 1
        %v4903 = vpop.permute.xlu0 %4902
        %4904 = vrot.lane.b32.xlu0 %v4880, 1
        %v4905 = vpop.permute.xlu0 %4904
        %v4914 = vsel %vm2159, 0.0, %v4891
        %v4915 = vsel %vm2159, 0.0, %v4893
        %v4916 = vsel %vm2159, 0.0, %v4895
        %v4917 = vsel %vm2159, 0.0, %v4897
        %v4918 = vsel %vm2159, 0.0, %v4899
        %v4919 = vsel %vm2159, 0.0, %v4901
        %v4920 = vsel %vm2159, 0.0, %v4903
        %v4921 = vsel %vm2159, 0.0, %v4905
        %v4922 = vsel %vm2168, %v4914, 0.0
        %v4923 = vsel %vm2168, %v4915, 0.0
        %v4924 = vsel %vm2168, %v4916, 0.0
        %v4925 = vsel %vm2168, %v4917, 0.0
        %v4926 = vsel %vm2168, %v4918, 0.0
        %v4927 = vsel %vm2168, %v4919, 0.0
        %v4928 = vsel %vm2168, %v4920, 0.0
        %v4929 = vsel %vm2168, %v4921, 0.0
        %v4930 = vpack.c.bf16 %v4922, %v4922
        %v4931 = vpack.c.bf16 %v4923, %v4923
        %v4932 = vpack.c.bf16 %v4924, %v4924
        %v4933 = vpack.c.bf16 %v4925, %v4925
        %v4934 = vpack.c.bf16 %v4926, %v4926
        %v4935 = vpack.c.bf16 %v4927, %v4927
        %v4936 = vpack.c.bf16 %v4928, %v4928
        %v4937 = vpack.c.bf16 %v4929, %v4929
        %4946 = vrot.lane.b32.xlu0 %v4930, 53
        %v4947 = vpop.permute.xlu0 %4946
        %4948 = vrot.lane.b32.xlu0 %v4931, 53
        %v4949 = vpop.permute.xlu0 %4948
        %4950 = vrot.lane.b32.xlu0 %v4932, 53
        %v4951 = vpop.permute.xlu0 %4950
        %4952 = vrot.lane.b32.xlu0 %v4933, 53
        %v4953 = vpop.permute.xlu0 %4952
        %4954 = vrot.lane.b32.xlu0 %v4934, 53
        %v4955 = vpop.permute.xlu0 %4954
        %4956 = vrot.lane.b32.xlu0 %v4935, 53
        %v4957 = vpop.permute.xlu0 %4956
        %4958 = vrot.lane.b32.xlu0 %v4936, 53
        %v4959 = vpop.permute.xlu0 %4958
        %4960 = vrot.lane.b32.xlu0 %v4937, 53
        %v4961 = vpop.permute.xlu0 %4960
        %vm4970 = vcmask 576936
        %4971 = vst.msk [vmem:[#allocation2 + $0x4] sm:$0xf] %vm4970, %v4947
        %4972 = vst.msk [vmem:[#allocation2 + $0xc] sm:$0xf] %vm4970, %v4949
        %4973 = vst.msk [vmem:[#allocation2 + $0x14] sm:$0xf] %vm4970, %v4951
        %4974 = vst.msk [vmem:[#allocation2 + $0x1c] sm:$0xf] %vm4970, %v4953
        %4975 = vst.msk [vmem:[#allocation2 + $0x24] sm:$0xf] %vm4970, %v4955
        %4976 = vst.msk [vmem:[#allocation2 + $0x2c] sm:$0xf] %vm4970, %v4957
        %4977 = vst.msk [vmem:[#allocation2 + $0x34] sm:$0xf] %vm4970, %v4959
        %4978 = vst.msk [vmem:[#allocation2 + $0x3c] sm:$0xf] %vm4970, %v4961
        %v4979 = vld [vmem:[%s2] sm:$0xff]
        %v4980 = vrot.slane %v435, 3
        %v4981 = vrot.slane %v458, 2
        %v4982 = vsel %vm1952, %v4981, %v4980
        %v4983 = vrot.slane %v481, 1
        %v4984 = vsel %vm1955, %v4983, %v4982
        %v4985 = vsel %vm1958, %v504, %v4984
        %v4986 = vrot.slane %v527, 7
        %v4987 = vsel %vm1961, %v4986, %v4985
        %v4988 = vrot.slane %v550, 6
        %v4989 = vsel %vm1964, %v4988, %v4987
        %v4990 = vrot.slane %v573, 5
        %v4991 = vsel %vm1967, %v4990, %v4989
        %v4992 = vrot.slane %v596, 4
        %v4993 = vsel %vm1970, %v4992, %v4991
        %v4994 = vrot.slane %v619, 3
        %v4995 = vrot.slane %v642, 2
        %v4996 = vsel %vm1952, %v4995, %v4994
        %v4997 = vrot.slane %v665, 1
        %v4998 = vsel %vm1955, %v4997, %v4996
        %v4999 = vsel %vm1958, %v688, %v4998
        %v5000 = vrot.slane %v711, 7
        %v5001 = vsel %vm1961, %v5000, %v4999
        %v5002 = vrot.slane %v734, 6
        %v5003 = vsel %vm1964, %v5002, %v5001
        %v5004 = vrot.slane %v757, 5
        %v5005 = vsel %vm1967, %v5004, %v5003
        %v5006 = vrot.slane %v780, 4
        %v5007 = vsel %vm1970, %v5006, %v5005
        %v5008 = vrot.slane %v803, 3
        %v5009 = vrot.slane %v826, 2
        %v5010 = vsel %vm1952, %v5009, %v5008
        %v5011 = vrot.slane %v849, 1
        %v5012 = vsel %vm1955, %v5011, %v5010
        %v5013 = vsel %vm1958, %v872, %v5012
        %v5014 = vrot.slane %v895, 7
        %v5015 = vsel %vm1961, %v5014, %v5013
        %v5016 = vrot.slane %v918, 6
        %v5017 = vsel %vm1964, %v5016, %v5015
        %v5018 = vrot.slane %v941, 5
        %v5019 = vsel %vm1967, %v5018, %v5017
        %v5020 = vrot.slane %v964, 4
        %v5021 = vsel %vm1970, %v5020, %v5019
        %v5022 = vrot.slane %v987, 3
        %v5023 = vrot.slane %v1010, 2
        %v5024 = vsel %vm1952, %v5023, %v5022
        %v5025 = vrot.slane %v1033, 1
        %v5026 = vsel %vm1955, %v5025, %v5024
        %v5027 = vsel %vm1958, %v1056, %v5026
        %v5028 = vrot.slane %v1079, 7
        %v5029 = vsel %vm1961, %v5028, %v5027
        %v5030 = vrot.slane %v1102, 6
        %v5031 = vsel %vm1964, %v5030, %v5029
        %v5032 = vrot.slane %v1125, 5
        %v5033 = vsel %vm1967, %v5032, %v5031
        %v5034 = vrot.slane %v1148, 4
        %v5035 = vsel %vm1970, %v5034, %v5033
        %v5036 = vrot.slane %v1171, 3
        %v5037 = vrot.slane %v1194, 2
        %v5038 = vsel %vm1952, %v5037, %v5036
        %v5039 = vrot.slane %v1217, 1
        %v5040 = vsel %vm1955, %v5039, %v5038
        %v5041 = vsel %vm1958, %v1240, %v5040
        %v5042 = vrot.slane %v1263, 7
        %v5043 = vsel %vm1961, %v5042, %v5041
        %v5044 = vrot.slane %v1286, 6
        %v5045 = vsel %vm1964, %v5044, %v5043
        %v5046 = vrot.slane %v1309, 5
        %v5047 = vsel %vm1967, %v5046, %v5045
        %v5048 = vrot.slane %v1332, 4
        %v5049 = vsel %vm1970, %v5048, %v5047
        %v5050 = vrot.slane %v1355, 3
        %v5051 = vrot.slane %v1378, 2
        %v5052 = vsel %vm1952, %v5051, %v5050
        %v5053 = vrot.slane %v1401, 1
        %v5054 = vsel %vm1955, %v5053, %v5052
        %v5055 = vsel %vm1958, %v1424, %v5054
        %v5056 = vrot.slane %v1447, 7
        %v5057 = vsel %vm1961, %v5056, %v5055
        %v5058 = vrot.slane %v1470, 6
        %v5059 = vsel %vm1964, %v5058, %v5057
        %v5060 = vrot.slane %v1493, 5
        %v5061 = vsel %vm1967, %v5060, %v5059
        %v5062 = vrot.slane %v1516, 4
        %v5063 = vsel %vm1970, %v5062, %v5061
        %v5064 = vrot.slane %v1539, 3
        %v5065 = vrot.slane %v1562, 2
        %v5066 = vsel %vm1952, %v5065, %v5064
        %v5067 = vrot.slane %v1585, 1
        %v5068 = vsel %vm1955, %v5067, %v5066
        %v5069 = vsel %vm1958, %v1608, %v5068
        %v5070 = vrot.slane %v1631, 7
        %v5071 = vsel %vm1961, %v5070, %v5069
        %v5072 = vrot.slane %v1654, 6
        %v5073 = vsel %vm1964, %v5072, %v5071
        %v5074 = vrot.slane %v1677, 5
        %v5075 = vsel %vm1967, %v5074, %v5073
        %v5076 = vrot.slane %v1700, 4
        %v5077 = vsel %vm1970, %v5076, %v5075
        %v5078 = vrot.slane %v1723, 3
        %v5079 = vrot.slane %v1746, 2
        %v5080 = vsel %vm1952, %v5079, %v5078
        %v5081 = vrot.slane %v1769, 1
        %v5082 = vsel %vm1955, %v5081, %v5080
        %v5083 = vsel %vm1958, %v1792, %v5082
        %v5084 = vrot.slane %v1815, 7
        %v5085 = vsel %vm1961, %v5084, %v5083
        %v5086 = vrot.slane %v1838, 6
        %v5087 = vsel %vm1964, %v5086, %v5085
        %v5088 = vrot.slane %v1861, 5
        %v5089 = vsel %vm1967, %v5088, %v5087
        %v5090 = vrot.slane %v1884, 4
        %v5091 = vsel %vm1970, %v5090, %v5089
        %v5092 = vsel %vm407, %v4993, 0
        %v5094 = vsel %vm407, %v5007, 0
        %v5096 = vsel %vm407, %v5021, 0
        %v5098 = vsel %vm407, %v5035, 0
        %v5100 = vsel %vm407, %v5049, 0
        %v5102 = vsel %vm407, %v5063, 0
        %v5104 = vsel %vm407, %v5077, 0
        %v5106 = vsel %vm407, %v5091, 0
        %5108 = vmatpush.msra.mxu0 0.0
        %5109 = vmatpush.msra.mxu0 0.0
        %5110 = vmatpush.msra.mxu0 0.0
        %5111 = vmatpush.msra.mxu0 0.0
        %5112 = vmatpush.msra.mxu0 0.0
        %5113 = vmatpush.msra.mxu0 0.0
        %5114 = vmatpush.msra.mxu0 0.0
        %5115 = vmatpush.msra.mxu0 0.0
        %5116 = vmatpush.msra.mxu0 0.0
        %5117 = vmatpush.msra.mxu0 0.0
        %5118 = vmatpush.msra.mxu0 0.0
        %5119 = vmatpush.msra.mxu0 0.0
        %5120 = vmatpush.msra.mxu0 0.0
        %5121 = vmatpush.msra.mxu0 0.0
        %5122 = vmatpush.msra.mxu0 0.0
        %5123 = vmatpush.msra.mxu0 %v4979
        %5124 = vmatmul.f32.gmra.mxu0 %v5092
        %v5125 = vpop.f32.mrf.mxu0
        %v5126 = vadd.f32 0.0, %v5125
        %5127 = vmatmul.f32.gmra.mxu0 %v5094
        %v5128 = vpop.f32.mrf.mxu0
        %v5129 = vadd.f32 0.0, %v5128
        %5130 = vmatmul.f32.gmra.mxu0 %v5096
        %v5131 = vpop.f32.mrf.mxu0
        %v5132 = vadd.f32 0.0, %v5131
        %5133 = vmatmul.f32.gmra.mxu0 %v5098
        %v5134 = vpop.f32.mrf.mxu0
        %v5135 = vadd.f32 0.0, %v5134
        %5136 = vmatmul.f32.gmra.mxu0 %v5100
        %v5137 = vpop.f32.mrf.mxu0
        %v5138 = vadd.f32 0.0, %v5137
        %5139 = vmatmul.f32.gmra.mxu0 %v5102
        %v5140 = vpop.f32.mrf.mxu0
        %v5141 = vadd.f32 0.0, %v5140
        %5142 = vmatmul.f32.gmra.mxu0 %v5104
        %v5143 = vpop.f32.mrf.mxu0
        %v5144 = vadd.f32 0.0, %v5143
        %5145 = vmatmul.f32.gmra.mxu0 %v5106
        %v5146 = vpop.f32.mrf.mxu0
        %v5147 = vadd.f32 0.0, %v5146
        %5148 = vdwg.mxu0
        %5157 = vrot.lane.b32.xlu0 %v5126, 1
        %v5158 = vpop.permute.xlu0 %5157
        %5159 = vrot.lane.b32.xlu0 %v5129, 1
        %v5160 = vpop.permute.xlu0 %5159
        %5161 = vrot.lane.b32.xlu0 %v5132, 1
        %v5162 = vpop.permute.xlu0 %5161
        %5163 = vrot.lane.b32.xlu0 %v5135, 1
        %v5164 = vpop.permute.xlu0 %5163
        %5165 = vrot.lane.b32.xlu0 %v5138, 1
        %v5166 = vpop.permute.xlu0 %5165
        %5167 = vrot.lane.b32.xlu0 %v5141, 1
        %v5168 = vpop.permute.xlu0 %5167
        %5169 = vrot.lane.b32.xlu0 %v5144, 1
        %v5170 = vpop.permute.xlu0 %5169
        %5171 = vrot.lane.b32.xlu0 %v5147, 1
        %v5172 = vpop.permute.xlu0 %5171
        %v5181 = vsel %vm2159, 0.0, %v5158
        %v5182 = vsel %vm2159, 0.0, %v5160
        %v5183 = vsel %vm2159, 0.0, %v5162
        %v5184 = vsel %vm2159, 0.0, %v5164
        %v5185 = vsel %vm2159, 0.0, %v5166
        %v5186 = vsel %vm2159, 0.0, %v5168
        %v5187 = vsel %vm2159, 0.0, %v5170
        %v5188 = vsel %vm2159, 0.0, %v5172
        %v5189 = vsel %vm2168, %v5181, 0.0
        %v5190 = vsel %vm2168, %v5182, 0.0
        %v5191 = vsel %vm2168, %v5183, 0.0
        %v5192 = vsel %vm2168, %v5184, 0.0
        %v5193 = vsel %vm2168, %v5185, 0.0
        %v5194 = vsel %vm2168, %v5186, 0.0
        %v5195 = vsel %vm2168, %v5187, 0.0
        %v5196 = vsel %vm2168, %v5188, 0.0
        %v5197 = vpack.c.bf16 %v5189, %v5189
        %v5198 = vpack.c.bf16 %v5190, %v5190
        %v5199 = vpack.c.bf16 %v5191, %v5191
        %v5200 = vpack.c.bf16 %v5192, %v5192
        %v5201 = vpack.c.bf16 %v5193, %v5193
        %v5202 = vpack.c.bf16 %v5194, %v5194
        %v5203 = vpack.c.bf16 %v5195, %v5195
        %v5204 = vpack.c.bf16 %v5196, %v5196
        %5213 = vrot.lane.b32.xlu0 %v5197, 71
        %v5214 = vpop.permute.xlu0 %5213
        %5215 = vrot.lane.b32.xlu0 %v5198, 71
        %v5216 = vpop.permute.xlu0 %5215
        %5217 = vrot.lane.b32.xlu0 %v5199, 71
        %v5218 = vpop.permute.xlu0 %5217
        %5219 = vrot.lane.b32.xlu0 %v5200, 71
        %v5220 = vpop.permute.xlu0 %5219
        %5221 = vrot.lane.b32.xlu0 %v5201, 71
        %v5222 = vpop.permute.xlu0 %5221
        %5223 = vrot.lane.b32.xlu0 %v5202, 71
        %v5224 = vpop.permute.xlu0 %5223
        %5225 = vrot.lane.b32.xlu0 %v5203, 71
        %v5226 = vpop.permute.xlu0 %5225
        %5227 = vrot.lane.b32.xlu0 %v5204, 71
        %v5228 = vpop.permute.xlu0 %5227
        %vm5237 = vcmask 724536
        %5238 = vst.msk [vmem:[#allocation2 + $0x4] sm:$0xf] %vm5237, %v5214
        %5239 = vst.msk [vmem:[#allocation2 + $0xc] sm:$0xf] %vm5237, %v5216
        %5240 = vst.msk [vmem:[#allocation2 + $0x14] sm:$0xf] %vm5237, %v5218
        %5241 = vst.msk [vmem:[#allocation2 + $0x1c] sm:$0xf] %vm5237, %v5220
        %5242 = vst.msk [vmem:[#allocation2 + $0x24] sm:$0xf] %vm5237, %v5222
        %5243 = vst.msk [vmem:[#allocation2 + $0x2c] sm:$0xf] %vm5237, %v5224
        %5244 = vst.msk [vmem:[#allocation2 + $0x34] sm:$0xf] %vm5237, %v5226
        %5245 = vst.msk [vmem:[#allocation2 + $0x3c] sm:$0xf] %vm5237, %v5228
        %v5246 = vld [vmem:[#allocation2] sm:$0xff]
        %v5247 = vld [vmem:[#allocation2 + $0x8] sm:$0xff]
        %v5248 = vld [vmem:[#allocation2 + $0x10] sm:$0xff]
        %v5249 = vld [vmem:[#allocation2 + $0x18] sm:$0xff]
        %v5250 = vld [vmem:[#allocation2 + $0x20] sm:$0xff]
        %v5251 = vld [vmem:[#allocation2 + $0x28] sm:$0xff]
        %v5252 = vld [vmem:[#allocation2 + $0x30] sm:$0xff]
        %v5253 = vld [vmem:[#allocation2 + $0x38] sm:$0xff]
        %v5262 = vunpack.c.l.b16 %v5246
        %v5263 = vunpack.c.h.b16 %v5246
        %v5264 = vunpack.c.l.b16 %v5247
        %v5265 = vunpack.c.h.b16 %v5247
        %v5266 = vunpack.c.l.b16 %v5248
        %v5267 = vunpack.c.h.b16 %v5248
        %v5268 = vunpack.c.l.b16 %v5249
        %v5269 = vunpack.c.h.b16 %v5249
        %v5270 = vunpack.c.l.b16 %v5250
        %v5271 = vunpack.c.h.b16 %v5250
        %v5272 = vunpack.c.l.b16 %v5251
        %v5273 = vunpack.c.h.b16 %v5251
        %v5274 = vunpack.c.l.b16 %v5252
        %v5275 = vunpack.c.h.b16 %v5252
        %v5276 = vunpack.c.l.b16 %v5253
        %v5277 = vunpack.c.h.b16 %v5253
        %v5278 = vpack.c.b16 %v5264, %v5262
        %v5279 = vpack.c.b16 %v5265, %v5263
        %v5280 = vpack.c.b16 %v5268, %v5266
        %v5281 = vpack.c.b16 %v5269, %v5267
        %v5282 = vpack.c.b16 %v5272, %v5270
        %v5283 = vpack.c.b16 %v5273, %v5271
        %v5284 = vpack.c.b16 %v5276, %v5274
        %v5285 = vpack.c.b16 %v5277, %v5275
        %5294 = vrot.lane.b32.xlu0 %v5278, 127
        %v5295 = vpop.permute.xlu0 %5294
        %5296 = vrot.lane.b32.xlu0 %v5279, 127
        %v5297 = vpop.permute.xlu0 %5296
        %5298 = vrot.lane.b32.xlu0 %v5280, 127
        %v5299 = vpop.permute.xlu0 %5298
        %5300 = vrot.lane.b32.xlu0 %v5281, 127
        %v5301 = vpop.permute.xlu0 %5300
        %5302 = vrot.lane.b32.xlu0 %v5282, 127
        %v5303 = vpop.permute.xlu0 %5302
        %5304 = vrot.lane.b32.xlu0 %v5283, 127
        %v5305 = vpop.permute.xlu0 %5304
        %5306 = vrot.lane.b32.xlu0 %v5284, 127
        %v5307 = vpop.permute.xlu0 %5306
        %5308 = vrot.lane.b32.xlu0 %v5285, 127
        %v5309 = vpop.permute.xlu0 %5308
        %v5310 = vsel %vm4086, %v5295, %v5297
        %v5311 = vsel %vm4086, %v5299, %v5301
        %v5312 = vsel %vm4086, %v5303, %v5305
        %v5313 = vsel %vm4086, %v5307, %v5309
        %5322 = vrot.lane.b32.xlu0 %v5278, 126
        %v5323 = vpop.permute.xlu0 %5322
        %5324 = vrot.lane.b32.xlu0 %v5279, 126
        %v5325 = vpop.permute.xlu0 %5324
        %5326 = vrot.lane.b32.xlu0 %v5280, 126
        %v5327 = vpop.permute.xlu0 %5326
        %5328 = vrot.lane.b32.xlu0 %v5281, 126
        %v5329 = vpop.permute.xlu0 %5328
        %5330 = vrot.lane.b32.xlu0 %v5282, 126
        %v5331 = vpop.permute.xlu0 %5330
        %5332 = vrot.lane.b32.xlu0 %v5283, 126
        %v5333 = vpop.permute.xlu0 %5332
        %5334 = vrot.lane.b32.xlu0 %v5284, 126
        %v5335 = vpop.permute.xlu0 %5334
        %5336 = vrot.lane.b32.xlu0 %v5285, 126
        %v5337 = vpop.permute.xlu0 %5336
        %vm5338 = vcmask 1031168
        %v5339 = vsel %vm5338, %v5323, %v5325
        %v5340 = vsel %vm5338, %v5327, %v5329
        %v5341 = vsel %vm5338, %v5331, %v5333
        %v5342 = vsel %vm5338, %v5335, %v5337
        %5351 = vrot.lane.b32.xlu0 %v5278, 110
        %v5352 = vpop.permute.xlu0 %5351
        %5353 = vrot.lane.b32.xlu0 %v5279, 110
        %v5354 = vpop.permute.xlu0 %5353
        %5355 = vrot.lane.b32.xlu0 %v5280, 110
        %v5356 = vpop.permute.xlu0 %5355
        %5357 = vrot.lane.b32.xlu0 %v5281, 110
        %v5358 = vpop.permute.xlu0 %5357
        %5359 = vrot.lane.b32.xlu0 %v5282, 110
        %v5360 = vpop.permute.xlu0 %5359
        %5361 = vrot.lane.b32.xlu0 %v5283, 110
        %v5362 = vpop.permute.xlu0 %5361
        %5363 = vrot.lane.b32.xlu0 %v5284, 110
        %v5364 = vpop.permute.xlu0 %5363
        %5365 = vrot.lane.b32.xlu0 %v5285, 110
        %v5366 = vpop.permute.xlu0 %5365
        %vm5367 = vcmask 900096
        %v5368 = vsel %vm5367, %v5352, %v5354
        %v5369 = vsel %vm5367, %v5356, %v5358
        %v5370 = vsel %vm5367, %v5360, %v5362
        %v5371 = vsel %vm5367, %v5364, %v5366
        %5380 = vrot.lane.b32.xlu0 %v5278, 109
        %v5381 = vpop.permute.xlu0 %5380
        %5382 = vrot.lane.b32.xlu0 %v5279, 109
        %v5383 = vpop.permute.xlu0 %5382
        %5384 = vrot.lane.b32.xlu0 %v5280, 109
        %v5385 = vpop.permute.xlu0 %5384
        %5386 = vrot.lane.b32.xlu0 %v5281, 109
        %v5387 = vpop.permute.xlu0 %5386
        %5388 = vrot.lane.b32.xlu0 %v5282, 109
        %v5389 = vpop.permute.xlu0 %5388
        %5390 = vrot.lane.b32.xlu0 %v5283, 109
        %v5391 = vpop.permute.xlu0 %5390
        %5392 = vrot.lane.b32.xlu0 %v5284, 109
        %v5393 = vpop.permute.xlu0 %5392
        %5394 = vrot.lane.b32.xlu0 %v5285, 109
        %v5395 = vpop.permute.xlu0 %5394
        %vm5396 = vcmask 891904
        %v5397 = vsel %vm5396, %v5381, %v5383
        %v5398 = vsel %vm5396, %v5385, %v5387
        %v5399 = vsel %vm5396, %v5389, %v5391
        %v5400 = vsel %vm5396, %v5393, %v5395
        %5409 = vrot.lane.b32.xlu0 %v5278, 108
        %v5410 = vpop.permute.xlu0 %5409
        %5411 = vrot.lane.b32.xlu0 %v5279, 108
        %v5412 = vpop.permute.xlu0 %5411
        %5413 = vrot.lane.b32.xlu0 %v5280, 108
        %v5414 = vpop.permute.xlu0 %5413
        %5415 = vrot.lane.b32.xlu0 %v5281, 108
        %v5416 = vpop.permute.xlu0 %5415
        %5417 = vrot.lane.b32.xlu0 %v5282, 108
        %v5418 = vpop.permute.xlu0 %5417
        %5419 = vrot.lane.b32.xlu0 %v5283, 108
        %v5420 = vpop.permute.xlu0 %5419
        %5421 = vrot.lane.b32.xlu0 %v5284, 108
        %v5422 = vpop.permute.xlu0 %5421
        %5423 = vrot.lane.b32.xlu0 %v5285, 108
        %v5424 = vpop.permute.xlu0 %5423
        %vm5425 = vcmask 883712
        %v5426 = vsel %vm5425, %v5410, %v5412
        %v5427 = vsel %vm5425, %v5414, %v5416
        %v5428 = vsel %vm5425, %v5418, %v5420
        %v5429 = vsel %vm5425, %v5422, %v5424
        %5438 = vrot.lane.b32.xlu0 %v5278, 92
        %v5439 = vpop.permute.xlu0 %5438
        %5440 = vrot.lane.b32.xlu0 %v5279, 92
        %v5441 = vpop.permute.xlu0 %5440
        %5442 = vrot.lane.b32.xlu0 %v5280, 92
        %v5443 = vpop.permute.xlu0 %5442
        %5444 = vrot.lane.b32.xlu0 %v5281, 92
        %v5445 = vpop.permute.xlu0 %5444
        %5446 = vrot.lane.b32.xlu0 %v5282, 92
        %v5447 = vpop.permute.xlu0 %5446
        %5448 = vrot.lane.b32.xlu0 %v5283, 92
        %v5449 = vpop.permute.xlu0 %5448
        %5450 = vrot.lane.b32.xlu0 %v5284, 92
        %v5451 = vpop.permute.xlu0 %5450
        %5452 = vrot.lane.b32.xlu0 %v5285, 92
        %v5453 = vpop.permute.xlu0 %5452
        %vm5454 = vcmask 752640
        %v5455 = vsel %vm5454, %v5439, %v5441
        %v5456 = vsel %vm5454, %v5443, %v5445
        %v5457 = vsel %vm5454, %v5447, %v5449
        %v5458 = vsel %vm5454, %v5451, %v5453
        %5467 = vrot.lane.b32.xlu0 %v5278, 91
        %v5468 = vpop.permute.xlu0 %5467
        %5469 = vrot.lane.b32.xlu0 %v5279, 91
        %v5470 = vpop.permute.xlu0 %5469
        %5471 = vrot.lane.b32.xlu0 %v5280, 91
        %v5472 = vpop.permute.xlu0 %5471
        %5473 = vrot.lane.b32.xlu0 %v5281, 91
        %v5474 = vpop.permute.xlu0 %5473
        %5475 = vrot.lane.b32.xlu0 %v5282, 91
        %v5476 = vpop.permute.xlu0 %5475
        %5477 = vrot.lane.b32.xlu0 %v5283, 91
        %v5478 = vpop.permute.xlu0 %5477
        %5479 = vrot.lane.b32.xlu0 %v5284, 91
        %v5480 = vpop.permute.xlu0 %5479
        %5481 = vrot.lane.b32.xlu0 %v5285, 91
        %v5482 = vpop.permute.xlu0 %5481
        %vm5483 = vcmask 744448
        %v5484 = vsel %vm5483, %v5468, %v5470
        %v5485 = vsel %vm5483, %v5472, %v5474
        %v5486 = vsel %vm5483, %v5476, %v5478
        %v5487 = vsel %vm5483, %v5480, %v5482
        %5496 = vrot.lane.b32.xlu0 %v5278, 90
        %v5497 = vpop.permute.xlu0 %5496
        %5498 = vrot.lane.b32.xlu0 %v5279, 90
        %v5499 = vpop.permute.xlu0 %5498
        %5500 = vrot.lane.b32.xlu0 %v5280, 90
        %v5501 = vpop.permute.xlu0 %5500
        %5502 = vrot.lane.b32.xlu0 %v5281, 90
        %v5503 = vpop.permute.xlu0 %5502
        %5504 = vrot.lane.b32.xlu0 %v5282, 90
        %v5505 = vpop.permute.xlu0 %5504
        %5506 = vrot.lane.b32.xlu0 %v5283, 90
        %v5507 = vpop.permute.xlu0 %5506
        %5508 = vrot.lane.b32.xlu0 %v5284, 90
        %v5509 = vpop.permute.xlu0 %5508
        %5510 = vrot.lane.b32.xlu0 %v5285, 90
        %v5511 = vpop.permute.xlu0 %5510
        %vm5512 = vcmask 736256
        %v5513 = vsel %vm5512, %v5497, %v5499
        %v5514 = vsel %vm5512, %v5501, %v5503
        %v5515 = vsel %vm5512, %v5505, %v5507
        %v5516 = vsel %vm5512, %v5509, %v5511
        %v5525 = vld [vmem:[%s3] sm:$0xff]
        %v5526 = vld [vmem:[%s3 + $0x8] sm:$0xff]
        %v5527 = vld [vmem:[%s3 + $0x10] sm:$0xf]
        %v5528 = vld [vmem:[%s3 + $0x14] sm:$0xff]
        %v5529 = vld [vmem:[%s3 + $0x1c] sm:$0xff]
        %v5530 = vld [vmem:[%s3 + $0x24] sm:$0xf]
        %v5531 = vld [vmem:[%s3 + $0x28] sm:$0xff]
        %v5532 = vld [vmem:[%s3 + $0x30] sm:$0xff]
        %v5533 = vld [vmem:[%s3 + $0x38] sm:$0xf]
        %v5534 = vld [vmem:[%s3 + $0x3c] sm:$0xff]
        %v5535 = vld [vmem:[%s3 + $0x44] sm:$0xff]
        %v5536 = vld [vmem:[%s3 + $0x4c] sm:$0xf]
        %v5537 = vld [vmem:[%s3 + $0x50] sm:$0xff]
        %v5538 = vld [vmem:[%s3 + $0x58] sm:$0xff]
        %v5539 = vld [vmem:[%s3 + $0x60] sm:$0xf]
        %v5540 = vld [vmem:[%s3 + $0x64] sm:$0xff]
        %v5541 = vld [vmem:[%s3 + $0x6c] sm:$0xff]
        %v5542 = vld [vmem:[%s3 + $0x74] sm:$0xf]
        %v5543 = vld [vmem:[%s3 + $0x78] sm:$0xff]
        %v5544 = vld [vmem:[%s3 + $0x80] sm:$0xff]
        %v5545 = vld [vmem:[%s3 + $0x88] sm:$0xf]
        %v5546 = vld [vmem:[%s3 + $0x8c] sm:$0xff]
        %v5547 = vld [vmem:[%s3 + $0x94] sm:$0xff]
        %v5548 = vld [vmem:[%s3 + $0x9c] sm:$0xf]
        %v5549 = vld [vmem:[%s4] sm:$0xff]
        %v5550 = vld [vmem:[%s4 + $0x8] sm:$0xff]
        %v5551 = vld [vmem:[%s4 + $0x10] sm:$0xff]
        %v5552 = vld [vmem:[%s4 + $0x18] sm:$0xff]
        %v5553 = vld [vmem:[%s4 + $0x20] sm:$0xff]
        %v5554 = vld [vmem:[%s4 + $0x28] sm:$0xff]
        %v5555 = vld [vmem:[%s4 + $0x30] sm:$0xff]
        %v5556 = vld [vmem:[%s4 + $0x38] sm:$0xff]
        %5558 = vset.pattern.permute.xlu0 0
        %5559 = vperm.xlu0 %5558, %v5549
        %v5560 = vpop.permute.xlu0 %5559
        %5563 = vset.pattern.permute.xlu0 0
        %5564 = vperm.xlu0 %5563, %v5550
        %v5565 = vpop.permute.xlu0 %5564
        %5568 = vset.pattern.permute.xlu0 0
        %5569 = vperm.xlu0 %5568, %v5551
        %v5570 = vpop.permute.xlu0 %5569
        %5573 = vset.pattern.permute.xlu0 0
        %5574 = vperm.xlu0 %5573, %v5552
        %v5575 = vpop.permute.xlu0 %5574
        %5578 = vset.pattern.permute.xlu0 0
        %5579 = vperm.xlu0 %5578, %v5553
        %v5580 = vpop.permute.xlu0 %5579
        %5583 = vset.pattern.permute.xlu0 0
        %5584 = vperm.xlu0 %5583, %v5554
        %v5585 = vpop.permute.xlu0 %5584
        %5588 = vset.pattern.permute.xlu0 0
        %5589 = vperm.xlu0 %5588, %v5555
        %v5590 = vpop.permute.xlu0 %5589
        %5593 = vset.pattern.permute.xlu0 0
        %5594 = vperm.xlu0 %5593, %v5556
        %v5595 = vpop.permute.xlu0 %5594
        %v5621 = vunpack.c.l.b16 %v5525
        %v5622 = vunpack.c.h.b16 %v5525
        %v5623 = vunpack.c.l.b16 %v5526
        %v5624 = vunpack.c.h.b16 %v5526
        %v5625 = vunpack.c.l.b16 %v5527
        %v5626 = vunpack.c.l.b16 %v5528
        %v5627 = vunpack.c.h.b16 %v5528
        %v5628 = vunpack.c.l.b16 %v5529
        %v5629 = vunpack.c.h.b16 %v5529
        %v5630 = vunpack.c.l.b16 %v5530
        %v5631 = vunpack.c.l.b16 %v5531
        %v5632 = vunpack.c.h.b16 %v5531
        %v5633 = vunpack.c.l.b16 %v5532
        %v5634 = vunpack.c.h.b16 %v5532
        %v5635 = vunpack.c.l.b16 %v5533
        %v5636 = vunpack.c.l.b16 %v5534
        %v5637 = vunpack.c.h.b16 %v5534
        %v5638 = vunpack.c.l.b16 %v5535
        %v5639 = vunpack.c.h.b16 %v5535
        %v5640 = vunpack.c.l.b16 %v5536
        %v5641 = vunpack.c.l.b16 %v5537
        %v5642 = vunpack.c.h.b16 %v5537
        %v5643 = vunpack.c.l.b16 %v5538
        %v5644 = vunpack.c.h.b16 %v5538
        %v5645 = vunpack.c.l.b16 %v5539
        %v5646 = vunpack.c.l.b16 %v5540
        %v5647 = vunpack.c.h.b16 %v5540
        %v5648 = vunpack.c.l.b16 %v5541
        %v5649 = vunpack.c.h.b16 %v5541
        %v5650 = vunpack.c.l.b16 %v5542
        %v5651 = vunpack.c.l.b16 %v5543
        %v5652 = vunpack.c.h.b16 %v5543
        %v5653 = vunpack.c.l.b16 %v5544
        %v5654 = vunpack.c.h.b16 %v5544
        %v5655 = vunpack.c.l.b16 %v5545
        %v5656 = vunpack.c.l.b16 %v5546
        %v5657 = vunpack.c.h.b16 %v5546
        %v5658 = vunpack.c.l.b16 %v5547
        %v5659 = vunpack.c.h.b16 %v5547
        %v5660 = vunpack.c.l.b16 %v5548
        %v5661 = vpack.c.b16 %v5626, %v5621
        %v5662 = vpack.c.b16 %v5627, %v5622
        %v5663 = vpack.c.b16 %v5628, %v5623
        %v5664 = vpack.c.b16 %v5629, %v5624
        %v5665 = vpack.c.b16 %v5630, %v5625
        %v5666 = vpack.c.b16 %v5636, %v5631
        %v5667 = vpack.c.b16 %v5637, %v5632
        %v5668 = vpack.c.b16 %v5638, %v5633
        %v5669 = vpack.c.b16 %v5639, %v5634
        %v5670 = vpack.c.b16 %v5640, %v5635
        %v5671 = vpack.c.b16 %v5646, %v5641
        %v5672 = vpack.c.b16 %v5647, %v5642
        %v5673 = vpack.c.b16 %v5648, %v5643
        %v5674 = vpack.c.b16 %v5649, %v5644
        %v5675 = vpack.c.b16 %v5650, %v5645
        %v5676 = vpack.c.b16 %v5656, %v5651
        %v5677 = vpack.c.b16 %v5657, %v5652
        %v5678 = vpack.c.b16 %v5658, %v5653
        %v5679 = vpack.c.b16 %v5659, %v5654
        %v5680 = vpack.c.b16 %v5660, %v5655
        %vm5697 = vcmask 523264
        %v5699 = vsel %vm5697, %v5665, 0
        %v5702 = vsel %vm5697, %v5670, 0
        %v5705 = vsel %vm5697, %v5675, 0
        %v5708 = vsel %vm5697, %v5680, 0
        %5710 = vmatpush.bf16.msra.mxu0 %v5313
        %5711 = vmatpush.bf16.msra.mxu0 %v5312
        %5712 = vmatpush.bf16.msra.mxu0 %v5311
        %5713 = vmatpush.bf16.msra.mxu0 %v5310
        %5714 = vmatpush.bf16.msra.mxu0 %v5284
        %5715 = vmatpush.bf16.msra.mxu0 %v5282
        %5716 = vmatpush.bf16.msra.mxu0 %v5280
        %5717 = vmatpush.bf16.msra.mxu0 %v5278
        %5718 = vmatmul.bf16.gmra.mxu0 %v5661
        %v5719 = vpop.f32.mrf.mxu0
        %v5720 = vadd.f32 %v5560, %v5719
        %v5721 = vpop.f32.mrf.mxu0
        %v5722 = vadd.f32 %v5565, %v5721
        %5723 = vmatmul.bf16.gmra.mxu0 %v5666
        %v5724 = vpop.f32.mrf.mxu0
        %v5725 = vadd.f32 %v5570, %v5724
        %v5726 = vpop.f32.mrf.mxu0
        %v5727 = vadd.f32 %v5575, %v5726
        %5728 = vmatmul.bf16.gmra.mxu0 %v5671
        %v5729 = vpop.f32.mrf.mxu0
        %v5730 = vadd.f32 %v5580, %v5729
        %v5731 = vpop.f32.mrf.mxu0
        %v5732 = vadd.f32 %v5585, %v5731
        %5733 = vmatmul.bf16.gmra.mxu0 %v5676
        %v5734 = vpop.f32.mrf.mxu0
        %v5735 = vadd.f32 %v5590, %v5734
        %v5736 = vpop.f32.mrf.mxu0
        %v5737 = vadd.f32 %v5595, %v5736
        %5738 = vdwg.mxu0
        %5739 = vmatpush.bf16.msra.mxu0 %v5371
        %5740 = vmatpush.bf16.msra.mxu0 %v5370
        %5741 = vmatpush.bf16.msra.mxu0 %v5369
        %5742 = vmatpush.bf16.msra.mxu0 %v5368
        %5743 = vmatpush.bf16.msra.mxu0 %v5342
        %5744 = vmatpush.bf16.msra.mxu0 %v5341
        %5745 = vmatpush.bf16.msra.mxu0 %v5340
        %5746 = vmatpush.bf16.msra.mxu0 %v5339
        %5747 = vmatmul.bf16.gmra.mxu0 %v5662
        %v5748 = vpop.f32.mrf.mxu0
        %v5749 = vadd.f32 %v5720, %v5748
        %v5750 = vpop.f32.mrf.mxu0
        %v5751 = vadd.f32 %v5722, %v5750
        %5752 = vmatmul.bf16.gmra.mxu0 %v5667
        %v5753 = vpop.f32.mrf.mxu0
        %v5754 = vadd.f32 %v5725, %v5753
        %v5755 = vpop.f32.mrf.mxu0
        %v5756 = vadd.f32 %v5727, %v5755
        %5757 = vmatmul.bf16.gmra.mxu0 %v5672
        %v5758 = vpop.f32.mrf.mxu0
        %v5759 = vadd.f32 %v5730, %v5758
        %v5760 = vpop.f32.mrf.mxu0
        %v5761 = vadd.f32 %v5732, %v5760
        %5762 = vmatmul.bf16.gmra.mxu0 %v5677
        %v5763 = vpop.f32.mrf.mxu0
        %v5764 = vadd.f32 %v5735, %v5763
        %v5765 = vpop.f32.mrf.mxu0
        %v5766 = vadd.f32 %v5737, %v5765
        %5767 = vdwg.mxu0
        %5768 = vmatpush.bf16.msra.mxu0 %v5429
        %5769 = vmatpush.bf16.msra.mxu0 %v5428
        %5770 = vmatpush.bf16.msra.mxu0 %v5427
        %5771 = vmatpush.bf16.msra.mxu0 %v5426
        %5772 = vmatpush.bf16.msra.mxu0 %v5400
        %5773 = vmatpush.bf16.msra.mxu0 %v5399
        %5774 = vmatpush.bf16.msra.mxu0 %v5398
        %5775 = vmatpush.bf16.msra.mxu0 %v5397
        %5776 = vmatmul.bf16.gmra.mxu0 %v5663
        %v5777 = vpop.f32.mrf.mxu0
        %v5778 = vadd.f32 %v5749, %v5777
        %v5779 = vpop.f32.mrf.mxu0
        %v5780 = vadd.f32 %v5751, %v5779
        %5781 = vmatmul.bf16.gmra.mxu0 %v5668
        %v5782 = vpop.f32.mrf.mxu0
        %v5783 = vadd.f32 %v5754, %v5782
        %v5784 = vpop.f32.mrf.mxu0
        %v5785 = vadd.f32 %v5756, %v5784
        %5786 = vmatmul.bf16.gmra.mxu0 %v5673
        %v5787 = vpop.f32.mrf.mxu0
        %v5788 = vadd.f32 %v5759, %v5787
        %v5789 = vpop.f32.mrf.mxu0
        %v5790 = vadd.f32 %v5761, %v5789
        %5791 = vmatmul.bf16.gmra.mxu0 %v5678
        %v5792 = vpop.f32.mrf.mxu0
        %v5793 = vadd.f32 %v5764, %v5792
        %v5794 = vpop.f32.mrf.mxu0
        %v5795 = vadd.f32 %v5766, %v5794
        %5796 = vdwg.mxu0
        %5797 = vmatpush.bf16.msra.mxu0 %v5487
        %5798 = vmatpush.bf16.msra.mxu0 %v5486
        %5799 = vmatpush.bf16.msra.mxu0 %v5485
        %5800 = vmatpush.bf16.msra.mxu0 %v5484
        %5801 = vmatpush.bf16.msra.mxu0 %v5458
        %5802 = vmatpush.bf16.msra.mxu0 %v5457
        %5803 = vmatpush.bf16.msra.mxu0 %v5456
        %5804 = vmatpush.bf16.msra.mxu0 %v5455
        %5805 = vmatmul.bf16.gmra.mxu0 %v5664
        %v5806 = vpop.f32.mrf.mxu0
        %v5807 = vadd.f32 %v5778, %v5806
        %v5808 = vpop.f32.mrf.mxu0
        %v5809 = vadd.f32 %v5780, %v5808
        %5810 = vmatmul.bf16.gmra.mxu0 %v5669
        %v5811 = vpop.f32.mrf.mxu0
        %v5812 = vadd.f32 %v5783, %v5811
        %v5813 = vpop.f32.mrf.mxu0
        %v5814 = vadd.f32 %v5785, %v5813
        %5815 = vmatmul.bf16.gmra.mxu0 %v5674
        %v5816 = vpop.f32.mrf.mxu0
        %v5817 = vadd.f32 %v5788, %v5816
        %v5818 = vpop.f32.mrf.mxu0
        %v5819 = vadd.f32 %v5790, %v5818
        %5820 = vmatmul.bf16.gmra.mxu0 %v5679
        %v5821 = vpop.f32.mrf.mxu0
        %v5822 = vadd.f32 %v5793, %v5821
        %v5823 = vpop.f32.mrf.mxu0
        %v5824 = vadd.f32 %v5795, %v5823
        %5825 = vdwg.mxu0
        %5826 = vmatpush.bf16.msra.mxu0 0
        %5827 = vmatpush.bf16.msra.mxu0 0
        %5828 = vmatpush.bf16.msra.mxu0 0
        %5829 = vmatpush.bf16.msra.mxu0 0
        %5830 = vmatpush.bf16.msra.mxu0 %v5516
        %5831 = vmatpush.bf16.msra.mxu0 %v5515
        %5832 = vmatpush.bf16.msra.mxu0 %v5514
        %5833 = vmatpush.bf16.msra.mxu0 %v5513
        %5834 = vmatmul.bf16.gmra.mxu0 %v5699
        %v5835 = vpop.f32.mrf.mxu0
        %v5836 = vadd.f32 %v5807, %v5835
        %v5837 = vpop.f32.mrf.mxu0
        %v5838 = vadd.f32 %v5809, %v5837
        %5839 = vmatmul.bf16.gmra.mxu0 %v5702
        %v5840 = vpop.f32.mrf.mxu0
        %v5841 = vadd.f32 %v5812, %v5840
        %v5842 = vpop.f32.mrf.mxu0
        %v5843 = vadd.f32 %v5814, %v5842
        %5844 = vmatmul.bf16.gmra.mxu0 %v5705
        %v5845 = vpop.f32.mrf.mxu0
        %v5846 = vadd.f32 %v5817, %v5845
        %v5847 = vpop.f32.mrf.mxu0
        %v5848 = vadd.f32 %v5819, %v5847
        %5849 = vmatmul.bf16.gmra.mxu0 %v5708
        %v5850 = vpop.f32.mrf.mxu0
        %v5851 = vadd.f32 %v5822, %v5850
        %v5852 = vpop.f32.mrf.mxu0
        %v5853 = vadd.f32 %v5824, %v5852
        %5854 = vdwg.mxu0
        %5855 = vmatpush.bf16.msra.mxu0 %v5309
        %5856 = vmatpush.bf16.msra.mxu0 %v5305
        %5857 = vmatpush.bf16.msra.mxu0 %v5301
        %5858 = vmatpush.bf16.msra.mxu0 %v5297
        %5859 = vmatpush.bf16.msra.mxu0 %v5285
        %5860 = vmatpush.bf16.msra.mxu0 %v5283
        %5861 = vmatpush.bf16.msra.mxu0 %v5281
        %5862 = vmatpush.bf16.msra.mxu0 %v5279
        %5863 = vmatmul.bf16.gmra.mxu0 %v5661
        %v5864 = vpop.f32.mrf.mxu0
        %v5865 = vadd.f32 %v5560, %v5864
        %v5866 = vpop.f32.mrf.mxu0
        %v5867 = vadd.f32 %v5565, %v5866
        %5868 = vmatmul.bf16.gmra.mxu0 %v5666
        %v5869 = vpop.f32.mrf.mxu0
        %v5870 = vadd.f32 %v5570, %v5869
        %v5871 = vpop.f32.mrf.mxu0
        %v5872 = vadd.f32 %v5575, %v5871
        %5873 = vmatmul.bf16.gmra.mxu0 %v5671
        %v5874 = vpop.f32.mrf.mxu0
        %v5875 = vadd.f32 %v5580, %v5874
        %v5876 = vpop.f32.mrf.mxu0
        %v5877 = vadd.f32 %v5585, %v5876
        %5878 = vmatmul.bf16.gmra.mxu0 %v5676
        %v5879 = vpop.f32.mrf.mxu0
        %v5880 = vadd.f32 %v5590, %v5879
        %v5881 = vpop.f32.mrf.mxu0
        %v5882 = vadd.f32 %v5595, %v5881
        %5883 = vdwg.mxu0
        %5884 = vmatpush.bf16.msra.mxu0 %v5366
        %5885 = vmatpush.bf16.msra.mxu0 %v5362
        %5886 = vmatpush.bf16.msra.mxu0 %v5358
        %5887 = vmatpush.bf16.msra.mxu0 %v5354
        %5888 = vmatpush.bf16.msra.mxu0 %v5337
        %5889 = vmatpush.bf16.msra.mxu0 %v5333
        %5890 = vmatpush.bf16.msra.mxu0 %v5329
        %5891 = vmatpush.bf16.msra.mxu0 %v5325
        %5892 = vmatmul.bf16.gmra.mxu0 %v5662
        %v5893 = vpop.f32.mrf.mxu0
        %v5894 = vadd.f32 %v5865, %v5893
        %v5895 = vpop.f32.mrf.mxu0
        %v5896 = vadd.f32 %v5867, %v5895
        %5897 = vmatmul.bf16.gmra.mxu0 %v5667
        %v5898 = vpop.f32.mrf.mxu0
        %v5899 = vadd.f32 %v5870, %v5898
        %v5900 = vpop.f32.mrf.mxu0
        %v5901 = vadd.f32 %v5872, %v5900
        %5902 = vmatmul.bf16.gmra.mxu0 %v5672
        %v5903 = vpop.f32.mrf.mxu0
        %v5904 = vadd.f32 %v5875, %v5903
        %v5905 = vpop.f32.mrf.mxu0
        %v5906 = vadd.f32 %v5877, %v5905
        %5907 = vmatmul.bf16.gmra.mxu0 %v5677
        %v5908 = vpop.f32.mrf.mxu0
        %v5909 = vadd.f32 %v5880, %v5908
        %v5910 = vpop.f32.mrf.mxu0
        %v5911 = vadd.f32 %v5882, %v5910
        %5912 = vdwg.mxu0
        %5913 = vmatpush.bf16.msra.mxu0 %v5424
        %5914 = vmatpush.bf16.msra.mxu0 %v5420
        %5915 = vmatpush.bf16.msra.mxu0 %v5416
        %5916 = vmatpush.bf16.msra.mxu0 %v5412
        %5917 = vmatpush.bf16.msra.mxu0 %v5395
        %5918 = vmatpush.bf16.msra.mxu0 %v5391
        %5919 = vmatpush.bf16.msra.mxu0 %v5387
        %5920 = vmatpush.bf16.msra.mxu0 %v5383
        %5921 = vmatmul.bf16.gmra.mxu0 %v5663
        %v5922 = vpop.f32.mrf.mxu0
        %v5923 = vadd.f32 %v5894, %v5922
        %v5924 = vpop.f32.mrf.mxu0
        %v5925 = vadd.f32 %v5896, %v5924
        %5926 = vmatmul.bf16.gmra.mxu0 %v5668
        %v5927 = vpop.f32.mrf.mxu0
        %v5928 = vadd.f32 %v5899, %v5927
        %v5929 = vpop.f32.mrf.mxu0
        %v5930 = vadd.f32 %v5901, %v5929
        %5931 = vmatmul.bf16.gmra.mxu0 %v5673
        %v5932 = vpop.f32.mrf.mxu0
        %v5933 = vadd.f32 %v5904, %v5932
        %v5934 = vpop.f32.mrf.mxu0
        %v5935 = vadd.f32 %v5906, %v5934
        %5936 = vmatmul.bf16.gmra.mxu0 %v5678
        %v5937 = vpop.f32.mrf.mxu0
        %v5938 = vadd.f32 %v5909, %v5937
        %v5939 = vpop.f32.mrf.mxu0
        %v5940 = vadd.f32 %v5911, %v5939
        %5941 = vdwg.mxu0
        %5942 = vmatpush.bf16.msra.mxu0 %v5482
        %5943 = vmatpush.bf16.msra.mxu0 %v5478
        %5944 = vmatpush.bf16.msra.mxu0 %v5474
        %5945 = vmatpush.bf16.msra.mxu0 %v5470
        %5946 = vmatpush.bf16.msra.mxu0 %v5453
        %5947 = vmatpush.bf16.msra.mxu0 %v5449
        %5948 = vmatpush.bf16.msra.mxu0 %v5445
        %5949 = vmatpush.bf16.msra.mxu0 %v5441
        %5950 = vmatmul.bf16.gmra.mxu0 %v5664
        %v5951 = vpop.f32.mrf.mxu0
        %v5952 = vadd.f32 %v5923, %v5951
        %v5953 = vpop.f32.mrf.mxu0
        %v5954 = vadd.f32 %v5925, %v5953
        %5955 = vmatmul.bf16.gmra.mxu0 %v5669
        %v5956 = vpop.f32.mrf.mxu0
        %v5957 = vadd.f32 %v5928, %v5956
        %v5958 = vpop.f32.mrf.mxu0
        %v5959 = vadd.f32 %v5930, %v5958
        %5960 = vmatmul.bf16.gmra.mxu0 %v5674
        %v5961 = vpop.f32.mrf.mxu0
        %v5962 = vadd.f32 %v5933, %v5961
        %v5963 = vpop.f32.mrf.mxu0
        %v5964 = vadd.f32 %v5935, %v5963
        %5965 = vmatmul.bf16.gmra.mxu0 %v5679
        %v5966 = vpop.f32.mrf.mxu0
        %v5967 = vadd.f32 %v5938, %v5966
        %v5968 = vpop.f32.mrf.mxu0
        %v5969 = vadd.f32 %v5940, %v5968
        %5970 = vdwg.mxu0
        %5971 = vmatpush.bf16.msra.mxu0 0
        %5972 = vmatpush.bf16.msra.mxu0 0
        %5973 = vmatpush.bf16.msra.mxu0 0
        %5974 = vmatpush.bf16.msra.mxu0 0
        %5975 = vmatpush.bf16.msra.mxu0 %v5511
        %5976 = vmatpush.bf16.msra.mxu0 %v5507
        %5977 = vmatpush.bf16.msra.mxu0 %v5503
        %5978 = vmatpush.bf16.msra.mxu0 %v5499
        %5979 = vmatmul.bf16.gmra.mxu0 %v5699
        %v5980 = vpop.f32.mrf.mxu0
        %v5981 = vadd.f32 %v5952, %v5980
        %v5982 = vpop.f32.mrf.mxu0
        %v5983 = vadd.f32 %v5954, %v5982
        %5984 = vmatmul.bf16.gmra.mxu0 %v5702
        %v5985 = vpop.f32.mrf.mxu0
        %v5986 = vadd.f32 %v5957, %v5985
        %v5987 = vpop.f32.mrf.mxu0
        %v5988 = vadd.f32 %v5959, %v5987
        %5989 = vmatmul.bf16.gmra.mxu0 %v5705
        %v5990 = vpop.f32.mrf.mxu0
        %v5991 = vadd.f32 %v5962, %v5990
        %v5992 = vpop.f32.mrf.mxu0
        %v5993 = vadd.f32 %v5964, %v5992
        %5994 = vmatmul.bf16.gmra.mxu0 %v5708
        %v5995 = vpop.f32.mrf.mxu0
        %v5996 = vadd.f32 %v5967, %v5995
        %v5997 = vpop.f32.mrf.mxu0
        %v5998 = vadd.f32 %v5969, %v5997
        %5999 = vdwg.mxu0
        %v6000 = vmax.f32 %v5836, 0.0
        %v6001 = vmax.f32 %v5981, 0.0
        %v6002 = vmax.f32 %v5838, 0.0
        %v6003 = vmax.f32 %v5983, 0.0
        %v6004 = vmax.f32 %v5841, 0.0
        %v6005 = vmax.f32 %v5986, 0.0
        %v6006 = vmax.f32 %v5843, 0.0
        %v6007 = vmax.f32 %v5988, 0.0
        %v6008 = vmax.f32 %v5846, 0.0
        %v6009 = vmax.f32 %v5991, 0.0
        %v6010 = vmax.f32 %v5848, 0.0
        %v6011 = vmax.f32 %v5993, 0.0
        %v6012 = vmax.f32 %v5851, 0.0
        %v6013 = vmax.f32 %v5996, 0.0
        %v6014 = vmax.f32 %v5853, 0.0
        %v6015 = vmax.f32 %v5998, 0.0
        %v6016 = vld [vmem:[%s7] sm:$0x3]
        %vm6017 = vcmp.gt.f32.partialorder %v6016, 0.0
        %v6018 = vsel %vm6017, 1, 0
        %v6019 = vperm.slane %v6018, 0
        %v6020 = vperm.slane %v6018, 1
        %vm6021 = vcmp.eq.s32.totalorder %v6019, 1
        %vm6022 = vcmp.eq.s32.totalorder %v6020, 1
        %v6023 = vsel %vm6021, %v6000, 0.0
        %v6024 = vsel %vm6022, %v6001, 0.0
        %v6025 = vsel %vm6021, %v6002, 0.0
        %v6026 = vsel %vm6022, %v6003, 0.0
        %v6027 = vsel %vm6021, %v6004, 0.0
        %v6028 = vsel %vm6022, %v6005, 0.0
        %v6029 = vsel %vm6021, %v6006, 0.0
        %v6030 = vsel %vm6022, %v6007, 0.0
        %v6031 = vsel %vm6021, %v6008, 0.0
        %v6032 = vsel %vm6022, %v6009, 0.0
        %v6033 = vsel %vm6021, %v6010, 0.0
        %v6034 = vsel %vm6022, %v6011, 0.0
        %v6035 = vsel %vm6021, %v6012, 0.0
        %v6036 = vsel %vm6022, %v6013, 0.0
        %v6037 = vsel %vm6021, %v6014, 0.0
        %v6038 = vsel %vm6022, %v6015, 0.0
        %v6039 = vpack.c.bf16 %v6024, %v6023
        %v6040 = vpack.c.bf16 %v6026, %v6025
        %v6041 = vpack.c.bf16 %v6028, %v6027
        %v6042 = vpack.c.bf16 %v6030, %v6029
        %v6043 = vpack.c.bf16 %v6032, %v6031
        %v6044 = vpack.c.bf16 %v6034, %v6033
        %v6045 = vpack.c.bf16 %v6036, %v6035
        %v6046 = vpack.c.bf16 %v6038, %v6037
        %6055 = vrot.lane.b32.xlu0 %v6039, 1
        %v6056 = vpop.permute.xlu0 %6055
        %6057 = vrot.lane.b32.xlu0 %v6040, 1
        %v6058 = vpop.permute.xlu0 %6057
        %6059 = vrot.lane.b32.xlu0 %v6041, 1
        %v6060 = vpop.permute.xlu0 %6059
        %6061 = vrot.lane.b32.xlu0 %v6042, 1
        %v6062 = vpop.permute.xlu0 %6061
        %6063 = vrot.lane.b32.xlu0 %v6043, 1
        %v6064 = vpop.permute.xlu0 %6063
        %6065 = vrot.lane.b32.xlu0 %v6044, 1
        %v6066 = vpop.permute.xlu0 %6065
        %6067 = vrot.lane.b32.xlu0 %v6045, 1
        %v6068 = vpop.permute.xlu0 %6067
        %6069 = vrot.lane.b32.xlu0 %v6046, 1
        %v6070 = vpop.permute.xlu0 %6069
        %v6071 = vrot.slane %v6056, 4
        %v6072 = vrot.slane %v6058, 4
        %v6073 = vrot.slane %v6060, 4
        %v6074 = vrot.slane %v6062, 4
        %v6075 = vrot.slane %v6064, 4
        %v6076 = vrot.slane %v6066, 4
        %v6077 = vrot.slane %v6068, 4
        %v6078 = vrot.slane %v6070, 4
        %vm6079 = vcmask 7168
        %v6080 = vsel %vm6079, %v6071, %v6056
        %v6081 = vsel %vm6079, %v6072, %v6058
        %v6082 = vsel %vm6079, %v6073, %v6060
        %v6083 = vsel %vm6079, %v6074, %v6062
        %v6084 = vsel %vm6079, %v6075, %v6064
        %v6085 = vsel %vm6079, %v6076, %v6066
        %v6086 = vsel %vm6079, %v6077, %v6068
        %v6087 = vsel %vm6079, %v6078, %v6070
        %vm6096 = vcmask 1043464
        %vm6097 = vcmask 433156
        %vm6098 = vmor %vm6097, %vm6096
        %6099 = vst.msk [vmem:[#allocation3] sm:$0xff] %vm6098, %v6080
        %6100 = vst.msk [vmem:[#allocation3 + $0x8] sm:$0xff] %vm6098, %v6081
        %6101 = vst.msk [vmem:[#allocation3 + $0x10] sm:$0xff] %vm6098, %v6082
        %6102 = vst.msk [vmem:[#allocation3 + $0x18] sm:$0xff] %vm6098, %v6083
        %6103 = vst.msk [vmem:[#allocation3 + $0x20] sm:$0xff] %vm6098, %v6084
        %6104 = vst.msk [vmem:[#allocation3 + $0x28] sm:$0xff] %vm6098, %v6085
        %6105 = vst.msk [vmem:[#allocation3 + $0x30] sm:$0xff] %vm6098, %v6086
        %6106 = vst.msk [vmem:[#allocation3 + $0x38] sm:$0xff] %vm6098, %v6087
        %p6107 = scmp.eq.s32.totalorder %s29, 0
        // Predicated region
        $region53: #{fuse_forward.1} parent=51 // pred_check
          %p6108 = pneg %p6107
        $region54: #{fuse_forward.1} parent=51 // pred_check_branch
          %6110 = sbr.rel (%p6108) target = $region56
        $region55: #{fuse_forward.1} parent=51 // pred_region
          %6111 = vst.msk [vmem:[#allocation3] sm:$0xf] %vm2217, 0
          %6112 = vst.msk [vmem:[#allocation3 + $0x8] sm:$0xf] %vm2217, 0
          %6113 = vst.msk [vmem:[#allocation3 + $0x10] sm:$0xf] %vm2217, 0
          %6114 = vst.msk [vmem:[#allocation3 + $0x18] sm:$0xf] %vm2217, 0
          %6115 = vst.msk [vmem:[#allocation3 + $0x20] sm:$0xf] %vm2217, 0
          %6116 = vst.msk [vmem:[#allocation3 + $0x28] sm:$0xf] %vm2217, 0
          %6117 = vst.msk [vmem:[#allocation3 + $0x30] sm:$0xf] %vm2217, 0
          %6118 = vst.msk [vmem:[#allocation3 + $0x38] sm:$0xf] %vm2217, 0
        $region56: #{fuse_forward.1} parent=51 // pred_fallthru
          _
        %p6119 = scmp.eq.s32.totalorder %s29, 1
        // Predicated region
        $region57: #{fuse_forward.1} parent=51 // pred_check
          %p6120 = pneg %p6119
        $region58: #{fuse_forward.1} parent=51 // pred_check_branch
          %6122 = sbr.rel (%p6120) target = $region60
        $region59: #{fuse_forward.1} parent=51 // pred_region
          %6123 = vst.msk [vmem:[#allocation3 + $0x4] sm:$0xf] %vm4703, 0
          %6124 = vst.msk [vmem:[#allocation3 + $0xc] sm:$0xf] %vm4703, 0
          %6125 = vst.msk [vmem:[#allocation3 + $0x14] sm:$0xf] %vm4703, 0
          %6126 = vst.msk [vmem:[#allocation3 + $0x1c] sm:$0xf] %vm4703, 0
          %6127 = vst.msk [vmem:[#allocation3 + $0x24] sm:$0xf] %vm4703, 0
          %6128 = vst.msk [vmem:[#allocation3 + $0x2c] sm:$0xf] %vm4703, 0
          %6129 = vst.msk [vmem:[#allocation3 + $0x34] sm:$0xf] %vm4703, 0
          %6130 = vst.msk [vmem:[#allocation3 + $0x3c] sm:$0xf] %vm4703, 0
        $region60: #{fuse_forward.1} parent=51 // pred_fallthru
          _
        %v6131 = vld [vmem:[#allocation3] sm:$0xff]
        %v6132 = vld [vmem:[#allocation3 + $0x8] sm:$0xff]
        %v6133 = vld [vmem:[#allocation3 + $0x10] sm:$0xff]
        %v6134 = vld [vmem:[#allocation3 + $0x18] sm:$0xff]
        %v6135 = vld [vmem:[#allocation3 + $0x20] sm:$0xff]
        %v6136 = vld [vmem:[#allocation3 + $0x28] sm:$0xff]
        %v6137 = vld [vmem:[#allocation3 + $0x30] sm:$0xff]
        %v6138 = vld [vmem:[#allocation3 + $0x38] sm:$0xff]
        %v6147 = vunpack.c.l.b16 %v6131
        %v6148 = vunpack.c.h.b16 %v6131
        %v6149 = vunpack.c.l.b16 %v6132
        %v6150 = vunpack.c.h.b16 %v6132
        %v6151 = vunpack.c.l.b16 %v6133
        %v6152 = vunpack.c.h.b16 %v6133
        %v6153 = vunpack.c.l.b16 %v6134
        %v6154 = vunpack.c.h.b16 %v6134
        %v6155 = vunpack.c.l.b16 %v6135
        %v6156 = vunpack.c.h.b16 %v6135
        %v6157 = vunpack.c.l.b16 %v6136
        %v6158 = vunpack.c.h.b16 %v6136
        %v6159 = vunpack.c.l.b16 %v6137
        %v6160 = vunpack.c.h.b16 %v6137
        %v6161 = vunpack.c.l.b16 %v6138
        %v6162 = vunpack.c.h.b16 %v6138
        %v6163 = vpack.c.b16 %v6149, %v6147
        %v6164 = vpack.c.b16 %v6150, %v6148
        %v6165 = vpack.c.b16 %v6153, %v6151
        %v6166 = vpack.c.b16 %v6154, %v6152
        %v6167 = vpack.c.b16 %v6157, %v6155
        %v6168 = vpack.c.b16 %v6158, %v6156
        %v6169 = vpack.c.b16 %v6161, %v6159
        %v6170 = vpack.c.b16 %v6162, %v6160
        %6179 = vrot.lane.b32.xlu0 %v6163, 127
        %v6180 = vpop.permute.xlu0 %6179
        %6181 = vrot.lane.b32.xlu0 %v6164, 127
        %v6182 = vpop.permute.xlu0 %6181
        %6183 = vrot.lane.b32.xlu0 %v6165, 127
        %v6184 = vpop.permute.xlu0 %6183
        %6185 = vrot.lane.b32.xlu0 %v6166, 127
        %v6186 = vpop.permute.xlu0 %6185
        %6187 = vrot.lane.b32.xlu0 %v6167, 127
        %v6188 = vpop.permute.xlu0 %6187
        %6189 = vrot.lane.b32.xlu0 %v6168, 127
        %v6190 = vpop.permute.xlu0 %6189
        %6191 = vrot.lane.b32.xlu0 %v6169, 127
        %v6192 = vpop.permute.xlu0 %6191
        %6193 = vrot.lane.b32.xlu0 %v6170, 127
        %v6194 = vpop.permute.xlu0 %6193
        %v6195 = vsel %vm4086, %v6180, %v6182
        %v6196 = vsel %vm4086, %v6184, %v6186
        %v6197 = vsel %vm4086, %v6188, %v6190
        %v6198 = vsel %vm4086, %v6192, %v6194
        %6207 = vrot.lane.b32.xlu0 %v6163, 126
        %v6208 = vpop.permute.xlu0 %6207
        %6209 = vrot.lane.b32.xlu0 %v6164, 126
        %v6210 = vpop.permute.xlu0 %6209
        %6211 = vrot.lane.b32.xlu0 %v6165, 126
        %v6212 = vpop.permute.xlu0 %6211
        %6213 = vrot.lane.b32.xlu0 %v6166, 126
        %v6214 = vpop.permute.xlu0 %6213
        %6215 = vrot.lane.b32.xlu0 %v6167, 126
        %v6216 = vpop.permute.xlu0 %6215
        %6217 = vrot.lane.b32.xlu0 %v6168, 126
        %v6218 = vpop.permute.xlu0 %6217
        %6219 = vrot.lane.b32.xlu0 %v6169, 126
        %v6220 = vpop.permute.xlu0 %6219
        %6221 = vrot.lane.b32.xlu0 %v6170, 126
        %v6222 = vpop.permute.xlu0 %6221
        %v6223 = vsel %vm5338, %v6208, %v6210
        %v6224 = vsel %vm5338, %v6212, %v6214
        %v6225 = vsel %vm5338, %v6216, %v6218
        %v6226 = vsel %vm5338, %v6220, %v6222
        %6235 = vrot.lane.b32.xlu0 %v6163, 110
        %v6236 = vpop.permute.xlu0 %6235
        %6237 = vrot.lane.b32.xlu0 %v6164, 110
        %v6238 = vpop.permute.xlu0 %6237
        %6239 = vrot.lane.b32.xlu0 %v6165, 110
        %v6240 = vpop.permute.xlu0 %6239
        %6241 = vrot.lane.b32.xlu0 %v6166, 110
        %v6242 = vpop.permute.xlu0 %6241
        %6243 = vrot.lane.b32.xlu0 %v6167, 110
        %v6244 = vpop.permute.xlu0 %6243
        %6245 = vrot.lane.b32.xlu0 %v6168, 110
        %v6246 = vpop.permute.xlu0 %6245
        %6247 = vrot.lane.b32.xlu0 %v6169, 110
        %v6248 = vpop.permute.xlu0 %6247
        %6249 = vrot.lane.b32.xlu0 %v6170, 110
        %v6250 = vpop.permute.xlu0 %6249
        %v6251 = vsel %vm5367, %v6236, %v6238
        %v6252 = vsel %vm5367, %v6240, %v6242
        %v6253 = vsel %vm5367, %v6244, %v6246
        %v6254 = vsel %vm5367, %v6248, %v6250
        %6263 = vrot.lane.b32.xlu0 %v6163, 109
        %v6264 = vpop.permute.xlu0 %6263
        %6265 = vrot.lane.b32.xlu0 %v6164, 109
        %v6266 = vpop.permute.xlu0 %6265
        %6267 = vrot.lane.b32.xlu0 %v6165, 109
        %v6268 = vpop.permute.xlu0 %6267
        %6269 = vrot.lane.b32.xlu0 %v6166, 109
        %v6270 = vpop.permute.xlu0 %6269
        %6271 = vrot.lane.b32.xlu0 %v6167, 109
        %v6272 = vpop.permute.xlu0 %6271
        %6273 = vrot.lane.b32.xlu0 %v6168, 109
        %v6274 = vpop.permute.xlu0 %6273
        %6275 = vrot.lane.b32.xlu0 %v6169, 109
        %v6276 = vpop.permute.xlu0 %6275
        %6277 = vrot.lane.b32.xlu0 %v6170, 109
        %v6278 = vpop.permute.xlu0 %6277
        %v6279 = vsel %vm5396, %v6264, %v6266
        %v6280 = vsel %vm5396, %v6268, %v6270
        %v6281 = vsel %vm5396, %v6272, %v6274
        %v6282 = vsel %vm5396, %v6276, %v6278
        %6291 = vrot.lane.b32.xlu0 %v6163, 108
        %v6292 = vpop.permute.xlu0 %6291
        %6293 = vrot.lane.b32.xlu0 %v6164, 108
        %v6294 = vpop.permute.xlu0 %6293
        %6295 = vrot.lane.b32.xlu0 %v6165, 108
        %v6296 = vpop.permute.xlu0 %6295
        %6297 = vrot.lane.b32.xlu0 %v6166, 108
        %v6298 = vpop.permute.xlu0 %6297
        %6299 = vrot.lane.b32.xlu0 %v6167, 108
        %v6300 = vpop.permute.xlu0 %6299
        %6301 = vrot.lane.b32.xlu0 %v6168, 108
        %v6302 = vpop.permute.xlu0 %6301
        %6303 = vrot.lane.b32.xlu0 %v6169, 108
        %v6304 = vpop.permute.xlu0 %6303
        %6305 = vrot.lane.b32.xlu0 %v6170, 108
        %v6306 = vpop.permute.xlu0 %6305
        %v6307 = vsel %vm5425, %v6292, %v6294
        %v6308 = vsel %vm5425, %v6296, %v6298
        %v6309 = vsel %vm5425, %v6300, %v6302
        %v6310 = vsel %vm5425, %v6304, %v6306
        %6319 = vrot.lane.b32.xlu0 %v6163, 92
        %v6320 = vpop.permute.xlu0 %6319
        %6321 = vrot.lane.b32.xlu0 %v6164, 92
        %v6322 = vpop.permute.xlu0 %6321
        %6323 = vrot.lane.b32.xlu0 %v6165, 92
        %v6324 = vpop.permute.xlu0 %6323
        %6325 = vrot.lane.b32.xlu0 %v6166, 92
        %v6326 = vpop.permute.xlu0 %6325
        %6327 = vrot.lane.b32.xlu0 %v6167, 92
        %v6328 = vpop.permute.xlu0 %6327
        %6329 = vrot.lane.b32.xlu0 %v6168, 92
        %v6330 = vpop.permute.xlu0 %6329
        %6331 = vrot.lane.b32.xlu0 %v6169, 92
        %v6332 = vpop.permute.xlu0 %6331
        %6333 = vrot.lane.b32.xlu0 %v6170, 92
        %v6334 = vpop.permute.xlu0 %6333
        %v6335 = vsel %vm5454, %v6320, %v6322
        %v6336 = vsel %vm5454, %v6324, %v6326
        %v6337 = vsel %vm5454, %v6328, %v6330
        %v6338 = vsel %vm5454, %v6332, %v6334
        %6347 = vrot.lane.b32.xlu0 %v6163, 91
        %v6348 = vpop.permute.xlu0 %6347
        %6349 = vrot.lane.b32.xlu0 %v6164, 91
        %v6350 = vpop.permute.xlu0 %6349
        %6351 = vrot.lane.b32.xlu0 %v6165, 91
        %v6352 = vpop.permute.xlu0 %6351
        %6353 = vrot.lane.b32.xlu0 %v6166, 91
        %v6354 = vpop.permute.xlu0 %6353
        %6355 = vrot.lane.b32.xlu0 %v6167, 91
        %v6356 = vpop.permute.xlu0 %6355
        %6357 = vrot.lane.b32.xlu0 %v6168, 91
        %v6358 = vpop.permute.xlu0 %6357
        %6359 = vrot.lane.b32.xlu0 %v6169, 91
        %v6360 = vpop.permute.xlu0 %6359
        %6361 = vrot.lane.b32.xlu0 %v6170, 91
        %v6362 = vpop.permute.xlu0 %6361
        %v6363 = vsel %vm5483, %v6348, %v6350
        %v6364 = vsel %vm5483, %v6352, %v6354
        %v6365 = vsel %vm5483, %v6356, %v6358
        %v6366 = vsel %vm5483, %v6360, %v6362
        %6375 = vrot.lane.b32.xlu0 %v6163, 90
        %v6376 = vpop.permute.xlu0 %6375
        %6377 = vrot.lane.b32.xlu0 %v6164, 90
        %v6378 = vpop.permute.xlu0 %6377
        %6379 = vrot.lane.b32.xlu0 %v6165, 90
        %v6380 = vpop.permute.xlu0 %6379
        %6381 = vrot.lane.b32.xlu0 %v6166, 90
        %v6382 = vpop.permute.xlu0 %6381
        %6383 = vrot.lane.b32.xlu0 %v6167, 90
        %v6384 = vpop.permute.xlu0 %6383
        %6385 = vrot.lane.b32.xlu0 %v6168, 90
        %v6386 = vpop.permute.xlu0 %6385
        %6387 = vrot.lane.b32.xlu0 %v6169, 90
        %v6388 = vpop.permute.xlu0 %6387
        %6389 = vrot.lane.b32.xlu0 %v6170, 90
        %v6390 = vpop.permute.xlu0 %6389
        %v6391 = vsel %vm5512, %v6376, %v6378
        %v6392 = vsel %vm5512, %v6380, %v6382
        %v6393 = vsel %vm5512, %v6384, %v6386
        %v6394 = vsel %vm5512, %v6388, %v6390
        %v6403 = vld [vmem:[%s5] sm:$0x1f]
        %v6404 = vld [vmem:[#allocation4] sm:$0x1]
        %6406 = vset.pattern.permute.xlu0 0
        %6407 = vperm.xlu0 %6406, %v6404
        %v6408 = vpop.permute.xlu0 %6407
        %v6410 = vperm.slane %v6408, 0
        %6412 = vst [vmem:[#allocation1] ss:$9 sm:$0xff] %v6403
        %v6413 = vld [vmem:[#allocation1] sm:$0xff]
        %v6414 = vld [vmem:[#allocation1 + $0x9] sm:$0xff]
        %v6415 = vld [vmem:[#allocation1 + $0x12] sm:$0xff]
        %v6416 = vld [vmem:[#allocation1 + $0x1b] sm:$0xff]
        %v6417 = vld [vmem:[#allocation1 + $0x24] sm:$0xff]
        %v6422 = vsel %vm5697, %v6417, 0
        %6424 = vmatpush.bf16.msra.mxu0 %v6198
        %6425 = vmatpush.bf16.msra.mxu0 %v6197
        %6426 = vmatpush.bf16.msra.mxu0 %v6196
        %6427 = vmatpush.bf16.msra.mxu0 %v6195
        %6428 = vmatpush.bf16.msra.mxu0 %v6169
        %6429 = vmatpush.bf16.msra.mxu0 %v6167
        %6430 = vmatpush.bf16.msra.mxu0 %v6165
        %6431 = vmatpush.bf16.msra.mxu0 %v6163
        %6432 = vmatmul.bf16.gmra.mxu0 %v6413
        %v6433 = vpop.f32.mrf.mxu0
        %v6434 = vadd.f32 %v6410, %v6433
        %v6435 = vpop.f32.mrf.mxu0
        %6436 = vdwg.mxu0
        %6437 = vmatpush.bf16.msra.mxu0 %v6254
        %6438 = vmatpush.bf16.msra.mxu0 %v6253
        %6439 = vmatpush.bf16.msra.mxu0 %v6252
        %6440 = vmatpush.bf16.msra.mxu0 %v6251
        %6441 = vmatpush.bf16.msra.mxu0 %v6226
        %6442 = vmatpush.bf16.msra.mxu0 %v6225
        %6443 = vmatpush.bf16.msra.mxu0 %v6224
        %6444 = vmatpush.bf16.msra.mxu0 %v6223
        %6445 = vmatmul.bf16.gmra.mxu0 %v6414
        %v6446 = vpop.f32.mrf.mxu0
        %v6447 = vadd.f32 %v6434, %v6446
        %v6448 = vpop.f32.mrf.mxu0
        %6449 = vdwg.mxu0
        %6450 = vmatpush.bf16.msra.mxu0 %v6310
        %6451 = vmatpush.bf16.msra.mxu0 %v6309
        %6452 = vmatpush.bf16.msra.mxu0 %v6308
        %6453 = vmatpush.bf16.msra.mxu0 %v6307
        %6454 = vmatpush.bf16.msra.mxu0 %v6282
        %6455 = vmatpush.bf16.msra.mxu0 %v6281
        %6456 = vmatpush.bf16.msra.mxu0 %v6280
        %6457 = vmatpush.bf16.msra.mxu0 %v6279
        %6458 = vmatmul.bf16.gmra.mxu0 %v6415
        %v6459 = vpop.f32.mrf.mxu0
        %v6460 = vadd.f32 %v6447, %v6459
        %v6461 = vpop.f32.mrf.mxu0
        %6462 = vdwg.mxu0
        %6463 = vmatpush.bf16.msra.mxu0 %v6366
        %6464 = vmatpush.bf16.msra.mxu0 %v6365
        %6465 = vmatpush.bf16.msra.mxu0 %v6364
        %6466 = vmatpush.bf16.msra.mxu0 %v6363
        %6467 = vmatpush.bf16.msra.mxu0 %v6338
        %6468 = vmatpush.bf16.msra.mxu0 %v6337
        %6469 = vmatpush.bf16.msra.mxu0 %v6336
        %6470 = vmatpush.bf16.msra.mxu0 %v6335
        %6471 = vmatmul.bf16.gmra.mxu0 %v6416
        %v6472 = vpop.f32.mrf.mxu0
        %v6473 = vadd.f32 %v6460, %v6472
        %v6474 = vpop.f32.mrf.mxu0
        %6475 = vdwg.mxu0
        %6476 = vmatpush.bf16.msra.mxu0 0
        %6477 = vmatpush.bf16.msra.mxu0 0
        %6478 = vmatpush.bf16.msra.mxu0 0
        %6479 = vmatpush.bf16.msra.mxu0 0
        %6480 = vmatpush.bf16.msra.mxu0 %v6394
        %6481 = vmatpush.bf16.msra.mxu0 %v6393
        %6482 = vmatpush.bf16.msra.mxu0 %v6392
        %6483 = vmatpush.bf16.msra.mxu0 %v6391
        %6484 = vmatmul.bf16.gmra.mxu0 %v6422
        %v6485 = vpop.f32.mrf.mxu0
        %v6486 = vadd.f32 %v6473, %v6485
        %v6487 = vpop.f32.mrf.mxu0
        %6488 = vdwg.mxu0
        %6489 = vmatpush.bf16.msra.mxu0 %v6194
        %6490 = vmatpush.bf16.msra.mxu0 %v6190
        %6491 = vmatpush.bf16.msra.mxu0 %v6186
        %6492 = vmatpush.bf16.msra.mxu0 %v6182
        %6493 = vmatpush.bf16.msra.mxu0 %v6170
        %6494 = vmatpush.bf16.msra.mxu0 %v6168
        %6495 = vmatpush.bf16.msra.mxu0 %v6166
        %6496 = vmatpush.bf16.msra.mxu0 %v6164
        %6497 = vmatmul.bf16.gmra.mxu0 %v6413
        %v6498 = vpop.f32.mrf.mxu0
        %v6499 = vadd.f32 %v6410, %v6498
        %v6500 = vpop.f32.mrf.mxu0
        %6501 = vdwg.mxu0
        %6502 = vmatpush.bf16.msra.mxu0 %v6250
        %6503 = vmatpush.bf16.msra.mxu0 %v6246
        %6504 = vmatpush.bf16.msra.mxu0 %v6242
        %6505 = vmatpush.bf16.msra.mxu0 %v6238
        %6506 = vmatpush.bf16.msra.mxu0 %v6222
        %6507 = vmatpush.bf16.msra.mxu0 %v6218
        %6508 = vmatpush.bf16.msra.mxu0 %v6214
        %6509 = vmatpush.bf16.msra.mxu0 %v6210
        %6510 = vmatmul.bf16.gmra.mxu0 %v6414
        %v6511 = vpop.f32.mrf.mxu0
        %v6512 = vadd.f32 %v6499, %v6511
        %v6513 = vpop.f32.mrf.mxu0
        %6514 = vdwg.mxu0
        %6515 = vmatpush.bf16.msra.mxu0 %v6306
        %6516 = vmatpush.bf16.msra.mxu0 %v6302
        %6517 = vmatpush.bf16.msra.mxu0 %v6298
        %6518 = vmatpush.bf16.msra.mxu0 %v6294
        %6519 = vmatpush.bf16.msra.mxu0 %v6278
        %6520 = vmatpush.bf16.msra.mxu0 %v6274
        %6521 = vmatpush.bf16.msra.mxu0 %v6270
        %6522 = vmatpush.bf16.msra.mxu0 %v6266
        %6523 = vmatmul.bf16.gmra.mxu0 %v6415
        %v6524 = vpop.f32.mrf.mxu0
        %v6525 = vadd.f32 %v6512, %v6524
        %v6526 = vpop.f32.mrf.mxu0
        %6527 = vdwg.mxu0
        %6528 = vmatpush.bf16.msra.mxu0 %v6362
        %6529 = vmatpush.bf16.msra.mxu0 %v6358
        %6530 = vmatpush.bf16.msra.mxu0 %v6354
        %6531 = vmatpush.bf16.msra.mxu0 %v6350
        %6532 = vmatpush.bf16.msra.mxu0 %v6334
        %6533 = vmatpush.bf16.msra.mxu0 %v6330
        %6534 = vmatpush.bf16.msra.mxu0 %v6326
        %6535 = vmatpush.bf16.msra.mxu0 %v6322
        %6536 = vmatmul.bf16.gmra.mxu0 %v6416
        %v6537 = vpop.f32.mrf.mxu0
        %v6538 = vadd.f32 %v6525, %v6537
        %v6539 = vpop.f32.mrf.mxu0
        %6540 = vdwg.mxu0
        %6541 = vmatpush.bf16.msra.mxu0 0
        %6542 = vmatpush.bf16.msra.mxu0 0
        %6543 = vmatpush.bf16.msra.mxu0 0
        %6544 = vmatpush.bf16.msra.mxu0 0
        %6545 = vmatpush.bf16.msra.mxu0 %v6390
        %6546 = vmatpush.bf16.msra.mxu0 %v6386
        %6547 = vmatpush.bf16.msra.mxu0 %v6382
        %6548 = vmatpush.bf16.msra.mxu0 %v6378
        %6549 = vmatmul.bf16.gmra.mxu0 %v6422
        %v6550 = vpop.f32.mrf.mxu0
        %v6551 = vadd.f32 %v6538, %v6550
        %v6552 = vpop.f32.mrf.mxu0
        %6553 = vdwg.mxu0
        %6555 = vrot.lane.b32.xlu0 %v6486, 127
        %v6556 = vpop.permute.xlu0 %6555
        %vm6558 = vcmask 122880
        %6559 = vst.msk [vmem:[%s329] sm:$0x1] %vm6558, %v6556
        %6560 = vrot.lane.b32.xlu0 %v6486, 109
        %v6561 = vpop.permute.xlu0 %6560
        %6563 = vst.msk [vmem:[%s329 + $0x1] sm:$0x1] %vm6558, %v6561
        %6564 = vrot.lane.b32.xlu0 %v6486, 91
        %v6565 = vpop.permute.xlu0 %6564
        %6567 = vst.msk [vmem:[%s329 + $0x2] sm:$0x1] %vm6558, %v6565
        %6568 = vrot.lane.b32.xlu0 %v6486, 73
        %v6569 = vpop.permute.xlu0 %6568
        %6571 = vst.msk [vmem:[%s329 + $0x3] sm:$0x1] %vm6558, %v6569
        %6572 = vrot.lane.b32.xlu0 %v6486, 55
        %v6573 = vpop.permute.xlu0 %6572
        %6575 = vst.msk [vmem:[%s329 + $0x4] sm:$0x1] %vm6558, %v6573
        %6576 = vrot.lane.b32.xlu0 %v6486, 37
        %v6577 = vpop.permute.xlu0 %6576
        %6579 = vst.msk [vmem:[%s329 + $0x5] sm:$0x1] %vm6558, %v6577
        %6580 = vrot.lane.b32.xlu0 %v6486, 19
        %v6581 = vpop.permute.xlu0 %6580
        %6583 = vst.msk [vmem:[%s329 + $0x6] sm:$0x1] %vm6558, %v6581
        %6585 = vrot.lane.b32.xlu0 %v6486, 1
        %v6586 = vpop.permute.xlu0 %6585
        %6587 = vrot.lane.b32.xlu0 %v6551, 1
        %v6588 = vpop.permute.xlu0 %6587
        %v6589 = vsel %vm2159, %v6586, %v6588
        %6591 = vst.msk [vmem:[%s329 + $0x7] sm:$0x1] %vm6558, %v6589
        %s6592 = sand.u32 %s224, 1
        %s6593 = scalar_lea.sflag [#allocation6], %s6592
        %s6594 = sand.u32 %s224, 1
        %s6595 = smul.addr %s6594, 8
        %s6596 = scalar_lea.vmem [#allocation5], %s6595
        // Predicated region
        $region61: #{fuse_forward.1} parent=51 // pred_check
          %p6597 = pneg %p234
        $region62: #{fuse_forward.1} parent=51 // pred_check_branch
          %6599 = sbr.rel (%p6597) target = $region64
        $region63: #{fuse_forward.1} parent=51 // pred_region
          %6601 = vsyncadd %s6593, 0
          %s6602 = smul.addr %s28, 2
          %s6603 = sadd.s32 %s29, %s6602
          %s6604 = smul.addr %s6603, 8
          %s6605 = scalar_lea.hbm %s8, %s6604
          %s6607 = sshll.u32 %s6596, 4
          %s6608 = int_to_ptr.vmem [resolvable:$true] %s6607
          %s6609 = sshll.u32 %s6605, 4
          %s6610 = int_to_ptr.hbm [resolvable:$true] %s6609
          %6612 = dma.vmem_to_hbm [thread:$0]  %s6608, 128, %s6610, %s6593
        $region64: #{fuse_forward.1} parent=51 // pred_fallthru
          _
      $region52: #{fuse_forward.1} parent=5 // pred_fallthru
        _
      %p6613 = scmp.le.s32.totalorder 2, %s19
      // Predicated region
      $region65: #{fuse_forward.1} parent=5 // pred_check
        %p6614 = pneg %p6613
      $region66: #{fuse_forward.1} parent=5 // pred_check_branch
        %6616 = sbr.rel (%p6614) target = $region68
      $region67: #{fuse_forward.1} parent=5 // pred_region
        %s6617 = ssub.s32 %s19, 2
        // Predicated region
        $region69: #{fuse_forward.1} parent=67 // pred_check
          %p6618 = pneg %p240
        $region70: #{fuse_forward.1} parent=67 // pred_check_branch
          %6620 = sbr.rel (%p6618) target = $region72
        $region71: #{fuse_forward.1} parent=67 // pred_region
          %s6621 = sand.u32 %s225, 1
          %s6622 = scalar_lea.sflag [#allocation6], %s6621
          %s6623 = sand.u32 %s225, 1
          %s6624 = smul.addr %s6623, 8
          %s6625 = scalar_lea.vmem [#allocation5], %s6624
          %6627 = dma.done %s6622, 128
        $region72: #{fuse_forward.1} parent=67 // pred_fallthru
          _
      $region68: #{fuse_forward.1} parent=5 // pred_fallthru
        _
    $region6: #{fuse_forward.1} parent=1 // loop_footer
      %s23 = sadd.s32 1, %s19
    $region7: #{fuse_forward.1} parent=1 // loop_footer_branch
      %18 = sbr.rel target = $region3
    $region8: #{fuse_forward.1} parent=1 // loop_exit
      _
    %6628 = vsyncpa [#allocation6], 1
    %s6629 = scalar_lea.sflag [#allocation6], 1
    %6630 = vsyncpa %s6629, 1

</llo_original>
